<compile_context>
chip_gen: v6e
topology: v6e:2x2x1
jax: 0.10.0
libtpu: 0.0.40
codegen_flags: <defaults>
</compile_context>

<pallas_src>
import functools

import jax
import jax.numpy as jnp
from jax import lax
from jax.experimental import pallas as pl
from jax.experimental.pallas import tpu as pltpu


# ----------------------------------------------------------------------------
# im2col on a column-paired, zero-padded scratch.
#   src_ref: (Ho+2, W+2, 2*C)   super-column P holds real columns (2(P-1), 2(P-1)+1)
# Returns a single (2*Ho*W, 9*C) patch matrix: rows [0, Ho*W) are output
# columns with parity t=0, rows [Ho*W, 2*Ho*W) parity t=1.  Row order within
# each half is (y, super-column u); lane order is (ky, kx, ci) to match the
# HWIO-reshaped weights.
# ----------------------------------------------------------------------------
def _make_patches(src_ref, Ho, W, C):
    # 9 full-lane block loads, shared by both parities.
    blocks = [[src_ref[ky:ky + Ho, p:p + W, :] for p in range(3)]
              for ky in range(3)]
    pieces0, pieces1 = [], []
    for ky in range(3):
        # parity t=0: taps kx=-1,0,1 -> [block0 second half | block1 (both halves)]
        pieces0 += [blocks[ky][0][:, :, C:], blocks[ky][1]]
        # parity t=1: taps kx=0,1,2  -> [block1 (both halves) | block2 first half]
        pieces1 += [blocks[ky][1], blocks[ky][2][:, :, :C]]
    p0 = jnp.concatenate(pieces0, axis=-1).reshape(Ho * W, 9 * C)
    p1 = jnp.concatenate(pieces1, axis=-1).reshape(Ho * W, 9 * C)
    return jnp.concatenate([p0, p1], axis=0)


# ----------------------------------------------------------------------------
# Fused kernel: deconv -> concat -> conv3x3+LReLU -> conv3x3+LReLU -> +1x1 conv
# Layouts (per batch element n):
#   x_ref  : (H, W, Cin)                 low-res input
#   br_ref : (2H, W, 2*Cb)               bridge, column-paired (free reshape)
#   o_ref  : (2H, W, 2*Cout)             output, column-paired (free reshape)
#   cat_ref: (2H+2, W+2, 2*Cc)  scratch  zero-padded concat image
#   mid_ref: (2H+2, W+2, 2*Cout) scratch zero-padded conv_1 activation
# ----------------------------------------------------------------------------
def up_block_kernel(relu_slope,
                    x_ref, br_ref, wup_ref, bup_ref, w1_ref, b1_ref,
                    w2_ref, b2_ref, wi_ref, bi_ref,
                    o_ref, cat_ref, mid_ref):
    H, W, Cin = x_ref.shape
    Ho = 2 * H
    Cout = b1_ref.shape[-1]
    Cb = br_ref.shape[-1] // 2
    Cc = Cout + Cb
    M = Ho * W
    f32 = jnp.float32

    def leaky(v):
        return jnp.where(v >= 0, v, relu_slope * v)

    # ---- zero only the 1-pixel halo strips (interior is fully rewritten). ----
    for ref, c2 in ((cat_ref, 2 * Cc), (mid_ref, 2 * Cout)):
        ref[0:1, :, :] = jnp.zeros((1, W + 2, c2), f32)
        ref[Ho + 1:Ho + 2, :, :] = jnp.zeros((1, W + 2, c2), f32)
        ref[:, 0:1, :] = jnp.zeros((Ho + 2, 1, c2), f32)
        ref[:, W + 1:W + 2, :] = jnp.zeros((Ho + 2, 1, c2), f32)

    # ---- ConvTranspose2d(k=2, s=2, bias) fused in-kernel (stays in VMEM). ----
    # up[2h+i, 2w+j, co] = x[h, w, :] . w_up[:, i, j, co] + b_up[co]
    x_flat = x_ref[...].reshape(H * W, Cin)
    ups = [jnp.dot(x_flat, wup_ref[i], preferred_element_type=f32) + bup_ref[...]
           for i in (0, 1)]                               # lanes = (j, co)
    up_rows = jnp.stack([u.reshape(H, W, 2 * Cout) for u in ups],
                        axis=1).reshape(Ho, W, 2 * Cout)  # interleave row parities

    # ---- concat([up, bridge], channel) in column-paired layout, pad=1. ----
    br = br_ref[...]                                      # lanes = (t, cb)
    cat_val = jnp.concatenate(
        [up_rows[:, :, :Cout], br[:, :, :Cb],             # sub-pixel t=0
         up_rows[:, :, Cout:], br[:, :, Cb:]],            # sub-pixel t=1
        axis=-1)
    cat_ref[1:1 + Ho, 1:1 + W, :] = cat_val

    # ---- conv_1: 3x3, pad 1, bias -> LeakyReLU (single matmul, M=2*Ho*W) ----
    patches1 = _make_patches(cat_ref, Ho, W, Cc)          # (2M, 9*Cc)
    a1 = leaky(jnp.dot(patches1, w1_ref[...], preferred_element_type=f32)
               + b1_ref[...])                             # (2M, Cout)
    mid_ref[1:1 + Ho, 1:1 + W, :] = jnp.concatenate(
        [a1[:M].reshape(Ho, W, Cout), a1[M:].reshape(Ho, W, Cout)], axis=-1)

    # ---- conv_2: 3x3, pad 1, bias -> LeakyReLU (single matmul) ----
    patches2 = _make_patches(mid_ref, Ho, W, Cout)        # (2M, 9*Cout)
    a2 = leaky(jnp.dot(patches2, w2_ref[...], preferred_element_type=f32)
               + b2_ref[...])                             # (2M, Cout)

    # ---- identity 1x1 conv (bias) on cat (from registers) + residual add ----
    cat_flat = jnp.concatenate(
        [cat_val[:, :, :Cc].reshape(M, Cc),
         cat_val[:, :, Cc:].reshape(M, Cc)], axis=0)      # (2M, Cc)
    ident = jnp.dot(cat_flat, wi_ref[...], preferred_element_type=f32) + bi_ref[...]
    res = a2 + ident                                      # (2M, Cout)
    o_ref[...] = jnp.concatenate(
        [res[:M].reshape(Ho, W, Cout), res[M:].reshape(Ho, W, Cout)], axis=-1)


# ----------------------------------------------------------------------------
# Wrapper: weight prepacking (tiny, one-time) + the single fused pallas_call.
# ----------------------------------------------------------------------------
def unet_up_block(x, bridge, params, relu_slope):
    # x: (N, H, W, in_size) NHWC ; bridge: (N, 2H, 2W, out_size) NHWC
    N, H, W, Cin = x.shape
    Cout = params['b_up'].shape[0]
    Cb = bridge.shape[-1]
    Cc = Cout + Cb
    Ho, Wo = 2 * H, 2 * W
    assert bridge.shape == (N, Ho, Wo, Cb)
    assert params['w1'].shape[2] == Cc

    # --- prepack weights (small tensors; done once, outside the hot loop) ---
    w_up = params['w_up']                                 # (Cin, 2, 2, Cout)
    wup_split = jnp.stack([w_up[:, 0].reshape(Cin, 2 * Cout),
                           w_up[:, 1].reshape(Cin, 2 * Cout)], axis=0)
    bup2 = jnp.tile(params['b_up'], 2).reshape(1, 2 * Cout)
    w1f = params['w1'].reshape(9 * Cc, Cout)              # rows: (ky, kx, ci)
    w2f = params['w2'].reshape(9 * Cout, Cout)
    b1 = params['b1'].reshape(1, Cout)
    b2 = params['b2'].reshape(1, Cout)
    wi = params['wi']                                     # (Cc, Cout)
    bi = params['bi'].reshape(1, Cout)

    # column-paired bridge: (N, Ho, Wo, Cb) -> (N, Ho, W, 2*Cb). Contiguous
    # metadata reshape -- no HBM transpose/copy.
    br_paired = bridge.reshape(N, Ho, W, 2 * Cb)

    flops = 2 * N * (H * W * Cin * 4 * Cout               # deconv
                     + Ho * Wo * 9 * Cc * Cout            # conv_1
                     + Ho * Wo * 9 * Cout * Cout          # conv_2
                     + Ho * Wo * Cc * Cout)               # identity 1x1
    bytes_accessed = 4 * (x.size + bridge.size + wup_split.size + bup2.size
                          + w1f.size + b1.size + w2f.size + b2.size
                          + wi.size + bi.size + N * Ho * Wo * Cout)

    kern = functools.partial(up_block_kernel, relu_slope)
    out_paired = pl.pallas_call(
        kern,
        out_shape=jax.ShapeDtypeStruct((N, Ho, W, 2 * Cout), jnp.float32),
        grid=(N,),
        in_specs=[
            pl.BlockSpec((pl.Squeezed(), H, W, Cin), lambda n: (n, 0, 0, 0)),
            pl.BlockSpec((pl.Squeezed(), Ho, W, 2 * Cb), lambda n: (n, 0, 0, 0)),
            pl.BlockSpec((2, Cin, 2 * Cout), lambda n: (0, 0, 0)),
            pl.BlockSpec((1, 2 * Cout), lambda n: (0, 0)),
            pl.BlockSpec((9 * Cc, Cout), lambda n: (0, 0)),
            pl.BlockSpec((1, Cout), lambda n: (0, 0)),
            pl.BlockSpec((9 * Cout, Cout), lambda n: (0, 0)),
            pl.BlockSpec((1, Cout), lambda n: (0, 0)),
            pl.BlockSpec((Cc, Cout), lambda n: (0, 0)),
            pl.BlockSpec((1, Cout), lambda n: (0, 0)),
        ],
        out_specs=pl.BlockSpec((pl.Squeezed(), Ho, W, 2 * Cout),
                               lambda n: (n, 0, 0, 0)),
        scratch_shapes=[
            pltpu.VMEM((Ho + 2, W + 2, 2 * Cc), jnp.float32),    # padded cat
            pltpu.VMEM((Ho + 2, W + 2, 2 * Cout), jnp.float32),  # padded a1
        ],
        compiler_params=pltpu.CompilerParams(
            dimension_semantics=("parallel",),
            vmem_limit_bytes=32 * 1024 * 1024),
        cost_estimate=pl.CostEstimate(flops=flops, transcendentals=0,
                                      bytes_accessed=bytes_accessed),
    )(x, br_paired, wup_split, bup2, w1f, b1, w2f, b2, wi, bi)

    # free metadata reshape back to NHWC: (N, Ho, W, 2*Cout) -> (N, Ho, Wo, Cout)
    return out_paired.reshape(N, Ho, Wo, Cout)


# ----------------------------------------------------------------------------
# Deterministic synthetic parameters (shapes follow the module __init__).
# ----------------------------------------------------------------------------
def init_params(key, in_size, out_size):
    ks = jax.random.split(key, 8)
    s = 0.1
    return {
        # ConvTranspose2d(in_size, out_size, k=2, s=2, bias=True)
        'w_up': s * jax.random.normal(ks[0], (in_size, 2, 2, out_size), jnp.float32),
        'b_up': s * jax.random.normal(ks[1], (out_size,), jnp.float32),
        # conv_1: Conv2d(in_size, out_size, 3, padding=1, bias=True)   (HWIO)
        'w1': s * jax.random.normal(ks[2], (3, 3, in_size, out_size), jnp.float32),
        'b1': s * jax.random.normal(ks[3], (out_size,), jnp.float32),
        # conv_2: Conv2d(out_size, out_size, 3, padding=1, bias=True)  (HWIO)
        'w2': s * jax.random.normal(ks[4], (3, 3, out_size, out_size), jnp.float32),
        'b2': s * jax.random.normal(ks[5], (out_size,), jnp.float32),
        # identity: Conv2d(in_size, out_size, 1, 1, 0)  (bias=True by default)
        'wi': s * jax.random.normal(ks[6], (in_size, out_size), jnp.float32),
        'bi': s * jax.random.normal(ks[7], (out_size,), jnp.float32),
    }


# ----------------------------------------------------------------------------
# Pure-JAX reference (same math, for a correctness check).
# ----------------------------------------------------------------------------
def _leaky(v, slope):
    return jnp.where(v >= 0, v, slope * v)


def reference(x, bridge, p, slope):
    N, H, W, _ = x.shape
    Cout = p['b_up'].shape[0]
    up = jnp.einsum('nhwc,cijo->nhiwjo', x, p['w_up']).reshape(
        N, 2 * H, 2 * W, Cout) + p['b_up']
    cat = jnp.concatenate([up, bridge], axis=-1)

    def conv3x3(xx, w, b):
        y = lax.conv_general_dilated(
            xx, w, (1, 1), ((1, 1), (1, 1)),
            dimension_numbers=('NHWC', 'HWIO', 'NHWC'))
        return y + b

    o = _leaky(conv3x3(cat, p['w1'], p['b1']), slope)
    o = _leaky(conv3x3(o, p['w2'], p['b2']), slope)
    ident = jnp.einsum('nhwc,co->nhwo', cat, p['wi']) + p['bi']
    return o + ident


if __name__ == "__main__":
    in_size, out_size = 8, 4          # in_size == 2 * out_size (UNet convention)
    relu_slope = 0.2
    N, H, W = 2, 8, 8                 # x is the low-res feature map

    key = jax.random.PRNGKey(0)
    kx, kb, kp = jax.random.split(key, 3)
    x = jax.random.normal(kx, (N, H, W, in_size), jnp.float32)
    bridge = jax.random.normal(kb, (N, 2 * H, 2 * W, out_size), jnp.float32)
    params = init_params(kp, in_size, out_size)

    out = unet_up_block(x, bridge, params, relu_slope)
    out = jax.block_until_ready(out)

    ref = reference(x, bridge, params, relu_slope)
    assert out.shape == (N, 2 * H, 2 * W, out_size), out.shape
    assert jnp.allclose(out, ref, atol=1e-4, rtol=1e-4), \
        float(jnp.max(jnp.abs(out - ref)))

    print("KERNEL_OK")
</pallas_src>

<mosaic_0001>
module attributes {stable_mosaic.version = 11 : i64} {
  func.func @up_block_kernel(%arg0: i32, %arg1: memref<1x8x8x8xf32, #tpu.memory_space<vmem>>, %arg2: memref<1x16x8x8xf32, #tpu.memory_space<vmem>>, %arg3: memref<2x8x8xf32, #tpu.memory_space<vmem>>, %arg4: memref<1x8xf32, #tpu.memory_space<vmem>>, %arg5: memref<72x4xf32, #tpu.memory_space<vmem>>, %arg6: memref<1x4xf32, #tpu.memory_space<vmem>>, %arg7: memref<36x4xf32, #tpu.memory_space<vmem>>, %arg8: memref<1x4xf32, #tpu.memory_space<vmem>>, %arg9: memref<8x4xf32, #tpu.memory_space<vmem>>, %arg10: memref<1x4xf32, #tpu.memory_space<vmem>>, %arg11: memref<1x16x8x8xf32, #tpu.memory_space<vmem>>, %arg12: memref<18x10x16xf32, #tpu.memory_space<vmem>>, %arg13: memref<18x10x8xf32, #tpu.memory_space<vmem>>) attributes {dimension_semantics = [#tpu.dimension_semantics<parallel>], iteration_bounds = array<i64: 2>, scalar_prefetch = 0 : i64, scratch_operands = 2 : i64, tpu.core_type = #tpu.core_type<tc>, window_params = [{transform_indices = @transform_0, window_bounds = array<i64: 1, 8, 8, 8>}, {transform_indices = @transform_1, window_bounds = array<i64: 1, 16, 8, 8>}, {pipeline_mode = #tpu.pipeline_mode<synchronous>, transform_indices = @transform_2, window_bounds = array<i64: 2, 8, 8>}, {pipeline_mode = #tpu.pipeline_mode<synchronous>, transform_indices = @transform_3, window_bounds = array<i64: 1, 8>}, {pipeline_mode = #tpu.pipeline_mode<synchronous>, transform_indices = @transform_4, window_bounds = array<i64: 72, 4>}, {pipeline_mode = #tpu.pipeline_mode<synchronous>, transform_indices = @transform_5, window_bounds = array<i64: 1, 4>}, {pipeline_mode = #tpu.pipeline_mode<synchronous>, transform_indices = @transform_6, window_bounds = array<i64: 36, 4>}, {pipeline_mode = #tpu.pipeline_mode<synchronous>, transform_indices = @transform_7, window_bounds = array<i64: 1, 4>}, {pipeline_mode = #tpu.pipeline_mode<synchronous>, transform_indices = @transform_8, window_bounds = array<i64: 8, 4>}, {pipeline_mode = #tpu.pipeline_mode<synchronous>, transform_indices = @transform_9, window_bounds = array<i64: 1, 4>}, {transform_indices = @transform_10, window_bounds = array<i64: 1, 16, 8, 8>}]} {
    %cst = arith.constant 0.000000e+00 : f32
    %0 = vector.broadcast %cst : f32 to vector<1x10x16xf32>
    %c0 = arith.constant 0 : index
    %c0_0 = arith.constant 0 : index
    %c0_1 = arith.constant 0 : index
    %1 = vector.load %arg12[%c0, %c0_0, %c0_1] : memref<18x10x16xf32, #tpu.memory_space<vmem>>, vector<1x10x16xf32>
    tpu.vector_store %arg12[%c0, %c0_0, %c0_1], %0 {strides = array<i32>} : memref<18x10x16xf32, #tpu.memory_space<vmem>>, vector<1x10x16xf32>,
    %cst_2 = arith.constant 0.000000e+00 : f32
    %2 = vector.broadcast %cst_2 : f32 to vector<1x10x16xf32>
    %c17 = arith.constant 17 : index
    %c0_3 = arith.constant 0 : index
    %c0_4 = arith.constant 0 : index
    %3 = vector.load %arg12[%c17, %c0_3, %c0_4] : memref<18x10x16xf32, #tpu.memory_space<vmem>>, vector<1x10x16xf32>
    tpu.vector_store %arg12[%c17, %c0_3, %c0_4], %2 {strides = array<i32>} : memref<18x10x16xf32, #tpu.memory_space<vmem>>, vector<1x10x16xf32>,
    %cst_5 = arith.constant 0.000000e+00 : f32
    %4 = vector.broadcast %cst_5 : f32 to vector<18x1x16xf32>
    %c0_6 = arith.constant 0 : index
    %c0_7 = arith.constant 0 : index
    %c0_8 = arith.constant 0 : index
    %5 = vector.load %arg12[%c0_6, %c0_7, %c0_8] : memref<18x10x16xf32, #tpu.memory_space<vmem>>, vector<18x1x16xf32>
    tpu.vector_store %arg12[%c0_6, %c0_7, %c0_8], %4 {strides = array<i32>} : memref<18x10x16xf32, #tpu.memory_space<vmem>>, vector<18x1x16xf32>,
    %cst_9 = arith.constant 0.000000e+00 : f32
    %6 = vector.broadcast %cst_9 : f32 to vector<18x1x16xf32>
    %c0_10 = arith.constant 0 : index
    %c9 = arith.constant 9 : index
    %c0_11 = arith.constant 0 : index
    %7 = vector.load %arg12[%c0_10, %c9, %c0_11] : memref<18x10x16xf32, #tpu.memory_space<vmem>>, vector<18x1x16xf32>
    tpu.vector_store %arg12[%c0_10, %c9, %c0_11], %6 {strides = array<i32>} : memref<18x10x16xf32, #tpu.memory_space<vmem>>, vector<18x1x16xf32>,
    %cst_12 = arith.constant 0.000000e+00 : f32
    %8 = vector.broadcast %cst_12 : f32 to vector<1x10x8xf32>
    %c0_13 = arith.constant 0 : index
    %c0_14 = arith.constant 0 : index
    %c0_15 = arith.constant 0 : index
    %9 = vector.load %arg13[%c0_13, %c0_14, %c0_15] : memref<18x10x8xf32, #tpu.memory_space<vmem>>, vector<1x10x8xf32>
    tpu.vector_store %arg13[%c0_13, %c0_14, %c0_15], %8 {strides = array<i32>} : memref<18x10x8xf32, #tpu.memory_space<vmem>>, vector<1x10x8xf32>,
    %cst_16 = arith.constant 0.000000e+00 : f32
    %10 = vector.broadcast %cst_16 : f32 to vector<1x10x8xf32>
    %c17_17 = arith.constant 17 : index
    %c0_18 = arith.constant 0 : index
    %c0_19 = arith.constant 0 : index
    %11 = vector.load %arg13[%c17_17, %c0_18, %c0_19] : memref<18x10x8xf32, #tpu.memory_space<vmem>>, vector<1x10x8xf32>
    tpu.vector_store %arg13[%c17_17, %c0_18, %c0_19], %10 {strides = array<i32>} : memref<18x10x8xf32, #tpu.memory_space<vmem>>, vector<1x10x8xf32>,
    %cst_20 = arith.constant 0.000000e+00 : f32
    %12 = vector.broadcast %cst_20 : f32 to vector<18x1x8xf32>
    %c0_21 = arith.constant 0 : index
    %c0_22 = arith.constant 0 : index
    %c0_23 = arith.constant 0 : index
    %13 = vector.load %arg13[%c0_21, %c0_22, %c0_23] : memref<18x10x8xf32, #tpu.memory_space<vmem>>, vector<18x1x8xf32>
    tpu.vector_store %arg13[%c0_21, %c0_22, %c0_23], %12 {strides = array<i32>} : memref<18x10x8xf32, #tpu.memory_space<vmem>>, vector<18x1x8xf32>,
    %cst_24 = arith.constant 0.000000e+00 : f32
    %14 = vector.broadcast %cst_24 : f32 to vector<18x1x8xf32>
    %c0_25 = arith.constant 0 : index
    %c9_26 = arith.constant 9 : index
    %c0_27 = arith.constant 0 : index
    %15 = vector.load %arg13[%c0_25, %c9_26, %c0_27] : memref<18x10x8xf32, #tpu.memory_space<vmem>>, vector<18x1x8xf32>
    tpu.vector_store %arg13[%c0_25, %c9_26, %c0_27], %14 {strides = array<i32>} : memref<18x10x8xf32, #tpu.memory_space<vmem>>, vector<18x1x8xf32>,
    %c0_28 = arith.constant 0 : index
    %c0_29 = arith.constant 0 : index
    %c0_30 = arith.constant 0 : index
    %c0_31 = arith.constant 0 : index
    %16 = vector.load %arg1[%c0_28, %c0_29, %c0_30, %c0_31] : memref<1x8x8x8xf32, #tpu.memory_space<vmem>>, vector<1x8x8x8xf32>
    %17 = vector.shape_cast %16 : vector<1x8x8x8xf32> to vector<8x8x8xf32>
    %18 = vector.shape_cast %17 : vector<8x8x8xf32> to vector<64x8xf32>
    %c0_32 = arith.constant 0 : index
    %c0_33 = arith.constant 0 : index
    %c0_34 = arith.constant 0 : index
    %19 = vector.load %arg3[%c0_32, %c0_33, %c0_34] : memref<2x8x8xf32, #tpu.memory_space<vmem>>, vector<1x8x8xf32>
    %20 = vector.shape_cast %19 : vector<1x8x8xf32> to vector<8x8xf32>
    %cst_35 = arith.constant dense<0.000000e+00> : vector<64x8xf32>
    %21 = tpu.matmul %18, %20, %cst_35 {dimension_numbers = #tpu.dot_dimension_numbers<[1], [0], [0], [1], [0, 0, 1, 1], [], []>} : vector<64x8xf32>, vector<8x8xf32>, vector<64x8xf32> -> vector<64x8xf32>
    %c0_36 = arith.constant 0 : index
    %c0_37 = arith.constant 0 : index
    %22 = vector.load %arg4[%c0_36, %c0_37] : memref<1x8xf32, #tpu.memory_space<vmem>>, vector<1x8xf32>
    %23 = vector.broadcast %22 : vector<1x8xf32> to vector<64x8xf32>
    %24 = arith.addf %21, %23 : vector<64x8xf32>
    %c1 = arith.constant 1 : index
    %c0_38 = arith.constant 0 : index
    %c0_39 = arith.constant 0 : index
    %25 = vector.load %arg3[%c1, %c0_38, %c0_39] : memref<2x8x8xf32, #tpu.memory_space<vmem>>, vector<1x8x8xf32>
    %26 = vector.shape_cast %25 : vector<1x8x8xf32> to vector<8x8xf32>
    %cst_40 = arith.constant dense<0.000000e+00> : vector<64x8xf32>
    %27 = tpu.matmul %18, %26, %cst_40 {dimension_numbers = #tpu.dot_dimension_numbers<[1], [0], [0], [1], [0, 0, 1, 1], [], []>} : vector<64x8xf32>, vector<8x8xf32>, vector<64x8xf32> -> vector<64x8xf32>
    %c0_41 = arith.constant 0 : index
    %c0_42 = arith.constant 0 : index
    %28 = vector.load %arg4[%c0_41, %c0_42] : memref<1x8xf32, #tpu.memory_space<vmem>>, vector<1x8xf32>
    %29 = vector.broadcast %28 : vector<1x8xf32> to vector<64x8xf32>
    %30 = arith.addf %27, %29 : vector<64x8xf32>
    %31 = vector.shape_cast %24 : vector<64x8xf32> to vector<8x8x8xf32>
    %32 = vector.shape_cast %30 : vector<64x8xf32> to vector<8x8x8xf32>
    %33 = vector.shape_cast %31 : vector<8x8x8xf32> to vector<8x1x8x8xf32>
    %34 = vector.shape_cast %32 : vector<8x8x8xf32> to vector<8x1x8x8xf32>
    %35 = tpu.concatenate %33, %34 in 1 : vector<8x1x8x8xf32>, vector<8x1x8x8xf32> -> vector<8x2x8x8xf32>
    %36 = vector.shape_cast %35 : vector<8x2x8x8xf32> to vector<16x8x8xf32>
    %c0_43 = arith.constant 0 : index
    %c0_44 = arith.constant 0 : index
    %c0_45 = arith.constant 0 : index
    %c0_46 = arith.constant 0 : index
    %37 = vector.load %arg2[%c0_43, %c0_44, %c0_45, %c0_46] : memref<1x16x8x8xf32, #tpu.memory_space<vmem>>, vector<1x16x8x8xf32>
    %38 = vector.shape_cast %37 : vector<1x16x8x8xf32> to vector<16x8x8xf32>
    %39 = vector.extract_strided_slice %36 {offsets = [0, 0, 0], sizes = [16, 8, 4], strides = [1, 1, 1]} : vector<16x8x8xf32> to vector<16x8x4xf32>
    %40 = vector.extract_strided_slice %38 {offsets = [0, 0, 0], sizes = [16, 8, 4], strides = [1, 1, 1]} : vector<16x8x8xf32> to vector<16x8x4xf32>
    %41 = vector.extract_strided_slice %36 {offsets = [0, 0, 4], sizes = [16, 8, 4], strides = [1, 1, 1]} : vector<16x8x8xf32> to vector<16x8x4xf32>
    %42 = vector.extract_strided_slice %38 {offsets = [0, 0, 4], sizes = [16, 8, 4], strides = [1, 1, 1]} : vector<16x8x8xf32> to vector<16x8x4xf32>
    %43 = tpu.concatenate %39, %40, %41, %42 in 2 : vector<16x8x4xf32>, vector<16x8x4xf32>, vector<16x8x4xf32>, vector<16x8x4xf32> -> vector<16x8x16xf32>
    %c1_47 = arith.constant 1 : index
    %c1_48 = arith.constant 1 : index
    %c0_49 = arith.constant 0 : index
    %44 = vector.load %arg12[%c1_47, %c1_48, %c0_49] : memref<18x10x16xf32, #tpu.memory_space<vmem>>, vector<16x8x16xf32>
    tpu.vector_store %arg12[%c1_47, %c1_48, %c0_49], %43 {strides = array<i32>} : memref<18x10x16xf32, #tpu.memory_space<vmem>>, vector<16x8x16xf32>,
    %c0_50 = arith.constant 0 : index
    %c0_51 = arith.constant 0 : index
    %c0_52 = arith.constant 0 : index
    %45 = vector.load %arg12[%c0_50, %c0_51, %c0_52] : memref<18x10x16xf32, #tpu.memory_space<vmem>>, vector<16x8x16xf32>
    %c0_53 = arith.constant 0 : index
    %c1_54 = arith.constant 1 : index
    %c0_55 = arith.constant 0 : index
    %46 = vector.load %arg12[%c0_53, %c1_54, %c0_55] : memref<18x10x16xf32, #tpu.memory_space<vmem>>, vector<16x8x16xf32>
    %c0_56 = arith.constant 0 : index
    %c2 = arith.constant 2 : index
    %c0_57 = arith.constant 0 : index
    %47 = vector.load %arg12[%c0_56, %c2, %c0_57] : memref<18x10x16xf32, #tpu.memory_space<vmem>>, vector<16x8x16xf32>
    %c1_58 = arith.constant 1 : index
    %c0_59 = arith.constant 0 : index
    %c0_60 = arith.constant 0 : index
    %48 = vector.load %arg12[%c1_58, %c0_59, %c0_60] : memref<18x10x16xf32, #tpu.memory_space<vmem>>, vector<16x8x16xf32>
    %c1_61 = arith.constant 1 : index
    %c1_62 = arith.constant 1 : index
    %c0_63 = arith.constant 0 : index
    %49 = vector.load %arg12[%c1_61, %c1_62, %c0_63] : memref<18x10x16xf32, #tpu.memory_space<vmem>>, vector<16x8x16xf32>
    %c1_64 = arith.constant 1 : index
    %c2_65 = arith.constant 2 : index
    %c0_66 = arith.constant 0 : index
    %50 = vector.load %arg12[%c1_64, %c2_65, %c0_66] : memref<18x10x16xf32, #tpu.memory_space<vmem>>, vector<16x8x16xf32>
    %c2_67 = arith.constant 2 : index
    %c0_68 = arith.constant 0 : index
    %c0_69 = arith.constant 0 : index
    %51 = vector.load %arg12[%c2_67, %c0_68, %c0_69] : memref<18x10x16xf32, #tpu.memory_space<vmem>>, vector<16x8x16xf32>
    %c2_70 = arith.constant 2 : index
    %c1_71 = arith.constant 1 : index
    %c0_72 = arith.constant 0 : index
    %52 = vector.load %arg12[%c2_70, %c1_71, %c0_72] : memref<18x10x16xf32, #tpu.memory_space<vmem>>, vector<16x8x16xf32>
    %c2_73 = arith.constant 2 : index
    %c2_74 = arith.constant 2 : index
    %c0_75 = arith.constant 0 : index
    %53 = vector.load %arg12[%c2_73, %c2_74, %c0_75] : memref<18x10x16xf32, #tpu.memory_space<vmem>>, vector<16x8x16xf32>
    %54 = vector.extract_strided_slice %45 {offsets = [0, 0, 8], sizes = [16, 8, 8], strides = [1, 1, 1]} : vector<16x8x16xf32> to vector<16x8x8xf32>
    %55 = vector.extract_strided_slice %47 {offsets = [0, 0, 0], sizes = [16, 8, 8], strides = [1, 1, 1]} : vector<16x8x16xf32> to vector<16x8x8xf32>
    %56 = vector.extract_strided_slice %48 {offsets = [0, 0, 8], sizes = [16, 8, 8], strides = [1, 1, 1]} : vector<16x8x16xf32> to vector<16x8x8xf32>
    %57 = vector.extract_strided_slice %50 {offsets = [0, 0, 0], sizes = [16, 8, 8], strides = [1, 1, 1]} : vector<16x8x16xf32> to vector<16x8x8xf32>
    %58 = vector.extract_strided_slice %51 {offsets = [0, 0, 8], sizes = [16, 8, 8], strides = [1, 1, 1]} : vector<16x8x16xf32> to vector<16x8x8xf32>
    %59 = vector.extract_strided_slice %53 {offsets = [0, 0, 0], sizes = [16, 8, 8], strides = [1, 1, 1]} : vector<16x8x16xf32> to vector<16x8x8xf32>
    %60 = tpu.concatenate %54, %46, %56, %49, %58, %52 in 2 : vector<16x8x8xf32>, vector<16x8x16xf32>, vector<16x8x8xf32>, vector<16x8x16xf32>, vector<16x8x8xf32>, vector<16x8x16xf32> -> vector<16x8x72xf32>
    %61 = vector.shape_cast %60 : vector<16x8x72xf32> to vector<128x72xf32>
    %62 = tpu.concatenate %46, %55, %49, %57, %52, %59 in 2 : vector<16x8x16xf32>, vector<16x8x8xf32>, vector<16x8x16xf32>, vector<16x8x8xf32>, vector<16x8x16xf32>, vector<16x8x8xf32> -> vector<16x8x72xf32>
    %63 = vector.shape_cast %62 : vector<16x8x72xf32> to vector<128x72xf32>
    %64 = tpu.concatenate %61, %63 in 0 : vector<128x72xf32>, vector<128x72xf32> -> vector<256x72xf32>
    %c0_76 = arith.constant 0 : index
    %c0_77 = arith.constant 0 : index
    %65 = vector.load %arg5[%c0_76, %c0_77] : memref<72x4xf32, #tpu.memory_space<vmem>>, vector<72x4xf32>
    %cst_78 = arith.constant dense<0.000000e+00> : vector<256x4xf32>
    %66 = tpu.matmul %64, %65, %cst_78 {dimension_numbers = #tpu.dot_dimension_numbers<[1], [0], [0], [1], [0, 0, 1, 1], [], []>} : vector<256x72xf32>, vector<72x4xf32>, vector<256x4xf32> -> vector<256x4xf32>
    %c0_79 = arith.constant 0 : index
    %c0_80 = arith.constant 0 : index
    %67 = vector.load %arg6[%c0_79, %c0_80] : memref<1x4xf32, #tpu.memory_space<vmem>>, vector<1x4xf32>
    %68 = vector.broadcast %67 : vector<1x4xf32> to vector<256x4xf32>
    %69 = arith.addf %66, %68 : vector<256x4xf32>
    %cst_81 = arith.constant 0.000000e+00 : f32
    %70 = vector.broadcast %cst_81 : f32 to vector<256x4xf32>
    %71 = arith.cmpf oge, %69, %70 : vector<256x4xf32>
    %cst_82 = arith.constant 2.000000e-01 : f32
    %72 = vector.broadcast %cst_82 : f32 to vector<256x4xf32>
    %73 = arith.mulf %72, %69 : vector<256x4xf32>
    %74 = arith.select %71, %69, %73 : vector<256x4xi1>, vector<256x4xf32>
    %75 = vector.extract_strided_slice %74 {offsets = [0, 0], sizes = [128, 4], strides = [1, 1]} : vector<256x4xf32> to vector<128x4xf32>
    %76 = vector.shape_cast %75 : vector<128x4xf32> to vector<16x8x4xf32>
    %77 = vector.extract_strided_slice %74 {offsets = [128, 0], sizes = [128, 4], strides = [1, 1]} : vector<256x4xf32> to vector<128x4xf32>
    %78 = vector.shape_cast %77 : vector<128x4xf32> to vector<16x8x4xf32>
    %79 = tpu.concatenate %76, %78 in 2 : vector<16x8x4xf32>, vector<16x8x4xf32> -> vector<16x8x8xf32>
    %c1_83 = arith.constant 1 : index
    %c1_84 = arith.constant 1 : index
    %c0_85 = arith.constant 0 : index
    %80 = vector.load %arg13[%c1_83, %c1_84, %c0_85] : memref<18x10x8xf32, #tpu.memory_space<vmem>>, vector<16x8x8xf32>
    tpu.vector_store %arg13[%c1_83, %c1_84, %c0_85], %79 {strides = array<i32>} : memref<18x10x8xf32, #tpu.memory_space<vmem>>, vector<16x8x8xf32>,
    %c0_86 = arith.constant 0 : index
    %c0_87 = arith.constant 0 : index
    %c0_88 = arith.constant 0 : index
    %81 = vector.load %arg13[%c0_86, %c0_87, %c0_88] : memref<18x10x8xf32, #tpu.memory_space<vmem>>, vector<16x8x8xf32>
    %c0_89 = arith.constant 0 : index
    %c1_90 = arith.constant 1 : index
    %c0_91 = arith.constant 0 : index
    %82 = vector.load %arg13[%c0_89, %c1_90, %c0_91] : memref<18x10x8xf32, #tpu.memory_space<vmem>>, vector<16x8x8xf32>
    %c0_92 = arith.constant 0 : index
    %c2_93 = arith.constant 2 : index
    %c0_94 = arith.constant 0 : index
    %83 = vector.load %arg13[%c0_92, %c2_93, %c0_94] : memref<18x10x8xf32, #tpu.memory_space<vmem>>, vector<16x8x8xf32>
    %c1_95 = arith.constant 1 : index
    %c0_96 = arith.constant 0 : index
    %c0_97 = arith.constant 0 : index
    %84 = vector.load %arg13[%c1_95, %c0_96, %c0_97] : memref<18x10x8xf32, #tpu.memory_space<vmem>>, vector<16x8x8xf32>
    %c1_98 = arith.constant 1 : index
    %c1_99 = arith.constant 1 : index
    %c0_100 = arith.constant 0 : index
    %85 = vector.load %arg13[%c1_98, %c1_99, %c0_100] : memref<18x10x8xf32, #tpu.memory_space<vmem>>, vector<16x8x8xf32>
    %c1_101 = arith.constant 1 : index
    %c2_102 = arith.constant 2 : index
    %c0_103 = arith.constant 0 : index
    %86 = vector.load %arg13[%c1_101, %c2_102, %c0_103] : memref<18x10x8xf32, #tpu.memory_space<vmem>>, vector<16x8x8xf32>
    %c2_104 = arith.constant 2 : index
    %c0_105 = arith.constant 0 : index
    %c0_106 = arith.constant 0 : index
    %87 = vector.load %arg13[%c2_104, %c0_105, %c0_106] : memref<18x10x8xf32, #tpu.memory_space<vmem>>, vector<16x8x8xf32>
    %c2_107 = arith.constant 2 : index
    %c1_108 = arith.constant 1 : index
    %c0_109 = arith.constant 0 : index
    %88 = vector.load %arg13[%c2_107, %c1_108, %c0_109] : memref<18x10x8xf32, #tpu.memory_space<vmem>>, vector<16x8x8xf32>
    %c2_110 = arith.constant 2 : index
    %c2_111 = arith.constant 2 : index
    %c0_112 = arith.constant 0 : index
    %89 = vector.load %arg13[%c2_110, %c2_111, %c0_112] : memref<18x10x8xf32, #tpu.memory_space<vmem>>, vector<16x8x8xf32>
    %90 = vector.extract_strided_slice %81 {offsets = [0, 0, 4], sizes = [16, 8, 4], strides = [1, 1, 1]} : vector<16x8x8xf32> to vector<16x8x4xf32>
    %91 = vector.extract_strided_slice %83 {offsets = [0, 0, 0], sizes = [16, 8, 4], strides = [1, 1, 1]} : vector<16x8x8xf32> to vector<16x8x4xf32>
    %92 = vector.extract_strided_slice %84 {offsets = [0, 0, 4], sizes = [16, 8, 4], strides = [1, 1, 1]} : vector<16x8x8xf32> to vector<16x8x4xf32>
    %93 = vector.extract_strided_slice %86 {offsets = [0, 0, 0], sizes = [16, 8, 4], strides = [1, 1, 1]} : vector<16x8x8xf32> to vector<16x8x4xf32>
    %94 = vector.extract_strided_slice %87 {offsets = [0, 0, 4], sizes = [16, 8, 4], strides = [1, 1, 1]} : vector<16x8x8xf32> to vector<16x8x4xf32>
    %95 = vector.extract_strided_slice %89 {offsets = [0, 0, 0], sizes = [16, 8, 4], strides = [1, 1, 1]} : vector<16x8x8xf32> to vector<16x8x4xf32>
    %96 = tpu.concatenate %90, %82, %92, %85, %94, %88 in 2 : vector<16x8x4xf32>, vector<16x8x8xf32>, vector<16x8x4xf32>, vector<16x8x8xf32>, vector<16x8x4xf32>, vector<16x8x8xf32> -> vector<16x8x36xf32>
    %97 = vector.shape_cast %96 : vector<16x8x36xf32> to vector<128x36xf32>
    %98 = tpu.concatenate %82, %91, %85, %93, %88, %95 in 2 : vector<16x8x8xf32>, vector<16x8x4xf32>, vector<16x8x8xf32>, vector<16x8x4xf32>, vector<16x8x8xf32>, vector<16x8x4xf32> -> vector<16x8x36xf32>
    %99 = vector.shape_cast %98 : vector<16x8x36xf32> to vector<128x36xf32>
    %100 = tpu.concatenate %97, %99 in 0 : vector<128x36xf32>, vector<128x36xf32> -> vector<256x36xf32>
    %c0_113 = arith.constant 0 : index
    %c0_114 = arith.constant 0 : index
    %101 = vector.load %arg7[%c0_113, %c0_114] : memref<36x4xf32, #tpu.memory_space<vmem>>, vector<36x4xf32>
    %cst_115 = arith.constant dense<0.000000e+00> : vector<256x4xf32>
    %102 = tpu.matmul %100, %101, %cst_115 {dimension_numbers = #tpu.dot_dimension_numbers<[1], [0], [0], [1], [0, 0, 1, 1], [], []>} : vector<256x36xf32>, vector<36x4xf32>, vector<256x4xf32> -> vector<256x4xf32>
    %c0_116 = arith.constant 0 : index
    %c0_117 = arith.constant 0 : index
    %103 = vector.load %arg8[%c0_116, %c0_117] : memref<1x4xf32, #tpu.memory_space<vmem>>, vector<1x4xf32>
    %104 = vector.broadcast %103 : vector<1x4xf32> to vector<256x4xf32>
    %105 = arith.addf %102, %104 : vector<256x4xf32>
    %cst_118 = arith.constant 0.000000e+00 : f32
    %106 = vector.broadcast %cst_118 : f32 to vector<256x4xf32>
    %107 = arith.cmpf oge, %105, %106 : vector<256x4xf32>
    %cst_119 = arith.constant 2.000000e-01 : f32
    %108 = vector.broadcast %cst_119 : f32 to vector<256x4xf32>
    %109 = arith.mulf %108, %105 : vector<256x4xf32>
    %110 = arith.select %107, %105, %109 : vector<256x4xi1>, vector<256x4xf32>
    %111 = vector.extract_strided_slice %43 {offsets = [0, 0, 0], sizes = [16, 8, 8], strides = [1, 1, 1]} : vector<16x8x16xf32> to vector<16x8x8xf32>
    %112 = vector.shape_cast %111 : vector<16x8x8xf32> to vector<128x8xf32>
    %113 = vector.extract_strided_slice %43 {offsets = [0, 0, 8], sizes = [16, 8, 8], strides = [1, 1, 1]} : vector<16x8x16xf32> to vector<16x8x8xf32>
    %114 = vector.shape_cast %113 : vector<16x8x8xf32> to vector<128x8xf32>
    %115 = tpu.concatenate %112, %114 in 0 : vector<128x8xf32>, vector<128x8xf32> -> vector<256x8xf32>
    %c0_120 = arith.constant 0 : index
    %c0_121 = arith.constant 0 : index
    %116 = vector.load %arg9[%c0_120, %c0_121] : memref<8x4xf32, #tpu.memory_space<vmem>>, vector<8x4xf32>
    %cst_122 = arith.constant dense<0.000000e+00> : vector<256x4xf32>
    %117 = tpu.matmul %115, %116, %cst_122 {dimension_numbers = #tpu.dot_dimension_numbers<[1], [0], [0], [1], [0, 0, 1, 1], [], []>} : vector<256x8xf32>, vector<8x4xf32>, vector<256x4xf32> -> vector<256x4xf32>
    %c0_123 = arith.constant 0 : index
    %c0_124 = arith.constant 0 : index
    %118 = vector.load %arg10[%c0_123, %c0_124] : memref<1x4xf32, #tpu.memory_space<vmem>>, vector<1x4xf32>
    %119 = vector.broadcast %118 : vector<1x4xf32> to vector<256x4xf32>
    %120 = arith.addf %117, %119 : vector<256x4xf32>
    %121 = arith.addf %110, %120 : vector<256x4xf32>
    %122 = vector.extract_strided_slice %121 {offsets = [0, 0], sizes = [128, 4], strides = [1, 1]} : vector<256x4xf32> to vector<128x4xf32>
    %123 = vector.shape_cast %122 : vector<128x4xf32> to vector<16x8x4xf32>
    %124 = vector.extract_strided_slice %121 {offsets = [128, 0], sizes = [128, 4], strides = [1, 1]} : vector<256x4xf32> to vector<128x4xf32>
    %125 = vector.shape_cast %124 : vector<128x4xf32> to vector<16x8x4xf32>
    %126 = tpu.concatenate %123, %125 in 2 : vector<16x8x4xf32>, vector<16x8x4xf32> -> vector<16x8x8xf32>
    %c0_125 = arith.constant 0 : index
    %c0_126 = arith.constant 0 : index
    %c0_127 = arith.constant 0 : index
    %c0_128 = arith.constant 0 : index
    %127 = vector.load %arg11[%c0_125, %c0_126, %c0_127, %c0_128] : memref<1x16x8x8xf32, #tpu.memory_space<vmem>>, vector<1x16x8x8xf32>
    %128 = vector.shape_cast %127 : vector<1x16x8x8xf32> to vector<16x8x8xf32>
    %129 = vector.shape_cast %126 : vector<16x8x8xf32> to vector<1x16x8x8xf32>
    tpu.vector_store %arg11[%c0_125, %c0_126, %c0_127, %c0_128], %129 {strides = array<i32>} : memref<1x16x8x8xf32, #tpu.memory_space<vmem>>, vector<1x16x8x8xf32>,
    return
  }
  func.func @transform_0(%arg0: i32) -> (i32, i32, i32, i32) {
    %c0_i32 = arith.constant 0 : i32
    %c0_i32_0 = arith.constant 0 : i32
    %c0_i32_1 = arith.constant 0 : i32
    %c0_i32_2 = arith.constant 0 : i32
    return %arg0, %c0_i32, %c0_i32_0, %c0_i32_1 : i32, i32, i32, i32
  }
  func.func @transform_1(%arg0: i32) -> (i32, i32, i32, i32) {
    %c0_i32 = arith.constant 0 : i32
    %c0_i32_0 = arith.constant 0 : i32
    %c0_i32_1 = arith.constant 0 : i32
    %c0_i32_2 = arith.constant 0 : i32
    return %arg0, %c0_i32, %c0_i32_0, %c0_i32_1 : i32, i32, i32, i32
  }
  func.func @transform_2(%arg0: i32) -> (i32, i32, i32) {
    %c0_i32 = arith.constant 0 : i32
    %c0_i32_0 = arith.constant 0 : i32
    %c0_i32_1 = arith.constant 0 : i32
    %c0_i32_2 = arith.constant 0 : i32
    return %c0_i32, %c0_i32_0, %c0_i32_1 : i32, i32, i32
  }
  func.func @transform_3(%arg0: i32) -> (i32, i32) {
    %c0_i32 = arith.constant 0 : i32
    %c0_i32_0 = arith.constant 0 : i32
    %c0_i32_1 = arith.constant 0 : i32
    return %c0_i32, %c0_i32_0 : i32, i32
  }
  func.func @transform_4(%arg0: i32) -> (i32, i32) {
    %c0_i32 = arith.constant 0 : i32
    %c0_i32_0 = arith.constant 0 : i32
    %c0_i32_1 = arith.constant 0 : i32
    return %c0_i32, %c0_i32_0 : i32, i32
  }
  func.func @transform_5(%arg0: i32) -> (i32, i32) {
    %c0_i32 = arith.constant 0 : i32
    %c0_i32_0 = arith.constant 0 : i32
    %c0_i32_1 = arith.constant 0 : i32
    return %c0_i32, %c0_i32_0 : i32, i32
  }
  func.func @transform_6(%arg0: i32) -> (i32, i32) {
    %c0_i32 = arith.constant 0 : i32
    %c0_i32_0 = arith.constant 0 : i32
    %c0_i32_1 = arith.constant 0 : i32
    return %c0_i32, %c0_i32_0 : i32, i32
  }
  func.func @transform_7(%arg0: i32) -> (i32, i32) {
    %c0_i32 = arith.constant 0 : i32
    %c0_i32_0 = arith.constant 0 : i32
    %c0_i32_1 = arith.constant 0 : i32
    return %c0_i32, %c0_i32_0 : i32, i32
  }
  func.func @transform_8(%arg0: i32) -> (i32, i32) {
    %c0_i32 = arith.constant 0 : i32
    %c0_i32_0 = arith.constant 0 : i32
    %c0_i32_1 = arith.constant 0 : i32
    return %c0_i32, %c0_i32_0 : i32, i32
  }
  func.func @transform_9(%arg0: i32) -> (i32, i32) {
    %c0_i32 = arith.constant 0 : i32
    %c0_i32_0 = arith.constant 0 : i32
    %c0_i32_1 = arith.constant 0 : i32
    return %c0_i32, %c0_i32_0 : i32, i32
  }
  func.func @transform_10(%arg0: i32) -> (i32, i32, i32, i32) {
    %c0_i32 = arith.constant 0 : i32
    %c0_i32_0 = arith.constant 0 : i32
    %c0_i32_1 = arith.constant 0 : i32
    %c0_i32_2 = arith.constant 0 : i32
    return %arg0, %c0_i32, %c0_i32_0, %c0_i32_1 : i32, i32, i32, i32
  }
}

</mosaic_0001>

<llo_original>
// kernel: tpu_custom_call.1
$region0: #{tpu_custom_call.1}
  #allocation0 [shape = 'u32[]', space=smem, size = 0x4, offset = 0x4, fixed_abs, tag = 'smem constant byte address 0x4 - core index']
  #allocation1 [shape = 'u32[144,128]{1,0:T(1,128)}', space=vmem, size = 0x12000, scoped, tag = 'internal scratch']
  #allocation2 [shape = 'f32[18,10,16]{2,1,0:T(8,128)}', space=vmem, size = 0x24000, scoped, tag = 'scratch operand']
  #allocation3 [shape = 'f32[18,10,8]{2,1,0:T(8,128)}', space=vmem, size = 0x24000, scoped, tag = 'scratch operand']
  %s0 = inlined_call_operand.vmem [shape: f32[2,8,8,8], index: 0, kind: input, shape index: {}]
  %s1 = inlined_call_operand.vmem [shape: f32[2,16,8,8], index: 1, kind: input, shape index: {}]
  %s2 = inlined_call_operand.vmem [shape: f32[2,8,8], index: 2, kind: input, shape index: {}]
  %s3 = inlined_call_operand.vmem [shape: f32[1,8], index: 3, kind: input, shape index: {}]
  %s4 = inlined_call_operand.vmem [shape: f32[72,4], index: 4, kind: input, shape index: {}]
  %s5 = inlined_call_operand.vmem [shape: f32[1,4], index: 5, kind: input, shape index: {}]
  %s6 = inlined_call_operand.vmem [shape: f32[36,4], index: 6, kind: input, shape index: {}]
  %s7 = inlined_call_operand.vmem [shape: f32[1,4], index: 7, kind: input, shape index: {}]
  %s8 = inlined_call_operand.vmem [shape: f32[8,4], index: 8, kind: input, shape index: {}]
  %s9 = inlined_call_operand.vmem [shape: f32[1,4], index: 9, kind: input, shape index: {}]
  %s10 = inlined_call_operand.vmem [shape: f32[2,16,8,8], index: 10, kind: output, shape index: {}]
  %s11 = sld [smem:[#allocation0]]
  $region73: #{tpu_custom_call.1} parent=0
    _
  %s13 = ssub.s32 1, %s11
  %s14 = scalar_select 0, %s13, %s11
  loop: start=0, step=1, limit=4
  $region2: #{tpu_custom_call.1} parent=0 // loop_pre_header
    _
  $region3: #{tpu_custom_call.1} parent=0 // loop_header
    %s16 = sphi 0, %s20
    %p17 = scmp.ge.s32.totalorder %s16, 4
    %s26 = sphi 0, %s28
    %s29 = sphi 0, %s26
    %s30 = sphi 0, %s29
    %s46 = sphi 0, %s30
    %s52 = sphi 0, %s54
    %s55 = sphi 0, %s52
    %s56 = sphi 0, %s55
    %s72 = sphi 0, %s56
    %s76 = sphi 0, %s76
    %s78 = sphi 0, %s76
    %s79 = sphi 0, %s78
    %s93 = sphi 0, %s79
    %s97 = sphi 0, %s97
    %s99 = sphi 0, %s97
    %s100 = sphi 0, %s99
    %s114 = sphi 0, %s100
    %s118 = sphi 0, %s118
    %s120 = sphi 0, %s118
    %s121 = sphi 0, %s120
    %s135 = sphi 0, %s121
    %s139 = sphi 0, %s139
    %s141 = sphi 0, %s139
    %s142 = sphi 0, %s141
    %s156 = sphi 0, %s142
    %s160 = sphi 0, %s160
    %s162 = sphi 0, %s160
    %s163 = sphi 0, %s162
    %s177 = sphi 0, %s163
    %s181 = sphi 0, %s181
    %s183 = sphi 0, %s181
    %s184 = sphi 0, %s183
    %s198 = sphi 0, %s184
    %s202 = sphi 0, %s202
    %s204 = sphi 0, %s202
    %s205 = sphi 0, %s204
    %s219 = sphi 0, %s205
    %s223 = sphi 0, %s223
    %s225 = sphi 0, %s223
    %s226 = sphi 0, %s225
    %s240 = sphi 0, %s226
    %s246 = sphi 0, %s248
    %s249 = sphi 0, %s246
    %s250 = sphi 0, %s249
    %s266 = sphi 0, %s250
  $region4: #{tpu_custom_call.1} parent=0 // loop_header_branch
    %19 = sbr.rel (%p17) target = $region8
  $region5: #{tpu_custom_call.1} parent=0 // loop_body
    %s21 = ssub.s32 %s16, 1
    %s22 = ssub.s32 %s16, 2
    %s23 = sadd.s32 %s16, 1
    %s24 = ssub.s32 %s16, %s23
    %p25 = scmp.eq.s32.totalorder %s24, 0
    %s27 = sadd.s32 %s26, 1
    %s28 = scalar_select %p25, %s26, %s27
    %p31 = pneg %p25
    %p32 = scmp.eq.s32.totalorder %s16, 1
    %p33 = por %p31, %p32
    %p34 = scmp.ne.s32.totalorder %s26, %s29
    %p35 = scmp.eq.s32.totalorder %s16, 0
    %p36 = por %p34, %p35
    %p37 = scmp.ne.s32.totalorder %s26, %s29
    %p38 = scmp.eq.s32.totalorder %s21, 1
    %p39 = por %p37, %p38
    %p40 = scmp.ne.s32.totalorder %s29, %s30
    %p41 = scmp.eq.s32.totalorder %s21, 0
    %p42 = por %p40, %p41
    %p43 = scmp.ne.s32.totalorder %s29, %s30
    %p44 = scmp.eq.s32.totalorder %s22, 1
    %p45 = por %p43, %p44
    %p47 = scmp.ne.s32.totalorder %s30, %s46
    %p48 = scmp.eq.s32.totalorder %s22, 0
    %p49 = por %p47, %p48
    %s50 = ssub.s32 %s16, %s23
    %p51 = scmp.eq.s32.totalorder %s50, 0
    %s53 = sadd.s32 %s52, 1
    %s54 = scalar_select %p51, %s52, %s53
    %p57 = pneg %p51
    %p58 = scmp.eq.s32.totalorder %s16, 1
    %p59 = por %p57, %p58
    %p60 = scmp.ne.s32.totalorder %s52, %s55
    %p61 = scmp.eq.s32.totalorder %s16, 0
    %p62 = por %p60, %p61
    %p63 = scmp.ne.s32.totalorder %s52, %s55
    %p64 = scmp.eq.s32.totalorder %s21, 1
    %p65 = por %p63, %p64
    %p66 = scmp.ne.s32.totalorder %s55, %s56
    %p67 = scmp.eq.s32.totalorder %s21, 0
    %p68 = por %p66, %p67
    %p69 = scmp.ne.s32.totalorder %s55, %s56
    %p70 = scmp.eq.s32.totalorder %s22, 1
    %p71 = por %p69, %p70
    %p73 = scmp.ne.s32.totalorder %s56, %s72
    %p74 = scmp.eq.s32.totalorder %s22, 0
    %p75 = por %p73, %p74
    %s77 = sadd.s32 %s76, 1
    %p80 = scmp.eq.s32.totalorder %s16, 1
    %p81 = scmp.ne.s32.totalorder %s76, %s78
    %p82 = scmp.eq.s32.totalorder %s16, 0
    %p83 = por %p81, %p82
    %p84 = scmp.ne.s32.totalorder %s76, %s78
    %p85 = scmp.eq.s32.totalorder %s21, 1
    %p86 = por %p84, %p85
    %p87 = scmp.ne.s32.totalorder %s78, %s79
    %p88 = scmp.eq.s32.totalorder %s21, 0
    %p89 = por %p87, %p88
    %p90 = scmp.ne.s32.totalorder %s78, %s79
    %p91 = scmp.eq.s32.totalorder %s22, 1
    %p92 = por %p90, %p91
    %p94 = scmp.ne.s32.totalorder %s79, %s93
    %p95 = scmp.eq.s32.totalorder %s22, 0
    %p96 = por %p94, %p95
    %s98 = sadd.s32 %s97, 1
    %p101 = scmp.eq.s32.totalorder %s16, 1
    %p102 = scmp.ne.s32.totalorder %s97, %s99
    %p103 = scmp.eq.s32.totalorder %s16, 0
    %p104 = por %p102, %p103
    %p105 = scmp.ne.s32.totalorder %s97, %s99
    %p106 = scmp.eq.s32.totalorder %s21, 1
    %p107 = por %p105, %p106
    %p108 = scmp.ne.s32.totalorder %s99, %s100
    %p109 = scmp.eq.s32.totalorder %s21, 0
    %p110 = por %p108, %p109
    %p111 = scmp.ne.s32.totalorder %s99, %s100
    %p112 = scmp.eq.s32.totalorder %s22, 1
    %p113 = por %p111, %p112
    %p115 = scmp.ne.s32.totalorder %s100, %s114
    %p116 = scmp.eq.s32.totalorder %s22, 0
    %p117 = por %p115, %p116
    %s119 = sadd.s32 %s118, 1
    %p122 = scmp.eq.s32.totalorder %s16, 1
    %p123 = scmp.ne.s32.totalorder %s118, %s120
    %p124 = scmp.eq.s32.totalorder %s16, 0
    %p125 = por %p123, %p124
    %p126 = scmp.ne.s32.totalorder %s118, %s120
    %p127 = scmp.eq.s32.totalorder %s21, 1
    %p128 = por %p126, %p127
    %p129 = scmp.ne.s32.totalorder %s120, %s121
    %p130 = scmp.eq.s32.totalorder %s21, 0
    %p131 = por %p129, %p130
    %p132 = scmp.ne.s32.totalorder %s120, %s121
    %p133 = scmp.eq.s32.totalorder %s22, 1
    %p134 = por %p132, %p133
    %p136 = scmp.ne.s32.totalorder %s121, %s135
    %p137 = scmp.eq.s32.totalorder %s22, 0
    %p138 = por %p136, %p137
    %s140 = sadd.s32 %s139, 1
    %p143 = scmp.eq.s32.totalorder %s16, 1
    %p144 = scmp.ne.s32.totalorder %s139, %s141
    %p145 = scmp.eq.s32.totalorder %s16, 0
    %p146 = por %p144, %p145
    %p147 = scmp.ne.s32.totalorder %s139, %s141
    %p148 = scmp.eq.s32.totalorder %s21, 1
    %p149 = por %p147, %p148
    %p150 = scmp.ne.s32.totalorder %s141, %s142
    %p151 = scmp.eq.s32.totalorder %s21, 0
    %p152 = por %p150, %p151
    %p153 = scmp.ne.s32.totalorder %s141, %s142
    %p154 = scmp.eq.s32.totalorder %s22, 1
    %p155 = por %p153, %p154
    %p157 = scmp.ne.s32.totalorder %s142, %s156
    %p158 = scmp.eq.s32.totalorder %s22, 0
    %p159 = por %p157, %p158
    %s161 = sadd.s32 %s160, 1
    %p164 = scmp.eq.s32.totalorder %s16, 1
    %p165 = scmp.ne.s32.totalorder %s160, %s162
    %p166 = scmp.eq.s32.totalorder %s16, 0
    %p167 = por %p165, %p166
    %p168 = scmp.ne.s32.totalorder %s160, %s162
    %p169 = scmp.eq.s32.totalorder %s21, 1
    %p170 = por %p168, %p169
    %p171 = scmp.ne.s32.totalorder %s162, %s163
    %p172 = scmp.eq.s32.totalorder %s21, 0
    %p173 = por %p171, %p172
    %p174 = scmp.ne.s32.totalorder %s162, %s163
    %p175 = scmp.eq.s32.totalorder %s22, 1
    %p176 = por %p174, %p175
    %p178 = scmp.ne.s32.totalorder %s163, %s177
    %p179 = scmp.eq.s32.totalorder %s22, 0
    %p180 = por %p178, %p179
    %s182 = sadd.s32 %s181, 1
    %p185 = scmp.eq.s32.totalorder %s16, 1
    %p186 = scmp.ne.s32.totalorder %s181, %s183
    %p187 = scmp.eq.s32.totalorder %s16, 0
    %p188 = por %p186, %p187
    %p189 = scmp.ne.s32.totalorder %s181, %s183
    %p190 = scmp.eq.s32.totalorder %s21, 1
    %p191 = por %p189, %p190
    %p192 = scmp.ne.s32.totalorder %s183, %s184
    %p193 = scmp.eq.s32.totalorder %s21, 0
    %p194 = por %p192, %p193
    %p195 = scmp.ne.s32.totalorder %s183, %s184
    %p196 = scmp.eq.s32.totalorder %s22, 1
    %p197 = por %p195, %p196
    %p199 = scmp.ne.s32.totalorder %s184, %s198
    %p200 = scmp.eq.s32.totalorder %s22, 0
    %p201 = por %p199, %p200
    %s203 = sadd.s32 %s202, 1
    %p206 = scmp.eq.s32.totalorder %s16, 1
    %p207 = scmp.ne.s32.totalorder %s202, %s204
    %p208 = scmp.eq.s32.totalorder %s16, 0
    %p209 = por %p207, %p208
    %p210 = scmp.ne.s32.totalorder %s202, %s204
    %p211 = scmp.eq.s32.totalorder %s21, 1
    %p212 = por %p210, %p211
    %p213 = scmp.ne.s32.totalorder %s204, %s205
    %p214 = scmp.eq.s32.totalorder %s21, 0
    %p215 = por %p213, %p214
    %p216 = scmp.ne.s32.totalorder %s204, %s205
    %p217 = scmp.eq.s32.totalorder %s22, 1
    %p218 = por %p216, %p217
    %p220 = scmp.ne.s32.totalorder %s205, %s219
    %p221 = scmp.eq.s32.totalorder %s22, 0
    %p222 = por %p220, %p221
    %s224 = sadd.s32 %s223, 1
    %p227 = scmp.eq.s32.totalorder %s16, 1
    %p228 = scmp.ne.s32.totalorder %s223, %s225
    %p229 = scmp.eq.s32.totalorder %s16, 0
    %p230 = por %p228, %p229
    %p231 = scmp.ne.s32.totalorder %s223, %s225
    %p232 = scmp.eq.s32.totalorder %s21, 1
    %p233 = por %p231, %p232
    %p234 = scmp.ne.s32.totalorder %s225, %s226
    %p235 = scmp.eq.s32.totalorder %s21, 0
    %p236 = por %p234, %p235
    %p237 = scmp.ne.s32.totalorder %s225, %s226
    %p238 = scmp.eq.s32.totalorder %s22, 1
    %p239 = por %p237, %p238
    %p241 = scmp.ne.s32.totalorder %s226, %s240
    %p242 = scmp.eq.s32.totalorder %s22, 0
    %p243 = por %p241, %p242
    %s244 = ssub.s32 %s16, %s23
    %p245 = scmp.eq.s32.totalorder %s244, 0
    %s247 = sadd.s32 %s246, 1
    %s248 = scalar_select %p245, %s246, %s247
    %p251 = pneg %p245
    %p252 = scmp.eq.s32.totalorder %s16, 1
    %p253 = por %p251, %p252
    %p254 = scmp.ne.s32.totalorder %s246, %s249
    %p255 = scmp.eq.s32.totalorder %s16, 0
    %p256 = por %p254, %p255
    %p257 = scmp.ne.s32.totalorder %s246, %s249
    %p258 = scmp.eq.s32.totalorder %s21, 1
    %p259 = por %p257, %p258
    %p260 = scmp.ne.s32.totalorder %s249, %s250
    %p261 = scmp.eq.s32.totalorder %s21, 0
    %p262 = por %p260, %p261
    %p263 = scmp.ne.s32.totalorder %s249, %s250
    %p264 = scmp.eq.s32.totalorder %s22, 1
    %p265 = por %p263, %p264
    %p267 = scmp.ne.s32.totalorder %s250, %s266
    %p268 = scmp.eq.s32.totalorder %s22, 0
    %p269 = por %p267, %p268
    %p270 = scmp.le.s32.totalorder 1, %s16
    %p271 = scmp.lt.s32.totalorder %s16, 3
    %p272 = pnand %p270, %p271
    %p273 = pneg %p272
    // Predicated region
    $region9: #{tpu_custom_call.1} parent=5 // pred_check
      _
    $region10: #{tpu_custom_call.1} parent=5 // pred_check_branch
      %275 = sbr.rel (%p272) target = $region12
    $region11: #{tpu_custom_call.1} parent=5 // pred_region
      %s276 = ssub.s32 %s16, 1
      // Predicated region
      $region13: #{tpu_custom_call.1} parent=11 // pred_check
        %p277 = pneg %p89
      $region14: #{tpu_custom_call.1} parent=11 // pred_check_branch
        %279 = sbr.rel (%p277) target = $region16
      $region15: #{tpu_custom_call.1} parent=11 // pred_region
        _
      $region16: #{tpu_custom_call.1} parent=11 // pred_fallthru
        _
      // Predicated region
      $region17: #{tpu_custom_call.1} parent=11 // pred_check
        %p280 = pneg %p110
      $region18: #{tpu_custom_call.1} parent=11 // pred_check_branch
        %282 = sbr.rel (%p280) target = $region20
      $region19: #{tpu_custom_call.1} parent=11 // pred_region
        _
      $region20: #{tpu_custom_call.1} parent=11 // pred_fallthru
        _
      // Predicated region
      $region21: #{tpu_custom_call.1} parent=11 // pred_check
        %p283 = pneg %p131
      $region22: #{tpu_custom_call.1} parent=11 // pred_check_branch
        %285 = sbr.rel (%p283) target = $region24
      $region23: #{tpu_custom_call.1} parent=11 // pred_region
        _
      $region24: #{tpu_custom_call.1} parent=11 // pred_fallthru
        _
      // Predicated region
      $region25: #{tpu_custom_call.1} parent=11 // pred_check
        %p286 = pneg %p152
      $region26: #{tpu_custom_call.1} parent=11 // pred_check_branch
        %288 = sbr.rel (%p286) target = $region28
      $region27: #{tpu_custom_call.1} parent=11 // pred_region
        _
      $region28: #{tpu_custom_call.1} parent=11 // pred_fallthru
        _
      // Predicated region
      $region29: #{tpu_custom_call.1} parent=11 // pred_check
        %p289 = pneg %p173
      $region30: #{tpu_custom_call.1} parent=11 // pred_check_branch
        %291 = sbr.rel (%p289) target = $region32
      $region31: #{tpu_custom_call.1} parent=11 // pred_region
        _
      $region32: #{tpu_custom_call.1} parent=11 // pred_fallthru
        _
      // Predicated region
      $region33: #{tpu_custom_call.1} parent=11 // pred_check
        %p292 = pneg %p194
      $region34: #{tpu_custom_call.1} parent=11 // pred_check_branch
        %294 = sbr.rel (%p292) target = $region36
      $region35: #{tpu_custom_call.1} parent=11 // pred_region
        _
      $region36: #{tpu_custom_call.1} parent=11 // pred_fallthru
        _
      // Predicated region
      $region37: #{tpu_custom_call.1} parent=11 // pred_check
        %p295 = pneg %p215
      $region38: #{tpu_custom_call.1} parent=11 // pred_check_branch
        %297 = sbr.rel (%p295) target = $region40
      $region39: #{tpu_custom_call.1} parent=11 // pred_region
        _
      $region40: #{tpu_custom_call.1} parent=11 // pred_fallthru
        _
      // Predicated region
      $region41: #{tpu_custom_call.1} parent=11 // pred_check
        %p298 = pneg %p236
      $region42: #{tpu_custom_call.1} parent=11 // pred_check_branch
        %300 = sbr.rel (%p298) target = $region44
      $region43: #{tpu_custom_call.1} parent=11 // pred_region
        _
      $region44: #{tpu_custom_call.1} parent=11 // pred_fallthru
        _
    $region12: #{tpu_custom_call.1} parent=5 // pred_fallthru
      _
    %p301 = scmp.lt.s32.totalorder %s16, 2
    // Predicated region
    $region45: #{tpu_custom_call.1} parent=5 // pred_check
      %p302 = pneg %p301
    $region46: #{tpu_custom_call.1} parent=5 // pred_check_branch
      %304 = sbr.rel (%p302) target = $region48
    $region47: #{tpu_custom_call.1} parent=5 // pred_region
      // Predicated region
      $region49: #{tpu_custom_call.1} parent=47 // pred_check
        %p305 = pneg %p36
      $region50: #{tpu_custom_call.1} parent=47 // pred_check_branch
        %307 = sbr.rel (%p305) target = $region52
      $region51: #{tpu_custom_call.1} parent=47 // pred_region
        %p308 = scmp.lt.s32.totalorder %s16, 1
        %s309 = scalar_select %p308, %s16, 1
        %s310 = smul.addr %s309, 8
        %s311 = smul.addr %s310, 8
        %s312 = scalar_lea.vmem %s0, %s311
      $region52: #{tpu_custom_call.1} parent=47 // pred_fallthru
        _
      // Predicated region
      $region53: #{tpu_custom_call.1} parent=47 // pred_check
        %p313 = pneg %p62
      $region54: #{tpu_custom_call.1} parent=47 // pred_check_branch
        %315 = sbr.rel (%p313) target = $region56
      $region55: #{tpu_custom_call.1} parent=47 // pred_region
        %p316 = scmp.lt.s32.totalorder %s16, 1
        %s317 = scalar_select %p316, %s16, 1
        %s318 = smul.addr %s317, 16
        %s319 = smul.addr %s318, 8
        %s320 = scalar_lea.vmem %s1, %s319
      $region56: #{tpu_custom_call.1} parent=47 // pred_fallthru
        _
    $region48: #{tpu_custom_call.1} parent=5 // pred_fallthru
      _
    %p321 = scmp.le.s32.totalorder 1, %s16
    %p322 = scmp.lt.s32.totalorder %s16, 3
    %p323 = pnand %p321, %p322
    %p324 = pneg %p323
    // Predicated region
    $region57: #{tpu_custom_call.1} parent=5 // pred_check
      _
    $region58: #{tpu_custom_call.1} parent=5 // pred_check_branch
      %326 = sbr.rel (%p323) target = $region60
    $region59: #{tpu_custom_call.1} parent=5 // pred_region
      %s327 = ssub.s32 %s16, 1
      %p328 = scmp.lt.s32.totalorder %s21, 1
      %s329 = scalar_select %p328, %s21, 1
      %s330 = smul.addr %s329, 8
      %s331 = smul.addr %s330, 8
      %s332 = scalar_lea.vmem %s0, %s331
      %p333 = pneg %p42
      %p334 = pneg %p39
      %p335 = scmp.lt.s32.totalorder %s21, 1
      %s336 = scalar_select %p335, %s21, 1
      %s337 = smul.addr %s336, 16
      %s338 = smul.addr %s337, 8
      %s339 = scalar_lea.vmem %s1, %s338
      %p340 = pneg %p68
      %p341 = pneg %p65
      %p342 = pneg %p89
      %p343 = pneg %p86
      %p344 = pneg %p110
      %p345 = pneg %p107
      %p346 = pneg %p131
      %p347 = pneg %p128
      %p348 = pneg %p152
      %p349 = pneg %p149
      %p350 = pneg %p173
      %p351 = pneg %p170
      %p352 = pneg %p194
      %p353 = pneg %p191
      %p354 = pneg %p215
      %p355 = pneg %p212
      %p356 = pneg %p236
      %p357 = pneg %p233
      %p358 = pneg %p262
      %p359 = pneg %p259
      %p360 = scmp.lt.s32.totalorder %s21, 1
      %s361 = scalar_select %p360, %s21, 1
      %s362 = smul.addr %s361, 16
      %s363 = smul.addr %s362, 8
      %s364 = scalar_lea.vmem %s10, %s363
      %p365 = scmp.lt.s32.totalorder %s21, 1
      %s366 = scalar_select %p365, %s21, 1
      %s367 = smul.addr %s366, 8
      %s368 = smul.addr %s367, 8
      %s369 = scalar_lea.vmem %s0, %s368
      %p370 = scmp.lt.s32.totalorder %s21, 1
      %s371 = scalar_select %p370, %s21, 1
      %s372 = smul.addr %s371, 16
      %s373 = smul.addr %s372, 8
      %s374 = scalar_lea.vmem %s1, %s373
      %p375 = scmp.lt.s32.totalorder %s21, 1
      %s376 = scalar_select %p375, %s21, 1
      %s377 = smul.addr %s376, 16
      %s378 = smul.addr %s377, 8
      %s379 = scalar_lea.vmem %s10, %s378
      %vm380 = vcmask 130048
      %381 = vst.msk [vmem:[#allocation2] sm:$0xff] %vm380, 0.0
      %vm382 = vcmask 123904
      %383 = vst.msk [vmem:[#allocation2 + $0x8] sm:$0x3] %vm382, 0.0
      %s384 = scalar_lea.vmem [#allocation2], 272
      %385 = vst.msk [vmem:[%s384] sm:$0xff] %vm380, 0.0
      %386 = vst.msk [vmem:[%s384 + $0x8] sm:$0x3] %vm382, 0.0
      %vm387 = vcmask 122880
      %388 = vst.msk [vmem:[#allocation2] sm:$0x1] %vm387, 0.0
      %389 = vst.msk [vmem:[#allocation2 + $0x10] sm:$0x1] %vm387, 0.0
      %390 = vst.msk [vmem:[#allocation2 + $0x20] sm:$0x1] %vm387, 0.0
      %391 = vst.msk [vmem:[#allocation2 + $0x30] sm:$0x1] %vm387, 0.0
      %392 = vst.msk [vmem:[#allocation2 + $0x40] sm:$0x1] %vm387, 0.0
      %393 = vst.msk [vmem:[#allocation2 + $0x50] sm:$0x1] %vm387, 0.0
      %394 = vst.msk [vmem:[#allocation2 + $0x60] sm:$0x1] %vm387, 0.0
      %395 = vst.msk [vmem:[#allocation2 + $0x70] sm:$0x1] %vm387, 0.0
      %396 = vst.msk [vmem:[#allocation2 + $0x80] sm:$0x1] %vm387, 0.0
      %397 = vst.msk [vmem:[#allocation2 + $0x90] sm:$0x1] %vm387, 0.0
      %398 = vst.msk [vmem:[#allocation2 + $0xa0] sm:$0x1] %vm387, 0.0
      %399 = vst.msk [vmem:[#allocation2 + $0xb0] sm:$0x1] %vm387, 0.0
      %400 = vst.msk [vmem:[#allocation2 + $0xc0] sm:$0x1] %vm387, 0.0
      %401 = vst.msk [vmem:[#allocation2 + $0xd0] sm:$0x1] %vm387, 0.0
      %402 = vst.msk [vmem:[#allocation2 + $0xe0] sm:$0x1] %vm387, 0.0
      %403 = vst.msk [vmem:[#allocation2 + $0xf0] sm:$0x1] %vm387, 0.0
      %404 = vst.msk [vmem:[#allocation2 + $0x100] sm:$0x1] %vm387, 0.0
      %405 = vst.msk [vmem:[#allocation2 + $0x110] sm:$0x1] %vm387, 0.0
      %406 = vst.msk [vmem:[#allocation2 + $0x9] sm:$0x1] %vm387, 0.0
      %407 = vst.msk [vmem:[#allocation2 + $0x19] sm:$0x1] %vm387, 0.0
      %408 = vst.msk [vmem:[#allocation2 + $0x29] sm:$0x1] %vm387, 0.0
      %409 = vst.msk [vmem:[#allocation2 + $0x39] sm:$0x1] %vm387, 0.0
      %410 = vst.msk [vmem:[#allocation2 + $0x49] sm:$0x1] %vm387, 0.0
      %411 = vst.msk [vmem:[#allocation2 + $0x59] sm:$0x1] %vm387, 0.0
      %412 = vst.msk [vmem:[#allocation2 + $0x69] sm:$0x1] %vm387, 0.0
      %413 = vst.msk [vmem:[#allocation2 + $0x79] sm:$0x1] %vm387, 0.0
      %414 = vst.msk [vmem:[#allocation2 + $0x89] sm:$0x1] %vm387, 0.0
      %415 = vst.msk [vmem:[#allocation2 + $0x99] sm:$0x1] %vm387, 0.0
      %416 = vst.msk [vmem:[#allocation2 + $0xa9] sm:$0x1] %vm387, 0.0
      %417 = vst.msk [vmem:[#allocation2 + $0xb9] sm:$0x1] %vm387, 0.0
      %418 = vst.msk [vmem:[#allocation2 + $0xc9] sm:$0x1] %vm387, 0.0
      %419 = vst.msk [vmem:[#allocation2 + $0xd9] sm:$0x1] %vm387, 0.0
      %420 = vst.msk [vmem:[#allocation2 + $0xe9] sm:$0x1] %vm387, 0.0
      %421 = vst.msk [vmem:[#allocation2 + $0xf9] sm:$0x1] %vm387, 0.0
      %422 = vst.msk [vmem:[#allocation2 + $0x109] sm:$0x1] %vm387, 0.0
      %423 = vst.msk [vmem:[#allocation2 + $0x119] sm:$0x1] %vm387, 0.0
      %vm424 = vcmask 64512
      %425 = vst.msk [vmem:[#allocation3] sm:$0xff] %vm424, 0.0
      %vm426 = vcmask 58368
      %427 = vst.msk [vmem:[#allocation3 + $0x8] sm:$0x3] %vm426, 0.0
      %s428 = scalar_lea.vmem [#allocation3], 272
      %429 = vst.msk [vmem:[%s428] sm:$0xff] %vm424, 0.0
      %430 = vst.msk [vmem:[%s428 + $0x8] sm:$0x3] %vm426, 0.0
      %vm431 = vcmask 57344
      %432 = vst.msk [vmem:[#allocation3] sm:$0x1] %vm431, 0.0
      %433 = vst.msk [vmem:[#allocation3 + $0x10] sm:$0x1] %vm431, 0.0
      %434 = vst.msk [vmem:[#allocation3 + $0x20] sm:$0x1] %vm431, 0.0
      %435 = vst.msk [vmem:[#allocation3 + $0x30] sm:$0x1] %vm431, 0.0
      %436 = vst.msk [vmem:[#allocation3 + $0x40] sm:$0x1] %vm431, 0.0
      %437 = vst.msk [vmem:[#allocation3 + $0x50] sm:$0x1] %vm431, 0.0
      %438 = vst.msk [vmem:[#allocation3 + $0x60] sm:$0x1] %vm431, 0.0
      %439 = vst.msk [vmem:[#allocation3 + $0x70] sm:$0x1] %vm431, 0.0
      %440 = vst.msk [vmem:[#allocation3 + $0x80] sm:$0x1] %vm431, 0.0
      %441 = vst.msk [vmem:[#allocation3 + $0x90] sm:$0x1] %vm431, 0.0
      %442 = vst.msk [vmem:[#allocation3 + $0xa0] sm:$0x1] %vm431, 0.0
      %443 = vst.msk [vmem:[#allocation3 + $0xb0] sm:$0x1] %vm431, 0.0
      %444 = vst.msk [vmem:[#allocation3 + $0xc0] sm:$0x1] %vm431, 0.0
      %445 = vst.msk [vmem:[#allocation3 + $0xd0] sm:$0x1] %vm431, 0.0
      %446 = vst.msk [vmem:[#allocation3 + $0xe0] sm:$0x1] %vm431, 0.0
      %447 = vst.msk [vmem:[#allocation3 + $0xf0] sm:$0x1] %vm431, 0.0
      %448 = vst.msk [vmem:[#allocation3 + $0x100] sm:$0x1] %vm431, 0.0
      %449 = vst.msk [vmem:[#allocation3 + $0x110] sm:$0x1] %vm431, 0.0
      %450 = vst.msk [vmem:[#allocation3 + $0x9] sm:$0x1] %vm431, 0.0
      %451 = vst.msk [vmem:[#allocation3 + $0x19] sm:$0x1] %vm431, 0.0
      %452 = vst.msk [vmem:[#allocation3 + $0x29] sm:$0x1] %vm431, 0.0
      %453 = vst.msk [vmem:[#allocation3 + $0x39] sm:$0x1] %vm431, 0.0
      %454 = vst.msk [vmem:[#allocation3 + $0x49] sm:$0x1] %vm431, 0.0
      %455 = vst.msk [vmem:[#allocation3 + $0x59] sm:$0x1] %vm431, 0.0
      %456 = vst.msk [vmem:[#allocation3 + $0x69] sm:$0x1] %vm431, 0.0
      %457 = vst.msk [vmem:[#allocation3 + $0x79] sm:$0x1] %vm431, 0.0
      %458 = vst.msk [vmem:[#allocation3 + $0x89] sm:$0x1] %vm431, 0.0
      %459 = vst.msk [vmem:[#allocation3 + $0x99] sm:$0x1] %vm431, 0.0
      %460 = vst.msk [vmem:[#allocation3 + $0xa9] sm:$0x1] %vm431, 0.0
      %461 = vst.msk [vmem:[#allocation3 + $0xb9] sm:$0x1] %vm431, 0.0
      %462 = vst.msk [vmem:[#allocation3 + $0xc9] sm:$0x1] %vm431, 0.0
      %463 = vst.msk [vmem:[#allocation3 + $0xd9] sm:$0x1] %vm431, 0.0
      %464 = vst.msk [vmem:[#allocation3 + $0xe9] sm:$0x1] %vm431, 0.0
      %465 = vst.msk [vmem:[#allocation3 + $0xf9] sm:$0x1] %vm431, 0.0
      %466 = vst.msk [vmem:[#allocation3 + $0x109] sm:$0x1] %vm431, 0.0
      %467 = vst.msk [vmem:[#allocation3 + $0x119] sm:$0x1] %vm431, 0.0
      %v468 = vld [vmem:[%s369] sm:$0xff]
      %v469 = vld [vmem:[%s369 + $0x8] sm:$0xff]
      %v470 = vld [vmem:[%s369 + $0x10] sm:$0xff]
      %v471 = vld [vmem:[%s369 + $0x18] sm:$0xff]
      %v472 = vld [vmem:[%s369 + $0x20] sm:$0xff]
      %v473 = vld [vmem:[%s369 + $0x28] sm:$0xff]
      %v474 = vld [vmem:[%s369 + $0x30] sm:$0xff]
      %v475 = vld [vmem:[%s369 + $0x38] sm:$0xff]
      %v476 = vld [vmem:[%s2] sm:$0xff]
      %v477 = vld [vmem:[%s3] sm:$0x1]
      %v479 = vlaneseq
      %v480 = vshrl.u32 %v479, 7
      %v481 = vsub.s32 0, %v480
      %v482 = vrot.slane %v477, %v481
      %v485 = vsel %vm424, %v468, 0
      %v488 = vsel %vm424, %v469, 0
      %v491 = vsel %vm424, %v470, 0
      %v494 = vsel %vm424, %v471, 0
      %v497 = vsel %vm424, %v472, 0
      %v500 = vsel %vm424, %v473, 0
      %v503 = vsel %vm424, %v474, 0
      %v506 = vsel %vm424, %v475, 0
      %508 = vmatprep.subr.mxu0 0.0
      %509 = vmatpush1.msra.mxu0 0.0
      %510 = vmatprep.subr.mxu0 0.0
      %511 = vmatpush1.msra.mxu0 0.0
      %512 = vmatprep.subr.mxu0 0.0
      %513 = vmatpush1.msra.mxu0 0.0
      %514 = vmatprep.subr.mxu0 0.0
      %515 = vmatpush1.msra.mxu0 0.0
      %516 = vmatprep.subr.mxu0 0.0
      %517 = vmatpush1.msra.mxu0 0.0
      %518 = vmatprep.subr.mxu0 0.0
      %519 = vmatpush1.msra.mxu0 0.0
      %520 = vmatprep.subr.mxu0 0.0
      %521 = vmatpush1.msra.mxu0 0.0
      %522 = vmatprep.subr.mxu0 0.0
      %523 = vmatpush1.msra.mxu0 0.0
      %524 = vmatprep.subr.mxu0 0.0
      %525 = vmatpush1.msra.mxu0 0.0
      %526 = vmatprep.subr.mxu0 0.0
      %527 = vmatpush1.msra.mxu0 0.0
      %528 = vmatprep.subr.mxu0 0.0
      %529 = vmatpush1.msra.mxu0 0.0
      %530 = vmatprep.subr.mxu0 0.0
      %531 = vmatpush1.msra.mxu0 0.0
      %532 = vmatprep.subr.mxu0 0.0
      %533 = vmatpush1.msra.mxu0 0.0
      %534 = vmatprep.subr.mxu0 0.0
      %535 = vmatpush1.msra.mxu0 0.0
      %536 = vmatprep.subr.mxu0 0.0
      %537 = vmatpush1.msra.mxu0 0.0
      %538 = vmatprep.subr.mxu0 0.0
      %539 = vmatpush1.msra.mxu0 %v476
      %540 = vmatprep.subr.mxu0 0.0
      %541 = vmatpush2.msra.mxu0 0.0
      %542 = vmatprep.subr.mxu0 0.0
      %543 = vmatpush2.msra.mxu0 0.0
      %544 = vmatprep.subr.mxu0 0.0
      %545 = vmatpush2.msra.mxu0 0.0
      %546 = vmatprep.subr.mxu0 0.0
      %547 = vmatpush2.msra.mxu0 0.0
      %548 = vmatprep.subr.mxu0 0.0
      %549 = vmatpush2.msra.mxu0 0.0
      %550 = vmatprep.subr.mxu0 0.0
      %551 = vmatpush2.msra.mxu0 0.0
      %552 = vmatprep.subr.mxu0 0.0
      %553 = vmatpush2.msra.mxu0 0.0
      %554 = vmatprep.subr.mxu0 0.0
      %555 = vmatpush2.msra.mxu0 0.0
      %556 = vmatprep.subr.mxu0 0.0
      %557 = vmatpush2.msra.mxu0 0.0
      %558 = vmatprep.subr.mxu0 0.0
      %559 = vmatpush2.msra.mxu0 0.0
      %560 = vmatprep.subr.mxu0 0.0
      %561 = vmatpush2.msra.mxu0 0.0
      %562 = vmatprep.subr.mxu0 0.0
      %563 = vmatpush2.msra.mxu0 0.0
      %564 = vmatprep.subr.mxu0 0.0
      %565 = vmatpush2.msra.mxu0 0.0
      %566 = vmatprep.subr.mxu0 0.0
      %567 = vmatpush2.msra.mxu0 0.0
      %568 = vmatprep.subr.mxu0 0.0
      %569 = vmatpush2.msra.mxu0 0.0
      %570 = vmatprep.subr.mxu0 0.0
      %571 = vmatpush2.msra.mxu0 0.0
      %572 = vmatprep.mubr.f32.mxu0 0.0
      %573 = vmatmul.mubr.f32.gmra.mxu0 %v485
      %v574 = vpop.f32.mrf.mxu0
      %v575 = vadd.f32 %v482, %v574
      %v576 = vpop.f32.mrf.mxu0
      %577 = vmatprep.mubr.f32.mxu0 0.0
      %578 = vmatmul.mubr.f32.gmra.mxu0 %v488
      %v579 = vpop.f32.mrf.mxu0
      %v580 = vadd.f32 %v482, %v579
      %v581 = vpop.f32.mrf.mxu0
      %582 = vmatprep.mubr.f32.mxu0 0.0
      %583 = vmatmul.mubr.f32.gmra.mxu0 %v491
      %v584 = vpop.f32.mrf.mxu0
      %v585 = vadd.f32 %v482, %v584
      %v586 = vpop.f32.mrf.mxu0
      %587 = vmatprep.mubr.f32.mxu0 0.0
      %588 = vmatmul.mubr.f32.gmra.mxu0 %v494
      %v589 = vpop.f32.mrf.mxu0
      %v590 = vadd.f32 %v482, %v589
      %v591 = vpop.f32.mrf.mxu0
      %592 = vmatprep.mubr.f32.mxu0 0.0
      %593 = vmatmul.mubr.f32.gmra.mxu0 %v497
      %v594 = vpop.f32.mrf.mxu0
      %v595 = vadd.f32 %v482, %v594
      %v596 = vpop.f32.mrf.mxu0
      %597 = vmatprep.mubr.f32.mxu0 0.0
      %598 = vmatmul.mubr.f32.gmra.mxu0 %v500
      %v599 = vpop.f32.mrf.mxu0
      %v600 = vadd.f32 %v482, %v599
      %v601 = vpop.f32.mrf.mxu0
      %602 = vmatprep.mubr.f32.mxu0 0.0
      %603 = vmatmul.mubr.f32.gmra.mxu0 %v503
      %v604 = vpop.f32.mrf.mxu0
      %v605 = vadd.f32 %v482, %v604
      %v606 = vpop.f32.mrf.mxu0
      %607 = vmatprep.mubr.f32.mxu0 0.0
      %608 = vmatmul.mubr.f32.gmra.mxu0 %v506
      %v609 = vpop.f32.mrf.mxu0
      %v610 = vadd.f32 %v482, %v609
      %v611 = vpop.f32.mrf.mxu0
      %612 = vdwg.mxu0
      %s613 = scalar_lea.vmem %s2, 8
      %v614 = vld [vmem:[%s613] sm:$0xff]
      %615 = vmatprep.subr.mxu0 0.0
      %616 = vmatpush1.msra.mxu0 0.0
      %617 = vmatprep.subr.mxu0 0.0
      %618 = vmatpush1.msra.mxu0 0.0
      %619 = vmatprep.subr.mxu0 0.0
      %620 = vmatpush1.msra.mxu0 0.0
      %621 = vmatprep.subr.mxu0 0.0
      %622 = vmatpush1.msra.mxu0 0.0
      %623 = vmatprep.subr.mxu0 0.0
      %624 = vmatpush1.msra.mxu0 0.0
      %625 = vmatprep.subr.mxu0 0.0
      %626 = vmatpush1.msra.mxu0 0.0
      %627 = vmatprep.subr.mxu0 0.0
      %628 = vmatpush1.msra.mxu0 0.0
      %629 = vmatprep.subr.mxu0 0.0
      %630 = vmatpush1.msra.mxu0 0.0
      %631 = vmatprep.subr.mxu0 0.0
      %632 = vmatpush1.msra.mxu0 0.0
      %633 = vmatprep.subr.mxu0 0.0
      %634 = vmatpush1.msra.mxu0 0.0
      %635 = vmatprep.subr.mxu0 0.0
      %636 = vmatpush1.msra.mxu0 0.0
      %637 = vmatprep.subr.mxu0 0.0
      %638 = vmatpush1.msra.mxu0 0.0
      %639 = vmatprep.subr.mxu0 0.0
      %640 = vmatpush1.msra.mxu0 0.0
      %641 = vmatprep.subr.mxu0 0.0
      %642 = vmatpush1.msra.mxu0 0.0
      %643 = vmatprep.subr.mxu0 0.0
      %644 = vmatpush1.msra.mxu0 0.0
      %645 = vmatprep.subr.mxu0 0.0
      %646 = vmatpush1.msra.mxu0 %v614
      %647 = vmatprep.subr.mxu0 0.0
      %648 = vmatpush2.msra.mxu0 0.0
      %649 = vmatprep.subr.mxu0 0.0
      %650 = vmatpush2.msra.mxu0 0.0
      %651 = vmatprep.subr.mxu0 0.0
      %652 = vmatpush2.msra.mxu0 0.0
      %653 = vmatprep.subr.mxu0 0.0
      %654 = vmatpush2.msra.mxu0 0.0
      %655 = vmatprep.subr.mxu0 0.0
      %656 = vmatpush2.msra.mxu0 0.0
      %657 = vmatprep.subr.mxu0 0.0
      %658 = vmatpush2.msra.mxu0 0.0
      %659 = vmatprep.subr.mxu0 0.0
      %660 = vmatpush2.msra.mxu0 0.0
      %661 = vmatprep.subr.mxu0 0.0
      %662 = vmatpush2.msra.mxu0 0.0
      %663 = vmatprep.subr.mxu0 0.0
      %664 = vmatpush2.msra.mxu0 0.0
      %665 = vmatprep.subr.mxu0 0.0
      %666 = vmatpush2.msra.mxu0 0.0
      %667 = vmatprep.subr.mxu0 0.0
      %668 = vmatpush2.msra.mxu0 0.0
      %669 = vmatprep.subr.mxu0 0.0
      %670 = vmatpush2.msra.mxu0 0.0
      %671 = vmatprep.subr.mxu0 0.0
      %672 = vmatpush2.msra.mxu0 0.0
      %673 = vmatprep.subr.mxu0 0.0
      %674 = vmatpush2.msra.mxu0 0.0
      %675 = vmatprep.subr.mxu0 0.0
      %676 = vmatpush2.msra.mxu0 0.0
      %677 = vmatprep.subr.mxu0 0.0
      %678 = vmatpush2.msra.mxu0 0.0
      %679 = vmatprep.mubr.f32.mxu0 0.0
      %680 = vmatmul.mubr.f32.gmra.mxu0 %v485
      %v681 = vpop.f32.mrf.mxu0
      %v682 = vadd.f32 %v482, %v681
      %v683 = vpop.f32.mrf.mxu0
      %684 = vmatprep.mubr.f32.mxu0 0.0
      %685 = vmatmul.mubr.f32.gmra.mxu0 %v488
      %v686 = vpop.f32.mrf.mxu0
      %v687 = vadd.f32 %v482, %v686
      %v688 = vpop.f32.mrf.mxu0
      %689 = vmatprep.mubr.f32.mxu0 0.0
      %690 = vmatmul.mubr.f32.gmra.mxu0 %v491
      %v691 = vpop.f32.mrf.mxu0
      %v692 = vadd.f32 %v482, %v691
      %v693 = vpop.f32.mrf.mxu0
      %694 = vmatprep.mubr.f32.mxu0 0.0
      %695 = vmatmul.mubr.f32.gmra.mxu0 %v494
      %v696 = vpop.f32.mrf.mxu0
      %v697 = vadd.f32 %v482, %v696
      %v698 = vpop.f32.mrf.mxu0
      %699 = vmatprep.mubr.f32.mxu0 0.0
      %700 = vmatmul.mubr.f32.gmra.mxu0 %v497
      %v701 = vpop.f32.mrf.mxu0
      %v702 = vadd.f32 %v482, %v701
      %v703 = vpop.f32.mrf.mxu0
      %704 = vmatprep.mubr.f32.mxu0 0.0
      %705 = vmatmul.mubr.f32.gmra.mxu0 %v500
      %v706 = vpop.f32.mrf.mxu0
      %v707 = vadd.f32 %v482, %v706
      %v708 = vpop.f32.mrf.mxu0
      %709 = vmatprep.mubr.f32.mxu0 0.0
      %710 = vmatmul.mubr.f32.gmra.mxu0 %v503
      %v711 = vpop.f32.mrf.mxu0
      %v712 = vadd.f32 %v482, %v711
      %v713 = vpop.f32.mrf.mxu0
      %714 = vmatprep.mubr.f32.mxu0 0.0
      %715 = vmatmul.mubr.f32.gmra.mxu0 %v506
      %v716 = vpop.f32.mrf.mxu0
      %v717 = vadd.f32 %v482, %v716
      %v718 = vpop.f32.mrf.mxu0
      %719 = vdwg.mxu0
      %v720 = vld [vmem:[%s374] sm:$0xff]
      %v721 = vld [vmem:[%s374 + $0x8] sm:$0xff]
      %v722 = vld [vmem:[%s374 + $0x10] sm:$0xff]
      %v723 = vld [vmem:[%s374 + $0x18] sm:$0xff]
      %v724 = vld [vmem:[%s374 + $0x20] sm:$0xff]
      %v725 = vld [vmem:[%s374 + $0x28] sm:$0xff]
      %v726 = vld [vmem:[%s374 + $0x30] sm:$0xff]
      %v727 = vld [vmem:[%s374 + $0x38] sm:$0xff]
      %v728 = vld [vmem:[%s374 + $0x40] sm:$0xff]
      %v729 = vld [vmem:[%s374 + $0x48] sm:$0xff]
      %v730 = vld [vmem:[%s374 + $0x50] sm:$0xff]
      %v731 = vld [vmem:[%s374 + $0x58] sm:$0xff]
      %v732 = vld [vmem:[%s374 + $0x60] sm:$0xff]
      %v733 = vld [vmem:[%s374 + $0x68] sm:$0xff]
      %v734 = vld [vmem:[%s374 + $0x70] sm:$0xff]
      %v735 = vld [vmem:[%s374 + $0x78] sm:$0xff]
      %752 = vrot.lane.b32.xlu0 %v720, 4
      %v753 = vpop.permute.xlu0 %752
      %754 = vrot.lane.b32.xlu0 %v721, 4
      %v755 = vpop.permute.xlu0 %754
      %756 = vrot.lane.b32.xlu0 %v722, 4
      %v757 = vpop.permute.xlu0 %756
      %758 = vrot.lane.b32.xlu0 %v723, 4
      %v759 = vpop.permute.xlu0 %758
      %760 = vrot.lane.b32.xlu0 %v724, 4
      %v761 = vpop.permute.xlu0 %760
      %762 = vrot.lane.b32.xlu0 %v725, 4
      %v763 = vpop.permute.xlu0 %762
      %764 = vrot.lane.b32.xlu0 %v726, 4
      %v765 = vpop.permute.xlu0 %764
      %766 = vrot.lane.b32.xlu0 %v727, 4
      %v767 = vpop.permute.xlu0 %766
      %768 = vrot.lane.b32.xlu0 %v728, 4
      %v769 = vpop.permute.xlu0 %768
      %770 = vrot.lane.b32.xlu0 %v729, 4
      %v771 = vpop.permute.xlu0 %770
      %772 = vrot.lane.b32.xlu0 %v730, 4
      %v773 = vpop.permute.xlu0 %772
      %774 = vrot.lane.b32.xlu0 %v731, 4
      %v775 = vpop.permute.xlu0 %774
      %776 = vrot.lane.b32.xlu0 %v732, 4
      %v777 = vpop.permute.xlu0 %776
      %778 = vrot.lane.b32.xlu0 %v733, 4
      %v779 = vpop.permute.xlu0 %778
      %780 = vrot.lane.b32.xlu0 %v734, 4
      %v781 = vpop.permute.xlu0 %780
      %782 = vrot.lane.b32.xlu0 %v735, 4
      %v783 = vpop.permute.xlu0 %782
      %816 = vrot.lane.b32.xlu0 %v575, 4
      %v817 = vpop.permute.xlu0 %816
      %818 = vrot.lane.b32.xlu0 %v682, 4
      %v819 = vpop.permute.xlu0 %818
      %820 = vrot.lane.b32.xlu0 %v580, 4
      %v821 = vpop.permute.xlu0 %820
      %822 = vrot.lane.b32.xlu0 %v687, 4
      %v823 = vpop.permute.xlu0 %822
      %824 = vrot.lane.b32.xlu0 %v585, 4
      %v825 = vpop.permute.xlu0 %824
      %826 = vrot.lane.b32.xlu0 %v692, 4
      %v827 = vpop.permute.xlu0 %826
      %828 = vrot.lane.b32.xlu0 %v590, 4
      %v829 = vpop.permute.xlu0 %828
      %830 = vrot.lane.b32.xlu0 %v697, 4
      %v831 = vpop.permute.xlu0 %830
      %832 = vrot.lane.b32.xlu0 %v595, 4
      %v833 = vpop.permute.xlu0 %832
      %834 = vrot.lane.b32.xlu0 %v702, 4
      %v835 = vpop.permute.xlu0 %834
      %836 = vrot.lane.b32.xlu0 %v600, 4
      %v837 = vpop.permute.xlu0 %836
      %838 = vrot.lane.b32.xlu0 %v707, 4
      %v839 = vpop.permute.xlu0 %838
      %840 = vrot.lane.b32.xlu0 %v605, 4
      %v841 = vpop.permute.xlu0 %840
      %842 = vrot.lane.b32.xlu0 %v712, 4
      %v843 = vpop.permute.xlu0 %842
      %844 = vrot.lane.b32.xlu0 %v610, 4
      %v845 = vpop.permute.xlu0 %844
      %846 = vrot.lane.b32.xlu0 %v717, 4
      %v847 = vpop.permute.xlu0 %846
      %864 = vrot.lane.b32.xlu0 %v720, 8
      %v865 = vpop.permute.xlu0 %864
      %866 = vrot.lane.b32.xlu0 %v721, 8
      %v867 = vpop.permute.xlu0 %866
      %868 = vrot.lane.b32.xlu0 %v722, 8
      %v869 = vpop.permute.xlu0 %868
      %870 = vrot.lane.b32.xlu0 %v723, 8
      %v871 = vpop.permute.xlu0 %870
      %872 = vrot.lane.b32.xlu0 %v724, 8
      %v873 = vpop.permute.xlu0 %872
      %874 = vrot.lane.b32.xlu0 %v725, 8
      %v875 = vpop.permute.xlu0 %874
      %876 = vrot.lane.b32.xlu0 %v726, 8
      %v877 = vpop.permute.xlu0 %876
      %878 = vrot.lane.b32.xlu0 %v727, 8
      %v879 = vpop.permute.xlu0 %878
      %880 = vrot.lane.b32.xlu0 %v728, 8
      %v881 = vpop.permute.xlu0 %880
      %882 = vrot.lane.b32.xlu0 %v729, 8
      %v883 = vpop.permute.xlu0 %882
      %884 = vrot.lane.b32.xlu0 %v730, 8
      %v885 = vpop.permute.xlu0 %884
      %886 = vrot.lane.b32.xlu0 %v731, 8
      %v887 = vpop.permute.xlu0 %886
      %888 = vrot.lane.b32.xlu0 %v732, 8
      %v889 = vpop.permute.xlu0 %888
      %890 = vrot.lane.b32.xlu0 %v733, 8
      %v891 = vpop.permute.xlu0 %890
      %892 = vrot.lane.b32.xlu0 %v734, 8
      %v893 = vpop.permute.xlu0 %892
      %894 = vrot.lane.b32.xlu0 %v735, 8
      %v895 = vpop.permute.xlu0 %894
      %vm912 = vcmask 31744
      %v913 = vsel %vm912, %v575, %v753
      %v914 = vsel %vm912, %v682, %v755
      %v915 = vsel %vm912, %v580, %v757
      %v916 = vsel %vm912, %v687, %v759
      %v917 = vsel %vm912, %v585, %v761
      %v918 = vsel %vm912, %v692, %v763
      %v919 = vsel %vm912, %v590, %v765
      %v920 = vsel %vm912, %v697, %v767
      %v921 = vsel %vm912, %v595, %v769
      %v922 = vsel %vm912, %v702, %v771
      %v923 = vsel %vm912, %v600, %v773
      %v924 = vsel %vm912, %v707, %v775
      %v925 = vsel %vm912, %v605, %v777
      %v926 = vsel %vm912, %v712, %v779
      %v927 = vsel %vm912, %v610, %v781
      %v928 = vsel %vm912, %v717, %v783
      %v929 = vsel %vm424, %v913, %v817
      %v930 = vsel %vm424, %v914, %v819
      %v931 = vsel %vm424, %v915, %v821
      %v932 = vsel %vm424, %v916, %v823
      %v933 = vsel %vm424, %v917, %v825
      %v934 = vsel %vm424, %v918, %v827
      %v935 = vsel %vm424, %v919, %v829
      %v936 = vsel %vm424, %v920, %v831
      %v937 = vsel %vm424, %v921, %v833
      %v938 = vsel %vm424, %v922, %v835
      %v939 = vsel %vm424, %v923, %v837
      %v940 = vsel %vm424, %v924, %v839
      %v941 = vsel %vm424, %v925, %v841
      %v942 = vsel %vm424, %v926, %v843
      %v943 = vsel %vm424, %v927, %v845
      %v944 = vsel %vm424, %v928, %v847
      %vm945 = vcmask 97280
      %v946 = vsel %vm945, %v929, %v865
      %v947 = vsel %vm945, %v930, %v867
      %v948 = vsel %vm945, %v931, %v869
      %v949 = vsel %vm945, %v932, %v871
      %v950 = vsel %vm945, %v933, %v873
      %v951 = vsel %vm945, %v934, %v875
      %v952 = vsel %vm945, %v935, %v877
      %v953 = vsel %vm945, %v936, %v879
      %v954 = vsel %vm945, %v937, %v881
      %v955 = vsel %vm945, %v938, %v883
      %v956 = vsel %vm945, %v939, %v885
      %v957 = vsel %vm945, %v940, %v887
      %v958 = vsel %vm945, %v941, %v889
      %v959 = vsel %vm945, %v942, %v891
      %v960 = vsel %vm945, %v943, %v893
      %v961 = vsel %vm945, %v944, %v895
      %s962 = scalar_lea.vmem [#allocation2], 16
      %963 = vst.msk [vmem:[%s962 + $0x1] sm:$0xff] %vm380, %v946
      %964 = vst.msk [vmem:[%s962 + $0x11] sm:$0xff] %vm380, %v947
      %965 = vst.msk [vmem:[%s962 + $0x21] sm:$0xff] %vm380, %v948
      %966 = vst.msk [vmem:[%s962 + $0x31] sm:$0xff] %vm380, %v949
      %967 = vst.msk [vmem:[%s962 + $0x41] sm:$0xff] %vm380, %v950
      %968 = vst.msk [vmem:[%s962 + $0x51] sm:$0xff] %vm380, %v951
      %969 = vst.msk [vmem:[%s962 + $0x61] sm:$0xff] %vm380, %v952
      %970 = vst.msk [vmem:[%s962 + $0x71] sm:$0xff] %vm380, %v953
      %971 = vst.msk [vmem:[%s962 + $0x81] sm:$0xff] %vm380, %v954
      %972 = vst.msk [vmem:[%s962 + $0x91] sm:$0xff] %vm380, %v955
      %973 = vst.msk [vmem:[%s962 + $0xa1] sm:$0xff] %vm380, %v956
      %974 = vst.msk [vmem:[%s962 + $0xb1] sm:$0xff] %vm380, %v957
      %975 = vst.msk [vmem:[%s962 + $0xc1] sm:$0xff] %vm380, %v958
      %976 = vst.msk [vmem:[%s962 + $0xd1] sm:$0xff] %vm380, %v959
      %977 = vst.msk [vmem:[%s962 + $0xe1] sm:$0xff] %vm380, %v960
      %978 = vst.msk [vmem:[%s962 + $0xf1] sm:$0xff] %vm380, %v961
      %v979 = vld [vmem:[#allocation2] sm:$0xff]
      %v980 = vld [vmem:[#allocation2 + $0x10] sm:$0xff]
      %v981 = vld [vmem:[#allocation2 + $0x20] sm:$0xff]
      %v982 = vld [vmem:[#allocation2 + $0x30] sm:$0xff]
      %v983 = vld [vmem:[#allocation2 + $0x40] sm:$0xff]
      %v984 = vld [vmem:[#allocation2 + $0x50] sm:$0xff]
      %v985 = vld [vmem:[#allocation2 + $0x60] sm:$0xff]
      %v986 = vld [vmem:[#allocation2 + $0x70] sm:$0xff]
      %v987 = vld [vmem:[#allocation2 + $0x80] sm:$0xff]
      %v988 = vld [vmem:[#allocation2 + $0x90] sm:$0xff]
      %v989 = vld [vmem:[#allocation2 + $0xa0] sm:$0xff]
      %v990 = vld [vmem:[#allocation2 + $0xb0] sm:$0xff]
      %v991 = vld [vmem:[#allocation2 + $0xc0] sm:$0xff]
      %v992 = vld [vmem:[#allocation2 + $0xd0] sm:$0xff]
      %v993 = vld [vmem:[#allocation2 + $0xe0] sm:$0xff]
      %v994 = vld [vmem:[#allocation2 + $0xf0] sm:$0xff]
      %v995 = vld [vmem:[#allocation2 + $0x1] sm:$0xff]
      %v996 = vld [vmem:[#allocation2 + $0x11] sm:$0xff]
      %v997 = vld [vmem:[#allocation2 + $0x21] sm:$0xff]
      %v998 = vld [vmem:[#allocation2 + $0x31] sm:$0xff]
      %v999 = vld [vmem:[#allocation2 + $0x41] sm:$0xff]
      %v1000 = vld [vmem:[#allocation2 + $0x51] sm:$0xff]
      %v1001 = vld [vmem:[#allocation2 + $0x61] sm:$0xff]
      %v1002 = vld [vmem:[#allocation2 + $0x71] sm:$0xff]
      %v1003 = vld [vmem:[#allocation2 + $0x81] sm:$0xff]
      %v1004 = vld [vmem:[#allocation2 + $0x91] sm:$0xff]
      %v1005 = vld [vmem:[#allocation2 + $0xa1] sm:$0xff]
      %v1006 = vld [vmem:[#allocation2 + $0xb1] sm:$0xff]
      %v1007 = vld [vmem:[#allocation2 + $0xc1] sm:$0xff]
      %v1008 = vld [vmem:[#allocation2 + $0xd1] sm:$0xff]
      %v1009 = vld [vmem:[#allocation2 + $0xe1] sm:$0xff]
      %v1010 = vld [vmem:[#allocation2 + $0xf1] sm:$0xff]
      %v1011 = vld [vmem:[#allocation2 + $0x2] sm:$0xff]
      %v1012 = vld [vmem:[#allocation2 + $0x12] sm:$0xff]
      %v1013 = vld [vmem:[#allocation2 + $0x22] sm:$0xff]
      %v1014 = vld [vmem:[#allocation2 + $0x32] sm:$0xff]
      %v1015 = vld [vmem:[#allocation2 + $0x42] sm:$0xff]
      %v1016 = vld [vmem:[#allocation2 + $0x52] sm:$0xff]
      %v1017 = vld [vmem:[#allocation2 + $0x62] sm:$0xff]
      %v1018 = vld [vmem:[#allocation2 + $0x72] sm:$0xff]
      %v1019 = vld [vmem:[#allocation2 + $0x82] sm:$0xff]
      %v1020 = vld [vmem:[#allocation2 + $0x92] sm:$0xff]
      %v1021 = vld [vmem:[#allocation2 + $0xa2] sm:$0xff]
      %v1022 = vld [vmem:[#allocation2 + $0xb2] sm:$0xff]
      %v1023 = vld [vmem:[#allocation2 + $0xc2] sm:$0xff]
      %v1024 = vld [vmem:[#allocation2 + $0xd2] sm:$0xff]
      %v1025 = vld [vmem:[#allocation2 + $0xe2] sm:$0xff]
      %v1026 = vld [vmem:[#allocation2 + $0xf2] sm:$0xff]
      %v1027 = vld [vmem:[%s962] sm:$0xff]
      %v1028 = vld [vmem:[%s962 + $0x10] sm:$0xff]
      %v1029 = vld [vmem:[%s962 + $0x20] sm:$0xff]
      %v1030 = vld [vmem:[%s962 + $0x30] sm:$0xff]
      %v1031 = vld [vmem:[%s962 + $0x40] sm:$0xff]
      %v1032 = vld [vmem:[%s962 + $0x50] sm:$0xff]
      %v1033 = vld [vmem:[%s962 + $0x60] sm:$0xff]
      %v1034 = vld [vmem:[%s962 + $0x70] sm:$0xff]
      %v1035 = vld [vmem:[%s962 + $0x80] sm:$0xff]
      %v1036 = vld [vmem:[%s962 + $0x90] sm:$0xff]
      %v1037 = vld [vmem:[%s962 + $0xa0] sm:$0xff]
      %v1038 = vld [vmem:[%s962 + $0xb0] sm:$0xff]
      %v1039 = vld [vmem:[%s962 + $0xc0] sm:$0xff]
      %v1040 = vld [vmem:[%s962 + $0xd0] sm:$0xff]
      %v1041 = vld [vmem:[%s962 + $0xe0] sm:$0xff]
      %v1042 = vld [vmem:[%s962 + $0xf0] sm:$0xff]
      %v1043 = vld [vmem:[%s962 + $0x1] sm:$0xff]
      %v1044 = vld [vmem:[%s962 + $0x11] sm:$0xff]
      %v1045 = vld [vmem:[%s962 + $0x21] sm:$0xff]
      %v1046 = vld [vmem:[%s962 + $0x31] sm:$0xff]
      %v1047 = vld [vmem:[%s962 + $0x41] sm:$0xff]
      %v1048 = vld [vmem:[%s962 + $0x51] sm:$0xff]
      %v1049 = vld [vmem:[%s962 + $0x61] sm:$0xff]
      %v1050 = vld [vmem:[%s962 + $0x71] sm:$0xff]
      %v1051 = vld [vmem:[%s962 + $0x81] sm:$0xff]
      %v1052 = vld [vmem:[%s962 + $0x91] sm:$0xff]
      %v1053 = vld [vmem:[%s962 + $0xa1] sm:$0xff]
      %v1054 = vld [vmem:[%s962 + $0xb1] sm:$0xff]
      %v1055 = vld [vmem:[%s962 + $0xc1] sm:$0xff]
      %v1056 = vld [vmem:[%s962 + $0xd1] sm:$0xff]
      %v1057 = vld [vmem:[%s962 + $0xe1] sm:$0xff]
      %v1058 = vld [vmem:[%s962 + $0xf1] sm:$0xff]
      %v1059 = vld [vmem:[%s962 + $0x2] sm:$0xff]
      %v1060 = vld [vmem:[%s962 + $0x12] sm:$0xff]
      %v1061 = vld [vmem:[%s962 + $0x22] sm:$0xff]
      %v1062 = vld [vmem:[%s962 + $0x32] sm:$0xff]
      %v1063 = vld [vmem:[%s962 + $0x42] sm:$0xff]
      %v1064 = vld [vmem:[%s962 + $0x52] sm:$0xff]
      %v1065 = vld [vmem:[%s962 + $0x62] sm:$0xff]
      %v1066 = vld [vmem:[%s962 + $0x72] sm:$0xff]
      %v1067 = vld [vmem:[%s962 + $0x82] sm:$0xff]
      %v1068 = vld [vmem:[%s962 + $0x92] sm:$0xff]
      %v1069 = vld [vmem:[%s962 + $0xa2] sm:$0xff]
      %v1070 = vld [vmem:[%s962 + $0xb2] sm:$0xff]
      %v1071 = vld [vmem:[%s962 + $0xc2] sm:$0xff]
      %v1072 = vld [vmem:[%s962 + $0xd2] sm:$0xff]
      %v1073 = vld [vmem:[%s962 + $0xe2] sm:$0xff]
      %v1074 = vld [vmem:[%s962 + $0xf2] sm:$0xff]
      %s1075 = scalar_lea.vmem [#allocation2], 32
      %v1076 = vld [vmem:[%s1075] sm:$0xff]
      %v1077 = vld [vmem:[%s1075 + $0x10] sm:$0xff]
      %v1078 = vld [vmem:[%s1075 + $0x20] sm:$0xff]
      %v1079 = vld [vmem:[%s1075 + $0x30] sm:$0xff]
      %v1080 = vld [vmem:[%s1075 + $0x40] sm:$0xff]
      %v1081 = vld [vmem:[%s1075 + $0x50] sm:$0xff]
      %v1082 = vld [vmem:[%s1075 + $0x60] sm:$0xff]
      %v1083 = vld [vmem:[%s1075 + $0x70] sm:$0xff]
      %v1084 = vld [vmem:[%s1075 + $0x80] sm:$0xff]
      %v1085 = vld [vmem:[%s1075 + $0x90] sm:$0xff]
      %v1086 = vld [vmem:[%s1075 + $0xa0] sm:$0xff]
      %v1087 = vld [vmem:[%s1075 + $0xb0] sm:$0xff]
      %v1088 = vld [vmem:[%s1075 + $0xc0] sm:$0xff]
      %v1089 = vld [vmem:[%s1075 + $0xd0] sm:$0xff]
      %v1090 = vld [vmem:[%s1075 + $0xe0] sm:$0xff]
      %v1091 = vld [vmem:[%s1075 + $0xf0] sm:$0xff]
      %v1092 = vld [vmem:[%s1075 + $0x1] sm:$0xff]
      %v1093 = vld [vmem:[%s1075 + $0x11] sm:$0xff]
      %v1094 = vld [vmem:[%s1075 + $0x21] sm:$0xff]
      %v1095 = vld [vmem:[%s1075 + $0x31] sm:$0xff]
      %v1096 = vld [vmem:[%s1075 + $0x41] sm:$0xff]
      %v1097 = vld [vmem:[%s1075 + $0x51] sm:$0xff]
      %v1098 = vld [vmem:[%s1075 + $0x61] sm:$0xff]
      %v1099 = vld [vmem:[%s1075 + $0x71] sm:$0xff]
      %v1100 = vld [vmem:[%s1075 + $0x81] sm:$0xff]
      %v1101 = vld [vmem:[%s1075 + $0x91] sm:$0xff]
      %v1102 = vld [vmem:[%s1075 + $0xa1] sm:$0xff]
      %v1103 = vld [vmem:[%s1075 + $0xb1] sm:$0xff]
      %v1104 = vld [vmem:[%s1075 + $0xc1] sm:$0xff]
      %v1105 = vld [vmem:[%s1075 + $0xd1] sm:$0xff]
      %v1106 = vld [vmem:[%s1075 + $0xe1] sm:$0xff]
      %v1107 = vld [vmem:[%s1075 + $0xf1] sm:$0xff]
      %v1108 = vld [vmem:[%s1075 + $0x2] sm:$0xff]
      %v1109 = vld [vmem:[%s1075 + $0x12] sm:$0xff]
      %v1110 = vld [vmem:[%s1075 + $0x22] sm:$0xff]
      %v1111 = vld [vmem:[%s1075 + $0x32] sm:$0xff]
      %v1112 = vld [vmem:[%s1075 + $0x42] sm:$0xff]
      %v1113 = vld [vmem:[%s1075 + $0x52] sm:$0xff]
      %v1114 = vld [vmem:[%s1075 + $0x62] sm:$0xff]
      %v1115 = vld [vmem:[%s1075 + $0x72] sm:$0xff]
      %v1116 = vld [vmem:[%s1075 + $0x82] sm:$0xff]
      %v1117 = vld [vmem:[%s1075 + $0x92] sm:$0xff]
      %v1118 = vld [vmem:[%s1075 + $0xa2] sm:$0xff]
      %v1119 = vld [vmem:[%s1075 + $0xb2] sm:$0xff]
      %v1120 = vld [vmem:[%s1075 + $0xc2] sm:$0xff]
      %v1121 = vld [vmem:[%s1075 + $0xd2] sm:$0xff]
      %v1122 = vld [vmem:[%s1075 + $0xe2] sm:$0xff]
      %v1123 = vld [vmem:[%s1075 + $0xf2] sm:$0xff]
      %1140 = vrot.lane.b32.xlu0 %v979, 120
      %v1141 = vpop.permute.xlu0 %1140
      %1142 = vrot.lane.b32.xlu0 %v980, 120
      %v1143 = vpop.permute.xlu0 %1142
      %1144 = vrot.lane.b32.xlu0 %v981, 120
      %v1145 = vpop.permute.xlu0 %1144
      %1146 = vrot.lane.b32.xlu0 %v982, 120
      %v1147 = vpop.permute.xlu0 %1146
      %1148 = vrot.lane.b32.xlu0 %v983, 120
      %v1149 = vpop.permute.xlu0 %1148
      %1150 = vrot.lane.b32.xlu0 %v984, 120
      %v1151 = vpop.permute.xlu0 %1150
      %1152 = vrot.lane.b32.xlu0 %v985, 120
      %v1153 = vpop.permute.xlu0 %1152
      %1154 = vrot.lane.b32.xlu0 %v986, 120
      %v1155 = vpop.permute.xlu0 %1154
      %1156 = vrot.lane.b32.xlu0 %v987, 120
      %v1157 = vpop.permute.xlu0 %1156
      %1158 = vrot.lane.b32.xlu0 %v988, 120
      %v1159 = vpop.permute.xlu0 %1158
      %1160 = vrot.lane.b32.xlu0 %v989, 120
      %v1161 = vpop.permute.xlu0 %1160
      %1162 = vrot.lane.b32.xlu0 %v990, 120
      %v1163 = vpop.permute.xlu0 %1162
      %1164 = vrot.lane.b32.xlu0 %v991, 120
      %v1165 = vpop.permute.xlu0 %1164
      %1166 = vrot.lane.b32.xlu0 %v992, 120
      %v1167 = vpop.permute.xlu0 %1166
      %1168 = vrot.lane.b32.xlu0 %v993, 120
      %v1169 = vpop.permute.xlu0 %1168
      %1170 = vrot.lane.b32.xlu0 %v994, 120
      %v1171 = vpop.permute.xlu0 %1170
      %1204 = vrot.lane.b32.xlu0 %v995, 8
      %v1205 = vpop.permute.xlu0 %1204
      %1206 = vrot.lane.b32.xlu0 %v996, 8
      %v1207 = vpop.permute.xlu0 %1206
      %1208 = vrot.lane.b32.xlu0 %v997, 8
      %v1209 = vpop.permute.xlu0 %1208
      %1210 = vrot.lane.b32.xlu0 %v998, 8
      %v1211 = vpop.permute.xlu0 %1210
      %1212 = vrot.lane.b32.xlu0 %v999, 8
      %v1213 = vpop.permute.xlu0 %1212
      %1214 = vrot.lane.b32.xlu0 %v1000, 8
      %v1215 = vpop.permute.xlu0 %1214
      %1216 = vrot.lane.b32.xlu0 %v1001, 8
      %v1217 = vpop.permute.xlu0 %1216
      %1218 = vrot.lane.b32.xlu0 %v1002, 8
      %v1219 = vpop.permute.xlu0 %1218
      %1220 = vrot.lane.b32.xlu0 %v1003, 8
      %v1221 = vpop.permute.xlu0 %1220
      %1222 = vrot.lane.b32.xlu0 %v1004, 8
      %v1223 = vpop.permute.xlu0 %1222
      %1224 = vrot.lane.b32.xlu0 %v1005, 8
      %v1225 = vpop.permute.xlu0 %1224
      %1226 = vrot.lane.b32.xlu0 %v1006, 8
      %v1227 = vpop.permute.xlu0 %1226
      %1228 = vrot.lane.b32.xlu0 %v1007, 8
      %v1229 = vpop.permute.xlu0 %1228
      %1230 = vrot.lane.b32.xlu0 %v1008, 8
      %v1231 = vpop.permute.xlu0 %1230
      %1232 = vrot.lane.b32.xlu0 %v1009, 8
      %v1233 = vpop.permute.xlu0 %1232
      %1234 = vrot.lane.b32.xlu0 %v1010, 8
      %v1235 = vpop.permute.xlu0 %1234
      %1268 = vrot.lane.b32.xlu0 %v1027, 16
      %v1269 = vpop.permute.xlu0 %1268
      %1270 = vrot.lane.b32.xlu0 %v1028, 16
      %v1271 = vpop.permute.xlu0 %1270
      %1272 = vrot.lane.b32.xlu0 %v1029, 16
      %v1273 = vpop.permute.xlu0 %1272
      %1274 = vrot.lane.b32.xlu0 %v1030, 16
      %v1275 = vpop.permute.xlu0 %1274
      %1276 = vrot.lane.b32.xlu0 %v1031, 16
      %v1277 = vpop.permute.xlu0 %1276
      %1278 = vrot.lane.b32.xlu0 %v1032, 16
      %v1279 = vpop.permute.xlu0 %1278
      %1280 = vrot.lane.b32.xlu0 %v1033, 16
      %v1281 = vpop.permute.xlu0 %1280
      %1282 = vrot.lane.b32.xlu0 %v1034, 16
      %v1283 = vpop.permute.xlu0 %1282
      %1284 = vrot.lane.b32.xlu0 %v1035, 16
      %v1285 = vpop.permute.xlu0 %1284
      %1286 = vrot.lane.b32.xlu0 %v1036, 16
      %v1287 = vpop.permute.xlu0 %1286
      %1288 = vrot.lane.b32.xlu0 %v1037, 16
      %v1289 = vpop.permute.xlu0 %1288
      %1290 = vrot.lane.b32.xlu0 %v1038, 16
      %v1291 = vpop.permute.xlu0 %1290
      %1292 = vrot.lane.b32.xlu0 %v1039, 16
      %v1293 = vpop.permute.xlu0 %1292
      %1294 = vrot.lane.b32.xlu0 %v1040, 16
      %v1295 = vpop.permute.xlu0 %1294
      %1296 = vrot.lane.b32.xlu0 %v1041, 16
      %v1297 = vpop.permute.xlu0 %1296
      %1298 = vrot.lane.b32.xlu0 %v1042, 16
      %v1299 = vpop.permute.xlu0 %1298
      %1332 = vrot.lane.b32.xlu0 %v1043, 32
      %v1333 = vpop.permute.xlu0 %1332
      %1334 = vrot.lane.b32.xlu0 %v1044, 32
      %v1335 = vpop.permute.xlu0 %1334
      %1336 = vrot.lane.b32.xlu0 %v1045, 32
      %v1337 = vpop.permute.xlu0 %1336
      %1338 = vrot.lane.b32.xlu0 %v1046, 32
      %v1339 = vpop.permute.xlu0 %1338
      %1340 = vrot.lane.b32.xlu0 %v1047, 32
      %v1341 = vpop.permute.xlu0 %1340
      %1342 = vrot.lane.b32.xlu0 %v1048, 32
      %v1343 = vpop.permute.xlu0 %1342
      %1344 = vrot.lane.b32.xlu0 %v1049, 32
      %v1345 = vpop.permute.xlu0 %1344
      %1346 = vrot.lane.b32.xlu0 %v1050, 32
      %v1347 = vpop.permute.xlu0 %1346
      %1348 = vrot.lane.b32.xlu0 %v1051, 32
      %v1349 = vpop.permute.xlu0 %1348
      %1350 = vrot.lane.b32.xlu0 %v1052, 32
      %v1351 = vpop.permute.xlu0 %1350
      %1352 = vrot.lane.b32.xlu0 %v1053, 32
      %v1353 = vpop.permute.xlu0 %1352
      %1354 = vrot.lane.b32.xlu0 %v1054, 32
      %v1355 = vpop.permute.xlu0 %1354
      %1356 = vrot.lane.b32.xlu0 %v1055, 32
      %v1357 = vpop.permute.xlu0 %1356
      %1358 = vrot.lane.b32.xlu0 %v1056, 32
      %v1359 = vpop.permute.xlu0 %1358
      %1360 = vrot.lane.b32.xlu0 %v1057, 32
      %v1361 = vpop.permute.xlu0 %1360
      %1362 = vrot.lane.b32.xlu0 %v1058, 32
      %v1363 = vpop.permute.xlu0 %1362
      %1396 = vrot.lane.b32.xlu0 %v1076, 40
      %v1397 = vpop.permute.xlu0 %1396
      %1398 = vrot.lane.b32.xlu0 %v1077, 40
      %v1399 = vpop.permute.xlu0 %1398
      %1400 = vrot.lane.b32.xlu0 %v1078, 40
      %v1401 = vpop.permute.xlu0 %1400
      %1402 = vrot.lane.b32.xlu0 %v1079, 40
      %v1403 = vpop.permute.xlu0 %1402
      %1404 = vrot.lane.b32.xlu0 %v1080, 40
      %v1405 = vpop.permute.xlu0 %1404
      %1406 = vrot.lane.b32.xlu0 %v1081, 40
      %v1407 = vpop.permute.xlu0 %1406
      %1408 = vrot.lane.b32.xlu0 %v1082, 40
      %v1409 = vpop.permute.xlu0 %1408
      %1410 = vrot.lane.b32.xlu0 %v1083, 40
      %v1411 = vpop.permute.xlu0 %1410
      %1412 = vrot.lane.b32.xlu0 %v1084, 40
      %v1413 = vpop.permute.xlu0 %1412
      %1414 = vrot.lane.b32.xlu0 %v1085, 40
      %v1415 = vpop.permute.xlu0 %1414
      %1416 = vrot.lane.b32.xlu0 %v1086, 40
      %v1417 = vpop.permute.xlu0 %1416
      %1418 = vrot.lane.b32.xlu0 %v1087, 40
      %v1419 = vpop.permute.xlu0 %1418
      %1420 = vrot.lane.b32.xlu0 %v1088, 40
      %v1421 = vpop.permute.xlu0 %1420
      %1422 = vrot.lane.b32.xlu0 %v1089, 40
      %v1423 = vpop.permute.xlu0 %1422
      %1424 = vrot.lane.b32.xlu0 %v1090, 40
      %v1425 = vpop.permute.xlu0 %1424
      %1426 = vrot.lane.b32.xlu0 %v1091, 40
      %v1427 = vpop.permute.xlu0 %1426
      %1460 = vrot.lane.b32.xlu0 %v1092, 56
      %v1461 = vpop.permute.xlu0 %1460
      %1462 = vrot.lane.b32.xlu0 %v1093, 56
      %v1463 = vpop.permute.xlu0 %1462
      %1464 = vrot.lane.b32.xlu0 %v1094, 56
      %v1465 = vpop.permute.xlu0 %1464
      %1466 = vrot.lane.b32.xlu0 %v1095, 56
      %v1467 = vpop.permute.xlu0 %1466
      %1468 = vrot.lane.b32.xlu0 %v1096, 56
      %v1469 = vpop.permute.xlu0 %1468
      %1470 = vrot.lane.b32.xlu0 %v1097, 56
      %v1471 = vpop.permute.xlu0 %1470
      %1472 = vrot.lane.b32.xlu0 %v1098, 56
      %v1473 = vpop.permute.xlu0 %1472
      %1474 = vrot.lane.b32.xlu0 %v1099, 56
      %v1475 = vpop.permute.xlu0 %1474
      %1476 = vrot.lane.b32.xlu0 %v1100, 56
      %v1477 = vpop.permute.xlu0 %1476
      %1478 = vrot.lane.b32.xlu0 %v1101, 56
      %v1479 = vpop.permute.xlu0 %1478
      %1480 = vrot.lane.b32.xlu0 %v1102, 56
      %v1481 = vpop.permute.xlu0 %1480
      %1482 = vrot.lane.b32.xlu0 %v1103, 56
      %v1483 = vpop.permute.xlu0 %1482
      %1484 = vrot.lane.b32.xlu0 %v1104, 56
      %v1485 = vpop.permute.xlu0 %1484
      %1486 = vrot.lane.b32.xlu0 %v1105, 56
      %v1487 = vpop.permute.xlu0 %1486
      %1488 = vrot.lane.b32.xlu0 %v1106, 56
      %v1489 = vpop.permute.xlu0 %1488
      %1490 = vrot.lane.b32.xlu0 %v1107, 56
      %v1491 = vpop.permute.xlu0 %1490
      %v1508 = vsel %vm424, %v1141, %v1205
      %v1509 = vsel %vm424, %v1143, %v1207
      %v1510 = vsel %vm424, %v1145, %v1209
      %v1511 = vsel %vm424, %v1147, %v1211
      %v1512 = vsel %vm424, %v1149, %v1213
      %v1513 = vsel %vm424, %v1151, %v1215
      %v1514 = vsel %vm424, %v1153, %v1217
      %v1515 = vsel %vm424, %v1155, %v1219
      %v1516 = vsel %vm424, %v1157, %v1221
      %v1517 = vsel %vm424, %v1159, %v1223
      %v1518 = vsel %vm424, %v1161, %v1225
      %v1519 = vsel %vm424, %v1163, %v1227
      %v1520 = vsel %vm424, %v1165, %v1229
      %v1521 = vsel %vm424, %v1167, %v1231
      %v1522 = vsel %vm424, %v1169, %v1233
      %v1523 = vsel %vm424, %v1171, %v1235
      %vm1524 = vcmask 195584
      %v1525 = vsel %vm1524, %v1508, %v1269
      %v1526 = vsel %vm1524, %v1509, %v1271
      %v1527 = vsel %vm1524, %v1510, %v1273
      %v1528 = vsel %vm1524, %v1511, %v1275
      %v1529 = vsel %vm1524, %v1512, %v1277
      %v1530 = vsel %vm1524, %v1513, %v1279
      %v1531 = vsel %vm1524, %v1514, %v1281
      %v1532 = vsel %vm1524, %v1515, %v1283
      %v1533 = vsel %vm1524, %v1516, %v1285
      %v1534 = vsel %vm1524, %v1517, %v1287
      %v1535 = vsel %vm1524, %v1518, %v1289
      %v1536 = vsel %vm1524, %v1519, %v1291
      %v1537 = vsel %vm1524, %v1520, %v1293
      %v1538 = vsel %vm1524, %v1521, %v1295
      %v1539 = vsel %vm1524, %v1522, %v1297
      %v1540 = vsel %vm1524, %v1523, %v1299
      %vm1541 = vcmask 261120
      %v1542 = vsel %vm1541, %v1525, %v1333
      %v1543 = vsel %vm1541, %v1526, %v1335
      %v1544 = vsel %vm1541, %v1527, %v1337
      %v1545 = vsel %vm1541, %v1528, %v1339
      %v1546 = vsel %vm1541, %v1529, %v1341
      %v1547 = vsel %vm1541, %v1530, %v1343
      %v1548 = vsel %vm1541, %v1531, %v1345
      %v1549 = vsel %vm1541, %v1532, %v1347
      %v1550 = vsel %vm1541, %v1533, %v1349
      %v1551 = vsel %vm1541, %v1534, %v1351
      %v1552 = vsel %vm1541, %v1535, %v1353
      %v1553 = vsel %vm1541, %v1536, %v1355
      %v1554 = vsel %vm1541, %v1537, %v1357
      %v1555 = vsel %vm1541, %v1538, %v1359
      %v1556 = vsel %vm1541, %v1539, %v1361
      %v1557 = vsel %vm1541, %v1540, %v1363
      %vm1558 = vcmask 392192
      %v1559 = vsel %vm1558, %v1542, %v1397
      %v1560 = vsel %vm1558, %v1543, %v1399
      %v1561 = vsel %vm1558, %v1544, %v1401
      %v1562 = vsel %vm1558, %v1545, %v1403
      %v1563 = vsel %vm1558, %v1546, %v1405
      %v1564 = vsel %vm1558, %v1547, %v1407
      %v1565 = vsel %vm1558, %v1548, %v1409
      %v1566 = vsel %vm1558, %v1549, %v1411
      %v1567 = vsel %vm1558, %v1550, %v1413
      %v1568 = vsel %vm1558, %v1551, %v1415
      %v1569 = vsel %vm1558, %v1552, %v1417
      %v1570 = vsel %vm1558, %v1553, %v1419
      %v1571 = vsel %vm1558, %v1554, %v1421
      %v1572 = vsel %vm1558, %v1555, %v1423
      %v1573 = vsel %vm1558, %v1556, %v1425
      %v1574 = vsel %vm1558, %v1557, %v1427
      %vm1575 = vcmask 457728
      %v1576 = vsel %vm1575, %v1559, %v1461
      %v1577 = vsel %vm1575, %v1560, %v1463
      %v1578 = vsel %vm1575, %v1561, %v1465
      %v1579 = vsel %vm1575, %v1562, %v1467
      %v1580 = vsel %vm1575, %v1563, %v1469
      %v1581 = vsel %vm1575, %v1564, %v1471
      %v1582 = vsel %vm1575, %v1565, %v1473
      %v1583 = vsel %vm1575, %v1566, %v1475
      %v1584 = vsel %vm1575, %v1567, %v1477
      %v1585 = vsel %vm1575, %v1568, %v1479
      %v1586 = vsel %vm1575, %v1569, %v1481
      %v1587 = vsel %vm1575, %v1570, %v1483
      %v1588 = vsel %vm1575, %v1571, %v1485
      %v1589 = vsel %vm1575, %v1572, %v1487
      %v1590 = vsel %vm1575, %v1573, %v1489
      %v1591 = vsel %vm1575, %v1574, %v1491
      %1608 = vrot.lane.b32.xlu0 %v1011, 16
      %v1609 = vpop.permute.xlu0 %1608
      %1610 = vrot.lane.b32.xlu0 %v1012, 16
      %v1611 = vpop.permute.xlu0 %1610
      %1612 = vrot.lane.b32.xlu0 %v1013, 16
      %v1613 = vpop.permute.xlu0 %1612
      %1614 = vrot.lane.b32.xlu0 %v1014, 16
      %v1615 = vpop.permute.xlu0 %1614
      %1616 = vrot.lane.b32.xlu0 %v1015, 16
      %v1617 = vpop.permute.xlu0 %1616
      %1618 = vrot.lane.b32.xlu0 %v1016, 16
      %v1619 = vpop.permute.xlu0 %1618
      %1620 = vrot.lane.b32.xlu0 %v1017, 16
      %v1621 = vpop.permute.xlu0 %1620
      %1622 = vrot.lane.b32.xlu0 %v1018, 16
      %v1623 = vpop.permute.xlu0 %1622
      %1624 = vrot.lane.b32.xlu0 %v1019, 16
      %v1625 = vpop.permute.xlu0 %1624
      %1626 = vrot.lane.b32.xlu0 %v1020, 16
      %v1627 = vpop.permute.xlu0 %1626
      %1628 = vrot.lane.b32.xlu0 %v1021, 16
      %v1629 = vpop.permute.xlu0 %1628
      %1630 = vrot.lane.b32.xlu0 %v1022, 16
      %v1631 = vpop.permute.xlu0 %1630
      %1632 = vrot.lane.b32.xlu0 %v1023, 16
      %v1633 = vpop.permute.xlu0 %1632
      %1634 = vrot.lane.b32.xlu0 %v1024, 16
      %v1635 = vpop.permute.xlu0 %1634
      %1636 = vrot.lane.b32.xlu0 %v1025, 16
      %v1637 = vpop.permute.xlu0 %1636
      %1638 = vrot.lane.b32.xlu0 %v1026, 16
      %v1639 = vpop.permute.xlu0 %1638
      %1656 = vrot.lane.b32.xlu0 %v1043, 24
      %v1657 = vpop.permute.xlu0 %1656
      %1658 = vrot.lane.b32.xlu0 %v1044, 24
      %v1659 = vpop.permute.xlu0 %1658
      %1660 = vrot.lane.b32.xlu0 %v1045, 24
      %v1661 = vpop.permute.xlu0 %1660
      %1662 = vrot.lane.b32.xlu0 %v1046, 24
      %v1663 = vpop.permute.xlu0 %1662
      %1664 = vrot.lane.b32.xlu0 %v1047, 24
      %v1665 = vpop.permute.xlu0 %1664
      %1666 = vrot.lane.b32.xlu0 %v1048, 24
      %v1667 = vpop.permute.xlu0 %1666
      %1668 = vrot.lane.b32.xlu0 %v1049, 24
      %v1669 = vpop.permute.xlu0 %1668
      %1670 = vrot.lane.b32.xlu0 %v1050, 24
      %v1671 = vpop.permute.xlu0 %1670
      %1672 = vrot.lane.b32.xlu0 %v1051, 24
      %v1673 = vpop.permute.xlu0 %1672
      %1674 = vrot.lane.b32.xlu0 %v1052, 24
      %v1675 = vpop.permute.xlu0 %1674
      %1676 = vrot.lane.b32.xlu0 %v1053, 24
      %v1677 = vpop.permute.xlu0 %1676
      %1678 = vrot.lane.b32.xlu0 %v1054, 24
      %v1679 = vpop.permute.xlu0 %1678
      %1680 = vrot.lane.b32.xlu0 %v1055, 24
      %v1681 = vpop.permute.xlu0 %1680
      %1682 = vrot.lane.b32.xlu0 %v1056, 24
      %v1683 = vpop.permute.xlu0 %1682
      %1684 = vrot.lane.b32.xlu0 %v1057, 24
      %v1685 = vpop.permute.xlu0 %1684
      %1686 = vrot.lane.b32.xlu0 %v1058, 24
      %v1687 = vpop.permute.xlu0 %1686
      %1720 = vrot.lane.b32.xlu0 %v1059, 40
      %v1721 = vpop.permute.xlu0 %1720
      %1722 = vrot.lane.b32.xlu0 %v1060, 40
      %v1723 = vpop.permute.xlu0 %1722
      %1724 = vrot.lane.b32.xlu0 %v1061, 40
      %v1725 = vpop.permute.xlu0 %1724
      %1726 = vrot.lane.b32.xlu0 %v1062, 40
      %v1727 = vpop.permute.xlu0 %1726
      %1728 = vrot.lane.b32.xlu0 %v1063, 40
      %v1729 = vpop.permute.xlu0 %1728
      %1730 = vrot.lane.b32.xlu0 %v1064, 40
      %v1731 = vpop.permute.xlu0 %1730
      %1732 = vrot.lane.b32.xlu0 %v1065, 40
      %v1733 = vpop.permute.xlu0 %1732
      %1734 = vrot.lane.b32.xlu0 %v1066, 40
      %v1735 = vpop.permute.xlu0 %1734
      %1736 = vrot.lane.b32.xlu0 %v1067, 40
      %v1737 = vpop.permute.xlu0 %1736
      %1738 = vrot.lane.b32.xlu0 %v1068, 40
      %v1739 = vpop.permute.xlu0 %1738
      %1740 = vrot.lane.b32.xlu0 %v1069, 40
      %v1741 = vpop.permute.xlu0 %1740
      %1742 = vrot.lane.b32.xlu0 %v1070, 40
      %v1743 = vpop.permute.xlu0 %1742
      %1744 = vrot.lane.b32.xlu0 %v1071, 40
      %v1745 = vpop.permute.xlu0 %1744
      %1746 = vrot.lane.b32.xlu0 %v1072, 40
      %v1747 = vpop.permute.xlu0 %1746
      %1748 = vrot.lane.b32.xlu0 %v1073, 40
      %v1749 = vpop.permute.xlu0 %1748
      %1750 = vrot.lane.b32.xlu0 %v1074, 40
      %v1751 = vpop.permute.xlu0 %1750
      %1768 = vrot.lane.b32.xlu0 %v1092, 48
      %v1769 = vpop.permute.xlu0 %1768
      %1770 = vrot.lane.b32.xlu0 %v1093, 48
      %v1771 = vpop.permute.xlu0 %1770
      %1772 = vrot.lane.b32.xlu0 %v1094, 48
      %v1773 = vpop.permute.xlu0 %1772
      %1774 = vrot.lane.b32.xlu0 %v1095, 48
      %v1775 = vpop.permute.xlu0 %1774
      %1776 = vrot.lane.b32.xlu0 %v1096, 48
      %v1777 = vpop.permute.xlu0 %1776
      %1778 = vrot.lane.b32.xlu0 %v1097, 48
      %v1779 = vpop.permute.xlu0 %1778
      %1780 = vrot.lane.b32.xlu0 %v1098, 48
      %v1781 = vpop.permute.xlu0 %1780
      %1782 = vrot.lane.b32.xlu0 %v1099, 48
      %v1783 = vpop.permute.xlu0 %1782
      %1784 = vrot.lane.b32.xlu0 %v1100, 48
      %v1785 = vpop.permute.xlu0 %1784
      %1786 = vrot.lane.b32.xlu0 %v1101, 48
      %v1787 = vpop.permute.xlu0 %1786
      %1788 = vrot.lane.b32.xlu0 %v1102, 48
      %v1789 = vpop.permute.xlu0 %1788
      %1790 = vrot.lane.b32.xlu0 %v1103, 48
      %v1791 = vpop.permute.xlu0 %1790
      %1792 = vrot.lane.b32.xlu0 %v1104, 48
      %v1793 = vpop.permute.xlu0 %1792
      %1794 = vrot.lane.b32.xlu0 %v1105, 48
      %v1795 = vpop.permute.xlu0 %1794
      %1796 = vrot.lane.b32.xlu0 %v1106, 48
      %v1797 = vpop.permute.xlu0 %1796
      %1798 = vrot.lane.b32.xlu0 %v1107, 48
      %v1799 = vpop.permute.xlu0 %1798
      %1832 = vrot.lane.b32.xlu0 %v1108, 64
      %v1833 = vpop.permute.xlu0 %1832
      %1834 = vrot.lane.b32.xlu0 %v1109, 64
      %v1835 = vpop.permute.xlu0 %1834
      %1836 = vrot.lane.b32.xlu0 %v1110, 64
      %v1837 = vpop.permute.xlu0 %1836
      %1838 = vrot.lane.b32.xlu0 %v1111, 64
      %v1839 = vpop.permute.xlu0 %1838
      %1840 = vrot.lane.b32.xlu0 %v1112, 64
      %v1841 = vpop.permute.xlu0 %1840
      %1842 = vrot.lane.b32.xlu0 %v1113, 64
      %v1843 = vpop.permute.xlu0 %1842
      %1844 = vrot.lane.b32.xlu0 %v1114, 64
      %v1845 = vpop.permute.xlu0 %1844
      %1846 = vrot.lane.b32.xlu0 %v1115, 64
      %v1847 = vpop.permute.xlu0 %1846
      %1848 = vrot.lane.b32.xlu0 %v1116, 64
      %v1849 = vpop.permute.xlu0 %1848
      %1850 = vrot.lane.b32.xlu0 %v1117, 64
      %v1851 = vpop.permute.xlu0 %1850
      %1852 = vrot.lane.b32.xlu0 %v1118, 64
      %v1853 = vpop.permute.xlu0 %1852
      %1854 = vrot.lane.b32.xlu0 %v1119, 64
      %v1855 = vpop.permute.xlu0 %1854
      %1856 = vrot.lane.b32.xlu0 %v1120, 64
      %v1857 = vpop.permute.xlu0 %1856
      %1858 = vrot.lane.b32.xlu0 %v1121, 64
      %v1859 = vpop.permute.xlu0 %1858
      %1860 = vrot.lane.b32.xlu0 %v1122, 64
      %v1861 = vpop.permute.xlu0 %1860
      %1862 = vrot.lane.b32.xlu0 %v1123, 64
      %v1863 = vpop.permute.xlu0 %1862
      %v1880 = vsel %vm380, %v995, %v1609
      %v1881 = vsel %vm380, %v996, %v1611
      %v1882 = vsel %vm380, %v997, %v1613
      %v1883 = vsel %vm380, %v998, %v1615
      %v1884 = vsel %vm380, %v999, %v1617
      %v1885 = vsel %vm380, %v1000, %v1619
      %v1886 = vsel %vm380, %v1001, %v1621
      %v1887 = vsel %vm380, %v1002, %v1623
      %v1888 = vsel %vm380, %v1003, %v1625
      %v1889 = vsel %vm380, %v1004, %v1627
      %v1890 = vsel %vm380, %v1005, %v1629
      %v1891 = vsel %vm380, %v1006, %v1631
      %v1892 = vsel %vm380, %v1007, %v1633
      %v1893 = vsel %vm380, %v1008, %v1635
      %v1894 = vsel %vm380, %v1009, %v1637
      %v1895 = vsel %vm380, %v1010, %v1639
      %v1896 = vsel %vm1524, %v1880, %v1657
      %v1897 = vsel %vm1524, %v1881, %v1659
      %v1898 = vsel %vm1524, %v1882, %v1661
      %v1899 = vsel %vm1524, %v1883, %v1663
      %v1900 = vsel %vm1524, %v1884, %v1665
      %v1901 = vsel %vm1524, %v1885, %v1667
      %v1902 = vsel %vm1524, %v1886, %v1669
      %v1903 = vsel %vm1524, %v1887, %v1671
      %v1904 = vsel %vm1524, %v1888, %v1673
      %v1905 = vsel %vm1524, %v1889, %v1675
      %v1906 = vsel %vm1524, %v1890, %v1677
      %v1907 = vsel %vm1524, %v1891, %v1679
      %v1908 = vsel %vm1524, %v1892, %v1681
      %v1909 = vsel %vm1524, %v1893, %v1683
      %v1910 = vsel %vm1524, %v1894, %v1685
      %v1911 = vsel %vm1524, %v1895, %v1687
      %vm1912 = vcmask 326656
      %v1913 = vsel %vm1912, %v1896, %v1721
      %v1914 = vsel %vm1912, %v1897, %v1723
      %v1915 = vsel %vm1912, %v1898, %v1725
      %v1916 = vsel %vm1912, %v1899, %v1727
      %v1917 = vsel %vm1912, %v1900, %v1729
      %v1918 = vsel %vm1912, %v1901, %v1731
      %v1919 = vsel %vm1912, %v1902, %v1733
      %v1920 = vsel %vm1912, %v1903, %v1735
      %v1921 = vsel %vm1912, %v1904, %v1737
      %v1922 = vsel %vm1912, %v1905, %v1739
      %v1923 = vsel %vm1912, %v1906, %v1741
      %v1924 = vsel %vm1912, %v1907, %v1743
      %v1925 = vsel %vm1912, %v1908, %v1745
      %v1926 = vsel %vm1912, %v1909, %v1747
      %v1927 = vsel %vm1912, %v1910, %v1749
      %v1928 = vsel %vm1912, %v1911, %v1751
      %v1929 = vsel %vm1558, %v1913, %v1769
      %v1930 = vsel %vm1558, %v1914, %v1771
      %v1931 = vsel %vm1558, %v1915, %v1773
      %v1932 = vsel %vm1558, %v1916, %v1775
      %v1933 = vsel %vm1558, %v1917, %v1777
      %v1934 = vsel %vm1558, %v1918, %v1779
      %v1935 = vsel %vm1558, %v1919, %v1781
      %v1936 = vsel %vm1558, %v1920, %v1783
      %v1937 = vsel %vm1558, %v1921, %v1785
      %v1938 = vsel %vm1558, %v1922, %v1787
      %v1939 = vsel %vm1558, %v1923, %v1789
      %v1940 = vsel %vm1558, %v1924, %v1791
      %v1941 = vsel %vm1558, %v1925, %v1793
      %v1942 = vsel %vm1558, %v1926, %v1795
      %v1943 = vsel %vm1558, %v1927, %v1797
      %v1944 = vsel %vm1558, %v1928, %v1799
      %vm1945 = vcmask 523264
      %v1946 = vsel %vm1945, %v1929, %v1833
      %v1947 = vsel %vm1945, %v1930, %v1835
      %v1948 = vsel %vm1945, %v1931, %v1837
      %v1949 = vsel %vm1945, %v1932, %v1839
      %v1950 = vsel %vm1945, %v1933, %v1841
      %v1951 = vsel %vm1945, %v1934, %v1843
      %v1952 = vsel %vm1945, %v1935, %v1845
      %v1953 = vsel %vm1945, %v1936, %v1847
      %v1954 = vsel %vm1945, %v1937, %v1849
      %v1955 = vsel %vm1945, %v1938, %v1851
      %v1956 = vsel %vm1945, %v1939, %v1853
      %v1957 = vsel %vm1945, %v1940, %v1855
      %v1958 = vsel %vm1945, %v1941, %v1857
      %v1959 = vsel %vm1945, %v1942, %v1859
      %v1960 = vsel %vm1945, %v1943, %v1861
      %v1961 = vsel %vm1945, %v1944, %v1863
      %v1962 = vld [vmem:[%s4] sm:$0xff]
      %v1963 = vld [vmem:[%s4 + $0x8] sm:$0xff]
      %v1964 = vld [vmem:[%s4 + $0x10] sm:$0xff]
      %v1965 = vld [vmem:[%s4 + $0x18] sm:$0xff]
      %v1966 = vld [vmem:[%s4 + $0x20] sm:$0xff]
      %v1967 = vld [vmem:[%s4 + $0x28] sm:$0xff]
      %v1968 = vld [vmem:[%s4 + $0x30] sm:$0xff]
      %v1969 = vld [vmem:[%s4 + $0x38] sm:$0xff]
      %v1970 = vld [vmem:[%s4 + $0x40] sm:$0xff]
      %v1971 = vld [vmem:[%s5] sm:$0x1]
      %v1973 = vlaneseq
      %v1974 = vshrl.u32 %v1973, 7
      %v1975 = vsub.s32 0, %v1974
      %v1976 = vrot.slane %v1971, %v1975
      %vm1978 = vcmask 588800
      %v1980 = vsel %vm1978, %v1576, 0
      %v1983 = vsel %vm1978, %v1577, 0
      %v1986 = vsel %vm1978, %v1578, 0
      %v1989 = vsel %vm1978, %v1579, 0
      %v1992 = vsel %vm1978, %v1580, 0
      %v1995 = vsel %vm1978, %v1581, 0
      %v1998 = vsel %vm1978, %v1582, 0
      %v2001 = vsel %vm1978, %v1583, 0
      %v2004 = vsel %vm1978, %v1584, 0
      %v2007 = vsel %vm1978, %v1585, 0
      %v2010 = vsel %vm1978, %v1586, 0
      %v2013 = vsel %vm1978, %v1587, 0
      %v2016 = vsel %vm1978, %v1588, 0
      %v2019 = vsel %vm1978, %v1589, 0
      %v2022 = vsel %vm1978, %v1590, 0
      %v2025 = vsel %vm1978, %v1591, 0
      %v2028 = vsel %vm1978, %v1946, 0
      %v2031 = vsel %vm1978, %v1947, 0
      %v2034 = vsel %vm1978, %v1948, 0
      %v2037 = vsel %vm1978, %v1949, 0
      %v2040 = vsel %vm1978, %v1950, 0
      %v2043 = vsel %vm1978, %v1951, 0
      %v2046 = vsel %vm1978, %v1952, 0
      %v2049 = vsel %vm1978, %v1953, 0
      %v2052 = vsel %vm1978, %v1954, 0
      %v2055 = vsel %vm1978, %v1955, 0
      %v2058 = vsel %vm1978, %v1956, 0
      %v2061 = vsel %vm1978, %v1957, 0
      %v2064 = vsel %vm1978, %v1958, 0
      %v2067 = vsel %vm1978, %v1959, 0
      %v2070 = vsel %vm1978, %v1960, 0
      %v2073 = vsel %vm1978, %v1961, 0
      %2075 = vmatprep.subr.mxu0 0.0
      %2076 = vmatpush1.msra.mxu0 0.0
      %2077 = vmatprep.subr.mxu0 0.0
      %2078 = vmatpush1.msra.mxu0 0.0
      %2079 = vmatprep.subr.mxu0 0.0
      %2080 = vmatpush1.msra.mxu0 0.0
      %2081 = vmatprep.subr.mxu0 0.0
      %2082 = vmatpush1.msra.mxu0 0.0
      %2083 = vmatprep.subr.mxu0 0.0
      %2084 = vmatpush1.msra.mxu0 0.0
      %2085 = vmatprep.subr.mxu0 0.0
      %2086 = vmatpush1.msra.mxu0 0.0
      %2087 = vmatprep.subr.mxu0 0.0
      %2088 = vmatpush1.msra.mxu0 0.0
      %2089 = vmatprep.subr.mxu0 0.0
      %2090 = vmatpush1.msra.mxu0 %v1970
      %2091 = vmatprep.subr.mxu0 0.0
      %2092 = vmatpush1.msra.mxu0 %v1969
      %2093 = vmatprep.subr.mxu0 0.0
      %2094 = vmatpush1.msra.mxu0 %v1968
      %2095 = vmatprep.subr.mxu0 0.0
      %2096 = vmatpush1.msra.mxu0 %v1967
      %2097 = vmatprep.subr.mxu0 0.0
      %2098 = vmatpush1.msra.mxu0 %v1966
      %2099 = vmatprep.subr.mxu0 0.0
      %2100 = vmatpush1.msra.mxu0 %v1965
      %2101 = vmatprep.subr.mxu0 0.0
      %2102 = vmatpush1.msra.mxu0 %v1964
      %2103 = vmatprep.subr.mxu0 0.0
      %2104 = vmatpush1.msra.mxu0 %v1963
      %2105 = vmatprep.subr.mxu0 0.0
      %2106 = vmatpush1.msra.mxu0 %v1962
      %2107 = vmatprep.subr.mxu0 0.0
      %2108 = vmatpush2.msra.mxu0 0.0
      %2109 = vmatprep.subr.mxu0 0.0
      %2110 = vmatpush2.msra.mxu0 0.0
      %2111 = vmatprep.subr.mxu0 0.0
      %2112 = vmatpush2.msra.mxu0 0.0
      %2113 = vmatprep.subr.mxu0 0.0
      %2114 = vmatpush2.msra.mxu0 0.0
      %2115 = vmatprep.subr.mxu0 0.0
      %2116 = vmatpush2.msra.mxu0 0.0
      %2117 = vmatprep.subr.mxu0 0.0
      %2118 = vmatpush2.msra.mxu0 0.0
      %2119 = vmatprep.subr.mxu0 0.0
      %2120 = vmatpush2.msra.mxu0 0.0
      %2121 = vmatprep.subr.mxu0 0.0
      %2122 = vmatpush2.msra.mxu0 0.0
      %2123 = vmatprep.subr.mxu0 0.0
      %2124 = vmatpush2.msra.mxu0 0.0
      %2125 = vmatprep.subr.mxu0 0.0
      %2126 = vmatpush2.msra.mxu0 0.0
      %2127 = vmatprep.subr.mxu0 0.0
      %2128 = vmatpush2.msra.mxu0 0.0
      %2129 = vmatprep.subr.mxu0 0.0
      %2130 = vmatpush2.msra.mxu0 0.0
      %2131 = vmatprep.subr.mxu0 0.0
      %2132 = vmatpush2.msra.mxu0 0.0
      %2133 = vmatprep.subr.mxu0 0.0
      %2134 = vmatpush2.msra.mxu0 0.0
      %2135 = vmatprep.subr.mxu0 0.0
      %2136 = vmatpush2.msra.mxu0 0.0
      %2137 = vmatprep.subr.mxu0 0.0
      %2138 = vmatpush2.msra.mxu0 0.0
      %2139 = vmatprep.mubr.f32.mxu0 0.0
      %2140 = vmatmul.mubr.f32.gmra.mxu0 %v1980
      %v2141 = vpop.f32.mrf.mxu0
      %v2142 = vadd.f32 %v1976, %v2141
      %v2143 = vpop.f32.mrf.mxu0
      %2144 = vmatprep.mubr.f32.mxu0 0.0
      %2145 = vmatmul.mubr.f32.gmra.mxu0 %v1983
      %v2146 = vpop.f32.mrf.mxu0
      %v2147 = vadd.f32 %v1976, %v2146
      %v2148 = vpop.f32.mrf.mxu0
      %2149 = vmatprep.mubr.f32.mxu0 0.0
      %2150 = vmatmul.mubr.f32.gmra.mxu0 %v1986
      %v2151 = vpop.f32.mrf.mxu0
      %v2152 = vadd.f32 %v1976, %v2151
      %v2153 = vpop.f32.mrf.mxu0
      %2154 = vmatprep.mubr.f32.mxu0 0.0
      %2155 = vmatmul.mubr.f32.gmra.mxu0 %v1989
      %v2156 = vpop.f32.mrf.mxu0
      %v2157 = vadd.f32 %v1976, %v2156
      %v2158 = vpop.f32.mrf.mxu0
      %2159 = vmatprep.mubr.f32.mxu0 0.0
      %2160 = vmatmul.mubr.f32.gmra.mxu0 %v1992
      %v2161 = vpop.f32.mrf.mxu0
      %v2162 = vadd.f32 %v1976, %v2161
      %v2163 = vpop.f32.mrf.mxu0
      %2164 = vmatprep.mubr.f32.mxu0 0.0
      %2165 = vmatmul.mubr.f32.gmra.mxu0 %v1995
      %v2166 = vpop.f32.mrf.mxu0
      %v2167 = vadd.f32 %v1976, %v2166
      %v2168 = vpop.f32.mrf.mxu0
      %2169 = vmatprep.mubr.f32.mxu0 0.0
      %2170 = vmatmul.mubr.f32.gmra.mxu0 %v1998
      %v2171 = vpop.f32.mrf.mxu0
      %v2172 = vadd.f32 %v1976, %v2171
      %v2173 = vpop.f32.mrf.mxu0
      %2174 = vmatprep.mubr.f32.mxu0 0.0
      %2175 = vmatmul.mubr.f32.gmra.mxu0 %v2001
      %v2176 = vpop.f32.mrf.mxu0
      %v2177 = vadd.f32 %v1976, %v2176
      %v2178 = vpop.f32.mrf.mxu0
      %2179 = vmatprep.mubr.f32.mxu0 0.0
      %2180 = vmatmul.mubr.f32.gmra.mxu0 %v2004
      %v2181 = vpop.f32.mrf.mxu0
      %v2182 = vadd.f32 %v1976, %v2181
      %v2183 = vpop.f32.mrf.mxu0
      %2184 = vmatprep.mubr.f32.mxu0 0.0
      %2185 = vmatmul.mubr.f32.gmra.mxu0 %v2007
      %v2186 = vpop.f32.mrf.mxu0
      %v2187 = vadd.f32 %v1976, %v2186
      %v2188 = vpop.f32.mrf.mxu0
      %2189 = vmatprep.mubr.f32.mxu0 0.0
      %2190 = vmatmul.mubr.f32.gmra.mxu0 %v2010
      %v2191 = vpop.f32.mrf.mxu0
      %v2192 = vadd.f32 %v1976, %v2191
      %v2193 = vpop.f32.mrf.mxu0
      %2194 = vmatprep.mubr.f32.mxu0 0.0
      %2195 = vmatmul.mubr.f32.gmra.mxu0 %v2013
      %v2196 = vpop.f32.mrf.mxu0
      %v2197 = vadd.f32 %v1976, %v2196
      %v2198 = vpop.f32.mrf.mxu0
      %2199 = vmatprep.mubr.f32.mxu0 0.0
      %2200 = vmatmul.mubr.f32.gmra.mxu0 %v2016
      %v2201 = vpop.f32.mrf.mxu0
      %v2202 = vadd.f32 %v1976, %v2201
      %v2203 = vpop.f32.mrf.mxu0
      %2204 = vmatprep.mubr.f32.mxu0 0.0
      %2205 = vmatmul.mubr.f32.gmra.mxu0 %v2019
      %v2206 = vpop.f32.mrf.mxu0
      %v2207 = vadd.f32 %v1976, %v2206
      %v2208 = vpop.f32.mrf.mxu0
      %2209 = vmatprep.mubr.f32.mxu0 0.0
      %2210 = vmatmul.mubr.f32.gmra.mxu0 %v2022
      %v2211 = vpop.f32.mrf.mxu0
      %v2212 = vadd.f32 %v1976, %v2211
      %v2213 = vpop.f32.mrf.mxu0
      %2214 = vmatprep.mubr.f32.mxu0 0.0
      %2215 = vmatmul.mubr.f32.gmra.mxu0 %v2025
      %v2216 = vpop.f32.mrf.mxu0
      %v2217 = vadd.f32 %v1976, %v2216
      %v2218 = vpop.f32.mrf.mxu0
      %2219 = vmatprep.mubr.f32.mxu0 0.0
      %2220 = vmatmul.mubr.f32.gmra.mxu0 %v2028
      %v2221 = vpop.f32.mrf.mxu0
      %v2222 = vadd.f32 %v1976, %v2221
      %v2223 = vpop.f32.mrf.mxu0
      %2224 = vmatprep.mubr.f32.mxu0 0.0
      %2225 = vmatmul.mubr.f32.gmra.mxu0 %v2031
      %v2226 = vpop.f32.mrf.mxu0
      %v2227 = vadd.f32 %v1976, %v2226
      %v2228 = vpop.f32.mrf.mxu0
      %2229 = vmatprep.mubr.f32.mxu0 0.0
      %2230 = vmatmul.mubr.f32.gmra.mxu0 %v2034
      %v2231 = vpop.f32.mrf.mxu0
      %v2232 = vadd.f32 %v1976, %v2231
      %v2233 = vpop.f32.mrf.mxu0
      %2234 = vmatprep.mubr.f32.mxu0 0.0
      %2235 = vmatmul.mubr.f32.gmra.mxu0 %v2037
      %v2236 = vpop.f32.mrf.mxu0
      %v2237 = vadd.f32 %v1976, %v2236
      %v2238 = vpop.f32.mrf.mxu0
      %2239 = vmatprep.mubr.f32.mxu0 0.0
      %2240 = vmatmul.mubr.f32.gmra.mxu0 %v2040
      %v2241 = vpop.f32.mrf.mxu0
      %v2242 = vadd.f32 %v1976, %v2241
      %v2243 = vpop.f32.mrf.mxu0
      %2244 = vmatprep.mubr.f32.mxu0 0.0
      %2245 = vmatmul.mubr.f32.gmra.mxu0 %v2043
      %v2246 = vpop.f32.mrf.mxu0
      %v2247 = vadd.f32 %v1976, %v2246
      %v2248 = vpop.f32.mrf.mxu0
      %2249 = vmatprep.mubr.f32.mxu0 0.0
      %2250 = vmatmul.mubr.f32.gmra.mxu0 %v2046
      %v2251 = vpop.f32.mrf.mxu0
      %v2252 = vadd.f32 %v1976, %v2251
      %v2253 = vpop.f32.mrf.mxu0
      %2254 = vmatprep.mubr.f32.mxu0 0.0
      %2255 = vmatmul.mubr.f32.gmra.mxu0 %v2049
      %v2256 = vpop.f32.mrf.mxu0
      %v2257 = vadd.f32 %v1976, %v2256
      %v2258 = vpop.f32.mrf.mxu0
      %2259 = vmatprep.mubr.f32.mxu0 0.0
      %2260 = vmatmul.mubr.f32.gmra.mxu0 %v2052
      %v2261 = vpop.f32.mrf.mxu0
      %v2262 = vadd.f32 %v1976, %v2261
      %v2263 = vpop.f32.mrf.mxu0
      %2264 = vmatprep.mubr.f32.mxu0 0.0
      %2265 = vmatmul.mubr.f32.gmra.mxu0 %v2055
      %v2266 = vpop.f32.mrf.mxu0
      %v2267 = vadd.f32 %v1976, %v2266
      %v2268 = vpop.f32.mrf.mxu0
      %2269 = vmatprep.mubr.f32.mxu0 0.0
      %2270 = vmatmul.mubr.f32.gmra.mxu0 %v2058
      %v2271 = vpop.f32.mrf.mxu0
      %v2272 = vadd.f32 %v1976, %v2271
      %v2273 = vpop.f32.mrf.mxu0
      %2274 = vmatprep.mubr.f32.mxu0 0.0
      %2275 = vmatmul.mubr.f32.gmra.mxu0 %v2061
      %v2276 = vpop.f32.mrf.mxu0
      %v2277 = vadd.f32 %v1976, %v2276
      %v2278 = vpop.f32.mrf.mxu0
      %2279 = vmatprep.mubr.f32.mxu0 0.0
      %2280 = vmatmul.mubr.f32.gmra.mxu0 %v2064
      %v2281 = vpop.f32.mrf.mxu0
      %v2282 = vadd.f32 %v1976, %v2281
      %v2283 = vpop.f32.mrf.mxu0
      %2284 = vmatprep.mubr.f32.mxu0 0.0
      %2285 = vmatmul.mubr.f32.gmra.mxu0 %v2067
      %v2286 = vpop.f32.mrf.mxu0
      %v2287 = vadd.f32 %v1976, %v2286
      %v2288 = vpop.f32.mrf.mxu0
      %2289 = vmatprep.mubr.f32.mxu0 0.0
      %2290 = vmatmul.mubr.f32.gmra.mxu0 %v2070
      %v2291 = vpop.f32.mrf.mxu0
      %v2292 = vadd.f32 %v1976, %v2291
      %v2293 = vpop.f32.mrf.mxu0
      %2294 = vmatprep.mubr.f32.mxu0 0.0
      %2295 = vmatmul.mubr.f32.gmra.mxu0 %v2073
      %v2296 = vpop.f32.mrf.mxu0
      %v2297 = vadd.f32 %v1976, %v2296
      %v2298 = vpop.f32.mrf.mxu0
      %2299 = vdwg.mxu0
      %vm2300 = vcmp.ge.f32.partialorder %v2142, 0.0
      %vm2301 = vcmp.ge.f32.partialorder %v2147, 0.0
      %vm2302 = vcmp.ge.f32.partialorder %v2152, 0.0
      %vm2303 = vcmp.ge.f32.partialorder %v2157, 0.0
      %vm2304 = vcmp.ge.f32.partialorder %v2162, 0.0
      %vm2305 = vcmp.ge.f32.partialorder %v2167, 0.0
      %vm2306 = vcmp.ge.f32.partialorder %v2172, 0.0
      %vm2307 = vcmp.ge.f32.partialorder %v2177, 0.0
      %vm2308 = vcmp.ge.f32.partialorder %v2182, 0.0
      %vm2309 = vcmp.ge.f32.partialorder %v2187, 0.0
      %vm2310 = vcmp.ge.f32.partialorder %v2192, 0.0
      %vm2311 = vcmp.ge.f32.partialorder %v2197, 0.0
      %vm2312 = vcmp.ge.f32.partialorder %v2202, 0.0
      %vm2313 = vcmp.ge.f32.partialorder %v2207, 0.0
      %vm2314 = vcmp.ge.f32.partialorder %v2212, 0.0
      %vm2315 = vcmp.ge.f32.partialorder %v2217, 0.0
      %vm2316 = vcmp.ge.f32.partialorder %v2222, 0.0
      %vm2317 = vcmp.ge.f32.partialorder %v2227, 0.0
      %vm2318 = vcmp.ge.f32.partialorder %v2232, 0.0
      %vm2319 = vcmp.ge.f32.partialorder %v2237, 0.0
      %vm2320 = vcmp.ge.f32.partialorder %v2242, 0.0
      %vm2321 = vcmp.ge.f32.partialorder %v2247, 0.0
      %vm2322 = vcmp.ge.f32.partialorder %v2252, 0.0
      %vm2323 = vcmp.ge.f32.partialorder %v2257, 0.0
      %vm2324 = vcmp.ge.f32.partialorder %v2262, 0.0
      %vm2325 = vcmp.ge.f32.partialorder %v2267, 0.0
      %vm2326 = vcmp.ge.f32.partialorder %v2272, 0.0
      %vm2327 = vcmp.ge.f32.partialorder %v2277, 0.0
      %vm2328 = vcmp.ge.f32.partialorder %v2282, 0.0
      %vm2329 = vcmp.ge.f32.partialorder %v2287, 0.0
      %vm2330 = vcmp.ge.f32.partialorder %v2292, 0.0
      %vm2331 = vcmp.ge.f32.partialorder %v2297, 0.0
      %v2332 = vmul.f32 %v2142, 0.2
      %v2333 = vmul.f32 %v2147, 0.2
      %v2334 = vmul.f32 %v2152, 0.2
      %v2335 = vmul.f32 %v2157, 0.2
      %v2336 = vmul.f32 %v2162, 0.2
      %v2337 = vmul.f32 %v2167, 0.2
      %v2338 = vmul.f32 %v2172, 0.2
      %v2339 = vmul.f32 %v2177, 0.2
      %v2340 = vmul.f32 %v2182, 0.2
      %v2341 = vmul.f32 %v2187, 0.2
      %v2342 = vmul.f32 %v2192, 0.2
      %v2343 = vmul.f32 %v2197, 0.2
      %v2344 = vmul.f32 %v2202, 0.2
      %v2345 = vmul.f32 %v2207, 0.2
      %v2346 = vmul.f32 %v2212, 0.2
      %v2347 = vmul.f32 %v2217, 0.2
      %v2348 = vmul.f32 %v2222, 0.2
      %v2349 = vmul.f32 %v2227, 0.2
      %v2350 = vmul.f32 %v2232, 0.2
      %v2351 = vmul.f32 %v2237, 0.2
      %v2352 = vmul.f32 %v2242, 0.2
      %v2353 = vmul.f32 %v2247, 0.2
      %v2354 = vmul.f32 %v2252, 0.2
      %v2355 = vmul.f32 %v2257, 0.2
      %v2356 = vmul.f32 %v2262, 0.2
      %v2357 = vmul.f32 %v2267, 0.2
      %v2358 = vmul.f32 %v2272, 0.2
      %v2359 = vmul.f32 %v2277, 0.2
      %v2360 = vmul.f32 %v2282, 0.2
      %v2361 = vmul.f32 %v2287, 0.2
      %v2362 = vmul.f32 %v2292, 0.2
      %v2363 = vmul.f32 %v2297, 0.2
      %v2364 = vsel %vm2300, %v2142, %v2332
      %v2365 = vsel %vm2301, %v2147, %v2333
      %v2366 = vsel %vm2302, %v2152, %v2334
      %v2367 = vsel %vm2303, %v2157, %v2335
      %v2368 = vsel %vm2304, %v2162, %v2336
      %v2369 = vsel %vm2305, %v2167, %v2337
      %v2370 = vsel %vm2306, %v2172, %v2338
      %v2371 = vsel %vm2307, %v2177, %v2339
      %v2372 = vsel %vm2308, %v2182, %v2340
      %v2373 = vsel %vm2309, %v2187, %v2341
      %v2374 = vsel %vm2310, %v2192, %v2342
      %v2375 = vsel %vm2311, %v2197, %v2343
      %v2376 = vsel %vm2312, %v2202, %v2344
      %v2377 = vsel %vm2313, %v2207, %v2345
      %v2378 = vsel %vm2314, %v2212, %v2346
      %v2379 = vsel %vm2315, %v2217, %v2347
      %v2380 = vsel %vm2316, %v2222, %v2348
      %v2381 = vsel %vm2317, %v2227, %v2349
      %v2382 = vsel %vm2318, %v2232, %v2350
      %v2383 = vsel %vm2319, %v2237, %v2351
      %v2384 = vsel %vm2320, %v2242, %v2352
      %v2385 = vsel %vm2321, %v2247, %v2353
      %v2386 = vsel %vm2322, %v2252, %v2354
      %v2387 = vsel %vm2323, %v2257, %v2355
      %v2388 = vsel %vm2324, %v2262, %v2356
      %v2389 = vsel %vm2325, %v2267, %v2357
      %v2390 = vsel %vm2326, %v2272, %v2358
      %v2391 = vsel %vm2327, %v2277, %v2359
      %v2392 = vsel %vm2328, %v2282, %v2360
      %v2393 = vsel %vm2329, %v2287, %v2361
      %v2394 = vsel %vm2330, %v2292, %v2362
      %v2395 = vsel %vm2331, %v2297, %v2363
      %2412 = vrot.lane.b32.xlu0 %v2380, 4
      %v2413 = vpop.permute.xlu0 %2412
      %2414 = vrot.lane.b32.xlu0 %v2381, 4
      %v2415 = vpop.permute.xlu0 %2414
      %2416 = vrot.lane.b32.xlu0 %v2382, 4
      %v2417 = vpop.permute.xlu0 %2416
      %2418 = vrot.lane.b32.xlu0 %v2383, 4
      %v2419 = vpop.permute.xlu0 %2418
      %2420 = vrot.lane.b32.xlu0 %v2384, 4
      %v2421 = vpop.permute.xlu0 %2420
      %2422 = vrot.lane.b32.xlu0 %v2385, 4
      %v2423 = vpop.permute.xlu0 %2422
      %2424 = vrot.lane.b32.xlu0 %v2386, 4
      %v2425 = vpop.permute.xlu0 %2424
      %2426 = vrot.lane.b32.xlu0 %v2387, 4
      %v2427 = vpop.permute.xlu0 %2426
      %2428 = vrot.lane.b32.xlu0 %v2388, 4
      %v2429 = vpop.permute.xlu0 %2428
      %2430 = vrot.lane.b32.xlu0 %v2389, 4
      %v2431 = vpop.permute.xlu0 %2430
      %2432 = vrot.lane.b32.xlu0 %v2390, 4
      %v2433 = vpop.permute.xlu0 %2432
      %2434 = vrot.lane.b32.xlu0 %v2391, 4
      %v2435 = vpop.permute.xlu0 %2434
      %2436 = vrot.lane.b32.xlu0 %v2392, 4
      %v2437 = vpop.permute.xlu0 %2436
      %2438 = vrot.lane.b32.xlu0 %v2393, 4
      %v2439 = vpop.permute.xlu0 %2438
      %2440 = vrot.lane.b32.xlu0 %v2394, 4
      %v2441 = vpop.permute.xlu0 %2440
      %2442 = vrot.lane.b32.xlu0 %v2395, 4
      %v2443 = vpop.permute.xlu0 %2442
      %v2460 = vsel %vm912, %v2364, %v2413
      %v2461 = vsel %vm912, %v2365, %v2415
      %v2462 = vsel %vm912, %v2366, %v2417
      %v2463 = vsel %vm912, %v2367, %v2419
      %v2464 = vsel %vm912, %v2368, %v2421
      %v2465 = vsel %vm912, %v2369, %v2423
      %v2466 = vsel %vm912, %v2370, %v2425
      %v2467 = vsel %vm912, %v2371, %v2427
      %v2468 = vsel %vm912, %v2372, %v2429
      %v2469 = vsel %vm912, %v2373, %v2431
      %v2470 = vsel %vm912, %v2374, %v2433
      %v2471 = vsel %vm912, %v2375, %v2435
      %v2472 = vsel %vm912, %v2376, %v2437
      %v2473 = vsel %vm912, %v2377, %v2439
      %v2474 = vsel %vm912, %v2378, %v2441
      %v2475 = vsel %vm912, %v2379, %v2443
      %s2476 = scalar_lea.vmem [#allocation3], 16
      %2477 = vst.msk [vmem:[%s2476 + $0x1] sm:$0xff] %vm424, %v2460
      %2478 = vst.msk [vmem:[%s2476 + $0x11] sm:$0xff] %vm424, %v2461
      %2479 = vst.msk [vmem:[%s2476 + $0x21] sm:$0xff] %vm424, %v2462
      %2480 = vst.msk [vmem:[%s2476 + $0x31] sm:$0xff] %vm424, %v2463
      %2481 = vst.msk [vmem:[%s2476 + $0x41] sm:$0xff] %vm424, %v2464
      %2482 = vst.msk [vmem:[%s2476 + $0x51] sm:$0xff] %vm424, %v2465
      %2483 = vst.msk [vmem:[%s2476 + $0x61] sm:$0xff] %vm424, %v2466
      %2484 = vst.msk [vmem:[%s2476 + $0x71] sm:$0xff] %vm424, %v2467
      %2485 = vst.msk [vmem:[%s2476 + $0x81] sm:$0xff] %vm424, %v2468
      %2486 = vst.msk [vmem:[%s2476 + $0x91] sm:$0xff] %vm424, %v2469
      %2487 = vst.msk [vmem:[%s2476 + $0xa1] sm:$0xff] %vm424, %v2470
      %2488 = vst.msk [vmem:[%s2476 + $0xb1] sm:$0xff] %vm424, %v2471
      %2489 = vst.msk [vmem:[%s2476 + $0xc1] sm:$0xff] %vm424, %v2472
      %2490 = vst.msk [vmem:[%s2476 + $0xd1] sm:$0xff] %vm424, %v2473
      %2491 = vst.msk [vmem:[%s2476 + $0xe1] sm:$0xff] %vm424, %v2474
      %2492 = vst.msk [vmem:[%s2476 + $0xf1] sm:$0xff] %vm424, %v2475
      %v2493 = vld [vmem:[#allocation3] sm:$0xff]
      %v2494 = vld [vmem:[#allocation3 + $0x10] sm:$0xff]
      %v2495 = vld [vmem:[#allocation3 + $0x20] sm:$0xff]
      %v2496 = vld [vmem:[#allocation3 + $0x30] sm:$0xff]
      %v2497 = vld [vmem:[#allocation3 + $0x40] sm:$0xff]
      %v2498 = vld [vmem:[#allocation3 + $0x50] sm:$0xff]
      %v2499 = vld [vmem:[#allocation3 + $0x60] sm:$0xff]
      %v2500 = vld [vmem:[#allocation3 + $0x70] sm:$0xff]
      %v2501 = vld [vmem:[#allocation3 + $0x80] sm:$0xff]
      %v2502 = vld [vmem:[#allocation3 + $0x90] sm:$0xff]
      %v2503 = vld [vmem:[#allocation3 + $0xa0] sm:$0xff]
      %v2504 = vld [vmem:[#allocation3 + $0xb0] sm:$0xff]
      %v2505 = vld [vmem:[#allocation3 + $0xc0] sm:$0xff]
      %v2506 = vld [vmem:[#allocation3 + $0xd0] sm:$0xff]
      %v2507 = vld [vmem:[#allocation3 + $0xe0] sm:$0xff]
      %v2508 = vld [vmem:[#allocation3 + $0xf0] sm:$0xff]
      %v2509 = vld [vmem:[#allocation3 + $0x1] sm:$0xff]
      %v2510 = vld [vmem:[#allocation3 + $0x11] sm:$0xff]
      %v2511 = vld [vmem:[#allocation3 + $0x21] sm:$0xff]
      %v2512 = vld [vmem:[#allocation3 + $0x31] sm:$0xff]
      %v2513 = vld [vmem:[#allocation3 + $0x41] sm:$0xff]
      %v2514 = vld [vmem:[#allocation3 + $0x51] sm:$0xff]
      %v2515 = vld [vmem:[#allocation3 + $0x61] sm:$0xff]
      %v2516 = vld [vmem:[#allocation3 + $0x71] sm:$0xff]
      %v2517 = vld [vmem:[#allocation3 + $0x81] sm:$0xff]
      %v2518 = vld [vmem:[#allocation3 + $0x91] sm:$0xff]
      %v2519 = vld [vmem:[#allocation3 + $0xa1] sm:$0xff]
      %v2520 = vld [vmem:[#allocation3 + $0xb1] sm:$0xff]
      %v2521 = vld [vmem:[#allocation3 + $0xc1] sm:$0xff]
      %v2522 = vld [vmem:[#allocation3 + $0xd1] sm:$0xff]
      %v2523 = vld [vmem:[#allocation3 + $0xe1] sm:$0xff]
      %v2524 = vld [vmem:[#allocation3 + $0xf1] sm:$0xff]
      %v2525 = vld [vmem:[#allocation3 + $0x2] sm:$0xff]
      %v2526 = vld [vmem:[#allocation3 + $0x12] sm:$0xff]
      %v2527 = vld [vmem:[#allocation3 + $0x22] sm:$0xff]
      %v2528 = vld [vmem:[#allocation3 + $0x32] sm:$0xff]
      %v2529 = vld [vmem:[#allocation3 + $0x42] sm:$0xff]
      %v2530 = vld [vmem:[#allocation3 + $0x52] sm:$0xff]
      %v2531 = vld [vmem:[#allocation3 + $0x62] sm:$0xff]
      %v2532 = vld [vmem:[#allocation3 + $0x72] sm:$0xff]
      %v2533 = vld [vmem:[#allocation3 + $0x82] sm:$0xff]
      %v2534 = vld [vmem:[#allocation3 + $0x92] sm:$0xff]
      %v2535 = vld [vmem:[#allocation3 + $0xa2] sm:$0xff]
      %v2536 = vld [vmem:[#allocation3 + $0xb2] sm:$0xff]
      %v2537 = vld [vmem:[#allocation3 + $0xc2] sm:$0xff]
      %v2538 = vld [vmem:[#allocation3 + $0xd2] sm:$0xff]
      %v2539 = vld [vmem:[#allocation3 + $0xe2] sm:$0xff]
      %v2540 = vld [vmem:[#allocation3 + $0xf2] sm:$0xff]
      %v2541 = vld [vmem:[%s2476] sm:$0xff]
      %v2542 = vld [vmem:[%s2476 + $0x10] sm:$0xff]
      %v2543 = vld [vmem:[%s2476 + $0x20] sm:$0xff]
      %v2544 = vld [vmem:[%s2476 + $0x30] sm:$0xff]
      %v2545 = vld [vmem:[%s2476 + $0x40] sm:$0xff]
      %v2546 = vld [vmem:[%s2476 + $0x50] sm:$0xff]
      %v2547 = vld [vmem:[%s2476 + $0x60] sm:$0xff]
      %v2548 = vld [vmem:[%s2476 + $0x70] sm:$0xff]
      %v2549 = vld [vmem:[%s2476 + $0x80] sm:$0xff]
      %v2550 = vld [vmem:[%s2476 + $0x90] sm:$0xff]
      %v2551 = vld [vmem:[%s2476 + $0xa0] sm:$0xff]
      %v2552 = vld [vmem:[%s2476 + $0xb0] sm:$0xff]
      %v2553 = vld [vmem:[%s2476 + $0xc0] sm:$0xff]
      %v2554 = vld [vmem:[%s2476 + $0xd0] sm:$0xff]
      %v2555 = vld [vmem:[%s2476 + $0xe0] sm:$0xff]
      %v2556 = vld [vmem:[%s2476 + $0xf0] sm:$0xff]
      %v2557 = vld [vmem:[%s2476 + $0x1] sm:$0xff]
      %v2558 = vld [vmem:[%s2476 + $0x11] sm:$0xff]
      %v2559 = vld [vmem:[%s2476 + $0x21] sm:$0xff]
      %v2560 = vld [vmem:[%s2476 + $0x31] sm:$0xff]
      %v2561 = vld [vmem:[%s2476 + $0x41] sm:$0xff]
      %v2562 = vld [vmem:[%s2476 + $0x51] sm:$0xff]
      %v2563 = vld [vmem:[%s2476 + $0x61] sm:$0xff]
      %v2564 = vld [vmem:[%s2476 + $0x71] sm:$0xff]
      %v2565 = vld [vmem:[%s2476 + $0x81] sm:$0xff]
      %v2566 = vld [vmem:[%s2476 + $0x91] sm:$0xff]
      %v2567 = vld [vmem:[%s2476 + $0xa1] sm:$0xff]
      %v2568 = vld [vmem:[%s2476 + $0xb1] sm:$0xff]
      %v2569 = vld [vmem:[%s2476 + $0xc1] sm:$0xff]
      %v2570 = vld [vmem:[%s2476 + $0xd1] sm:$0xff]
      %v2571 = vld [vmem:[%s2476 + $0xe1] sm:$0xff]
      %v2572 = vld [vmem:[%s2476 + $0xf1] sm:$0xff]
      %v2573 = vld [vmem:[%s2476 + $0x2] sm:$0xff]
      %v2574 = vld [vmem:[%s2476 + $0x12] sm:$0xff]
      %v2575 = vld [vmem:[%s2476 + $0x22] sm:$0xff]
      %v2576 = vld [vmem:[%s2476 + $0x32] sm:$0xff]
      %v2577 = vld [vmem:[%s2476 + $0x42] sm:$0xff]
      %v2578 = vld [vmem:[%s2476 + $0x52] sm:$0xff]
      %v2579 = vld [vmem:[%s2476 + $0x62] sm:$0xff]
      %v2580 = vld [vmem:[%s2476 + $0x72] sm:$0xff]
      %v2581 = vld [vmem:[%s2476 + $0x82] sm:$0xff]
      %v2582 = vld [vmem:[%s2476 + $0x92] sm:$0xff]
      %v2583 = vld [vmem:[%s2476 + $0xa2] sm:$0xff]
      %v2584 = vld [vmem:[%s2476 + $0xb2] sm:$0xff]
      %v2585 = vld [vmem:[%s2476 + $0xc2] sm:$0xff]
      %v2586 = vld [vmem:[%s2476 + $0xd2] sm:$0xff]
      %v2587 = vld [vmem:[%s2476 + $0xe2] sm:$0xff]
      %v2588 = vld [vmem:[%s2476 + $0xf2] sm:$0xff]
      %s2589 = scalar_lea.vmem [#allocation3], 32
      %v2590 = vld [vmem:[%s2589] sm:$0xff]
      %v2591 = vld [vmem:[%s2589 + $0x10] sm:$0xff]
      %v2592 = vld [vmem:[%s2589 + $0x20] sm:$0xff]
      %v2593 = vld [vmem:[%s2589 + $0x30] sm:$0xff]
      %v2594 = vld [vmem:[%s2589 + $0x40] sm:$0xff]
      %v2595 = vld [vmem:[%s2589 + $0x50] sm:$0xff]
      %v2596 = vld [vmem:[%s2589 + $0x60] sm:$0xff]
      %v2597 = vld [vmem:[%s2589 + $0x70] sm:$0xff]
      %v2598 = vld [vmem:[%s2589 + $0x80] sm:$0xff]
      %v2599 = vld [vmem:[%s2589 + $0x90] sm:$0xff]
      %v2600 = vld [vmem:[%s2589 + $0xa0] sm:$0xff]
      %v2601 = vld [vmem:[%s2589 + $0xb0] sm:$0xff]
      %v2602 = vld [vmem:[%s2589 + $0xc0] sm:$0xff]
      %v2603 = vld [vmem:[%s2589 + $0xd0] sm:$0xff]
      %v2604 = vld [vmem:[%s2589 + $0xe0] sm:$0xff]
      %v2605 = vld [vmem:[%s2589 + $0xf0] sm:$0xff]
      %v2606 = vld [vmem:[%s2589 + $0x1] sm:$0xff]
      %v2607 = vld [vmem:[%s2589 + $0x11] sm:$0xff]
      %v2608 = vld [vmem:[%s2589 + $0x21] sm:$0xff]
      %v2609 = vld [vmem:[%s2589 + $0x31] sm:$0xff]
      %v2610 = vld [vmem:[%s2589 + $0x41] sm:$0xff]
      %v2611 = vld [vmem:[%s2589 + $0x51] sm:$0xff]
      %v2612 = vld [vmem:[%s2589 + $0x61] sm:$0xff]
      %v2613 = vld [vmem:[%s2589 + $0x71] sm:$0xff]
      %v2614 = vld [vmem:[%s2589 + $0x81] sm:$0xff]
      %v2615 = vld [vmem:[%s2589 + $0x91] sm:$0xff]
      %v2616 = vld [vmem:[%s2589 + $0xa1] sm:$0xff]
      %v2617 = vld [vmem:[%s2589 + $0xb1] sm:$0xff]
      %v2618 = vld [vmem:[%s2589 + $0xc1] sm:$0xff]
      %v2619 = vld [vmem:[%s2589 + $0xd1] sm:$0xff]
      %v2620 = vld [vmem:[%s2589 + $0xe1] sm:$0xff]
      %v2621 = vld [vmem:[%s2589 + $0xf1] sm:$0xff]
      %v2622 = vld [vmem:[%s2589 + $0x2] sm:$0xff]
      %v2623 = vld [vmem:[%s2589 + $0x12] sm:$0xff]
      %v2624 = vld [vmem:[%s2589 + $0x22] sm:$0xff]
      %v2625 = vld [vmem:[%s2589 + $0x32] sm:$0xff]
      %v2626 = vld [vmem:[%s2589 + $0x42] sm:$0xff]
      %v2627 = vld [vmem:[%s2589 + $0x52] sm:$0xff]
      %v2628 = vld [vmem:[%s2589 + $0x62] sm:$0xff]
      %v2629 = vld [vmem:[%s2589 + $0x72] sm:$0xff]
      %v2630 = vld [vmem:[%s2589 + $0x82] sm:$0xff]
      %v2631 = vld [vmem:[%s2589 + $0x92] sm:$0xff]
      %v2632 = vld [vmem:[%s2589 + $0xa2] sm:$0xff]
      %v2633 = vld [vmem:[%s2589 + $0xb2] sm:$0xff]
      %v2634 = vld [vmem:[%s2589 + $0xc2] sm:$0xff]
      %v2635 = vld [vmem:[%s2589 + $0xd2] sm:$0xff]
      %v2636 = vld [vmem:[%s2589 + $0xe2] sm:$0xff]
      %v2637 = vld [vmem:[%s2589 + $0xf2] sm:$0xff]
      %2654 = vrot.lane.b32.xlu0 %v2493, 124
      %v2655 = vpop.permute.xlu0 %2654
      %2656 = vrot.lane.b32.xlu0 %v2494, 124
      %v2657 = vpop.permute.xlu0 %2656
      %2658 = vrot.lane.b32.xlu0 %v2495, 124
      %v2659 = vpop.permute.xlu0 %2658
      %2660 = vrot.lane.b32.xlu0 %v2496, 124
      %v2661 = vpop.permute.xlu0 %2660
      %2662 = vrot.lane.b32.xlu0 %v2497, 124
      %v2663 = vpop.permute.xlu0 %2662
      %2664 = vrot.lane.b32.xlu0 %v2498, 124
      %v2665 = vpop.permute.xlu0 %2664
      %2666 = vrot.lane.b32.xlu0 %v2499, 124
      %v2667 = vpop.permute.xlu0 %2666
      %2668 = vrot.lane.b32.xlu0 %v2500, 124
      %v2669 = vpop.permute.xlu0 %2668
      %2670 = vrot.lane.b32.xlu0 %v2501, 124
      %v2671 = vpop.permute.xlu0 %2670
      %2672 = vrot.lane.b32.xlu0 %v2502, 124
      %v2673 = vpop.permute.xlu0 %2672
      %2674 = vrot.lane.b32.xlu0 %v2503, 124
      %v2675 = vpop.permute.xlu0 %2674
      %2676 = vrot.lane.b32.xlu0 %v2504, 124
      %v2677 = vpop.permute.xlu0 %2676
      %2678 = vrot.lane.b32.xlu0 %v2505, 124
      %v2679 = vpop.permute.xlu0 %2678
      %2680 = vrot.lane.b32.xlu0 %v2506, 124
      %v2681 = vpop.permute.xlu0 %2680
      %2682 = vrot.lane.b32.xlu0 %v2507, 124
      %v2683 = vpop.permute.xlu0 %2682
      %2684 = vrot.lane.b32.xlu0 %v2508, 124
      %v2685 = vpop.permute.xlu0 %2684
      %2718 = vrot.lane.b32.xlu0 %v2509, 4
      %v2719 = vpop.permute.xlu0 %2718
      %2720 = vrot.lane.b32.xlu0 %v2510, 4
      %v2721 = vpop.permute.xlu0 %2720
      %2722 = vrot.lane.b32.xlu0 %v2511, 4
      %v2723 = vpop.permute.xlu0 %2722
      %2724 = vrot.lane.b32.xlu0 %v2512, 4
      %v2725 = vpop.permute.xlu0 %2724
      %2726 = vrot.lane.b32.xlu0 %v2513, 4
      %v2727 = vpop.permute.xlu0 %2726
      %2728 = vrot.lane.b32.xlu0 %v2514, 4
      %v2729 = vpop.permute.xlu0 %2728
      %2730 = vrot.lane.b32.xlu0 %v2515, 4
      %v2731 = vpop.permute.xlu0 %2730
      %2732 = vrot.lane.b32.xlu0 %v2516, 4
      %v2733 = vpop.permute.xlu0 %2732
      %2734 = vrot.lane.b32.xlu0 %v2517, 4
      %v2735 = vpop.permute.xlu0 %2734
      %2736 = vrot.lane.b32.xlu0 %v2518, 4
      %v2737 = vpop.permute.xlu0 %2736
      %2738 = vrot.lane.b32.xlu0 %v2519, 4
      %v2739 = vpop.permute.xlu0 %2738
      %2740 = vrot.lane.b32.xlu0 %v2520, 4
      %v2741 = vpop.permute.xlu0 %2740
      %2742 = vrot.lane.b32.xlu0 %v2521, 4
      %v2743 = vpop.permute.xlu0 %2742
      %2744 = vrot.lane.b32.xlu0 %v2522, 4
      %v2745 = vpop.permute.xlu0 %2744
      %2746 = vrot.lane.b32.xlu0 %v2523, 4
      %v2747 = vpop.permute.xlu0 %2746
      %2748 = vrot.lane.b32.xlu0 %v2524, 4
      %v2749 = vpop.permute.xlu0 %2748
      %2782 = vrot.lane.b32.xlu0 %v2541, 8
      %v2783 = vpop.permute.xlu0 %2782
      %2784 = vrot.lane.b32.xlu0 %v2542, 8
      %v2785 = vpop.permute.xlu0 %2784
      %2786 = vrot.lane.b32.xlu0 %v2543, 8
      %v2787 = vpop.permute.xlu0 %2786
      %2788 = vrot.lane.b32.xlu0 %v2544, 8
      %v2789 = vpop.permute.xlu0 %2788
      %2790 = vrot.lane.b32.xlu0 %v2545, 8
      %v2791 = vpop.permute.xlu0 %2790
      %2792 = vrot.lane.b32.xlu0 %v2546, 8
      %v2793 = vpop.permute.xlu0 %2792
      %2794 = vrot.lane.b32.xlu0 %v2547, 8
      %v2795 = vpop.permute.xlu0 %2794
      %2796 = vrot.lane.b32.xlu0 %v2548, 8
      %v2797 = vpop.permute.xlu0 %2796
      %2798 = vrot.lane.b32.xlu0 %v2549, 8
      %v2799 = vpop.permute.xlu0 %2798
      %2800 = vrot.lane.b32.xlu0 %v2550, 8
      %v2801 = vpop.permute.xlu0 %2800
      %2802 = vrot.lane.b32.xlu0 %v2551, 8
      %v2803 = vpop.permute.xlu0 %2802
      %2804 = vrot.lane.b32.xlu0 %v2552, 8
      %v2805 = vpop.permute.xlu0 %2804
      %2806 = vrot.lane.b32.xlu0 %v2553, 8
      %v2807 = vpop.permute.xlu0 %2806
      %2808 = vrot.lane.b32.xlu0 %v2554, 8
      %v2809 = vpop.permute.xlu0 %2808
      %2810 = vrot.lane.b32.xlu0 %v2555, 8
      %v2811 = vpop.permute.xlu0 %2810
      %2812 = vrot.lane.b32.xlu0 %v2556, 8
      %v2813 = vpop.permute.xlu0 %2812
      %2846 = vrot.lane.b32.xlu0 %v2557, 16
      %v2847 = vpop.permute.xlu0 %2846
      %2848 = vrot.lane.b32.xlu0 %v2558, 16
      %v2849 = vpop.permute.xlu0 %2848
      %2850 = vrot.lane.b32.xlu0 %v2559, 16
      %v2851 = vpop.permute.xlu0 %2850
      %2852 = vrot.lane.b32.xlu0 %v2560, 16
      %v2853 = vpop.permute.xlu0 %2852
      %2854 = vrot.lane.b32.xlu0 %v2561, 16
      %v2855 = vpop.permute.xlu0 %2854
      %2856 = vrot.lane.b32.xlu0 %v2562, 16
      %v2857 = vpop.permute.xlu0 %2856
      %2858 = vrot.lane.b32.xlu0 %v2563, 16
      %v2859 = vpop.permute.xlu0 %2858
      %2860 = vrot.lane.b32.xlu0 %v2564, 16
      %v2861 = vpop.permute.xlu0 %2860
      %2862 = vrot.lane.b32.xlu0 %v2565, 16
      %v2863 = vpop.permute.xlu0 %2862
      %2864 = vrot.lane.b32.xlu0 %v2566, 16
      %v2865 = vpop.permute.xlu0 %2864
      %2866 = vrot.lane.b32.xlu0 %v2567, 16
      %v2867 = vpop.permute.xlu0 %2866
      %2868 = vrot.lane.b32.xlu0 %v2568, 16
      %v2869 = vpop.permute.xlu0 %2868
      %2870 = vrot.lane.b32.xlu0 %v2569, 16
      %v2871 = vpop.permute.xlu0 %2870
      %2872 = vrot.lane.b32.xlu0 %v2570, 16
      %v2873 = vpop.permute.xlu0 %2872
      %2874 = vrot.lane.b32.xlu0 %v2571, 16
      %v2875 = vpop.permute.xlu0 %2874
      %2876 = vrot.lane.b32.xlu0 %v2572, 16
      %v2877 = vpop.permute.xlu0 %2876
      %2910 = vrot.lane.b32.xlu0 %v2590, 20
      %v2911 = vpop.permute.xlu0 %2910
      %2912 = vrot.lane.b32.xlu0 %v2591, 20
      %v2913 = vpop.permute.xlu0 %2912
      %2914 = vrot.lane.b32.xlu0 %v2592, 20
      %v2915 = vpop.permute.xlu0 %2914
      %2916 = vrot.lane.b32.xlu0 %v2593, 20
      %v2917 = vpop.permute.xlu0 %2916
      %2918 = vrot.lane.b32.xlu0 %v2594, 20
      %v2919 = vpop.permute.xlu0 %2918
      %2920 = vrot.lane.b32.xlu0 %v2595, 20
      %v2921 = vpop.permute.xlu0 %2920
      %2922 = vrot.lane.b32.xlu0 %v2596, 20
      %v2923 = vpop.permute.xlu0 %2922
      %2924 = vrot.lane.b32.xlu0 %v2597, 20
      %v2925 = vpop.permute.xlu0 %2924
      %2926 = vrot.lane.b32.xlu0 %v2598, 20
      %v2927 = vpop.permute.xlu0 %2926
      %2928 = vrot.lane.b32.xlu0 %v2599, 20
      %v2929 = vpop.permute.xlu0 %2928
      %2930 = vrot.lane.b32.xlu0 %v2600, 20
      %v2931 = vpop.permute.xlu0 %2930
      %2932 = vrot.lane.b32.xlu0 %v2601, 20
      %v2933 = vpop.permute.xlu0 %2932
      %2934 = vrot.lane.b32.xlu0 %v2602, 20
      %v2935 = vpop.permute.xlu0 %2934
      %2936 = vrot.lane.b32.xlu0 %v2603, 20
      %v2937 = vpop.permute.xlu0 %2936
      %2938 = vrot.lane.b32.xlu0 %v2604, 20
      %v2939 = vpop.permute.xlu0 %2938
      %2940 = vrot.lane.b32.xlu0 %v2605, 20
      %v2941 = vpop.permute.xlu0 %2940
      %2974 = vrot.lane.b32.xlu0 %v2606, 28
      %v2975 = vpop.permute.xlu0 %2974
      %2976 = vrot.lane.b32.xlu0 %v2607, 28
      %v2977 = vpop.permute.xlu0 %2976
      %2978 = vrot.lane.b32.xlu0 %v2608, 28
      %v2979 = vpop.permute.xlu0 %2978
      %2980 = vrot.lane.b32.xlu0 %v2609, 28
      %v2981 = vpop.permute.xlu0 %2980
      %2982 = vrot.lane.b32.xlu0 %v2610, 28
      %v2983 = vpop.permute.xlu0 %2982
      %2984 = vrot.lane.b32.xlu0 %v2611, 28
      %v2985 = vpop.permute.xlu0 %2984
      %2986 = vrot.lane.b32.xlu0 %v2612, 28
      %v2987 = vpop.permute.xlu0 %2986
      %2988 = vrot.lane.b32.xlu0 %v2613, 28
      %v2989 = vpop.permute.xlu0 %2988
      %2990 = vrot.lane.b32.xlu0 %v2614, 28
      %v2991 = vpop.permute.xlu0 %2990
      %2992 = vrot.lane.b32.xlu0 %v2615, 28
      %v2993 = vpop.permute.xlu0 %2992
      %2994 = vrot.lane.b32.xlu0 %v2616, 28
      %v2995 = vpop.permute.xlu0 %2994
      %2996 = vrot.lane.b32.xlu0 %v2617, 28
      %v2997 = vpop.permute.xlu0 %2996
      %2998 = vrot.lane.b32.xlu0 %v2618, 28
      %v2999 = vpop.permute.xlu0 %2998
      %3000 = vrot.lane.b32.xlu0 %v2619, 28
      %v3001 = vpop.permute.xlu0 %3000
      %3002 = vrot.lane.b32.xlu0 %v2620, 28
      %v3003 = vpop.permute.xlu0 %3002
      %3004 = vrot.lane.b32.xlu0 %v2621, 28
      %v3005 = vpop.permute.xlu0 %3004
      %v3022 = vsel %vm912, %v2655, %v2719
      %v3023 = vsel %vm912, %v2657, %v2721
      %v3024 = vsel %vm912, %v2659, %v2723
      %v3025 = vsel %vm912, %v2661, %v2725
      %v3026 = vsel %vm912, %v2663, %v2727
      %v3027 = vsel %vm912, %v2665, %v2729
      %v3028 = vsel %vm912, %v2667, %v2731
      %v3029 = vsel %vm912, %v2669, %v2733
      %v3030 = vsel %vm912, %v2671, %v2735
      %v3031 = vsel %vm912, %v2673, %v2737
      %v3032 = vsel %vm912, %v2675, %v2739
      %v3033 = vsel %vm912, %v2677, %v2741
      %v3034 = vsel %vm912, %v2679, %v2743
      %v3035 = vsel %vm912, %v2681, %v2745
      %v3036 = vsel %vm912, %v2683, %v2747
      %v3037 = vsel %vm912, %v2685, %v2749
      %v3038 = vsel %vm945, %v3022, %v2783
      %v3039 = vsel %vm945, %v3023, %v2785
      %v3040 = vsel %vm945, %v3024, %v2787
      %v3041 = vsel %vm945, %v3025, %v2789
      %v3042 = vsel %vm945, %v3026, %v2791
      %v3043 = vsel %vm945, %v3027, %v2793
      %v3044 = vsel %vm945, %v3028, %v2795
      %v3045 = vsel %vm945, %v3029, %v2797
      %v3046 = vsel %vm945, %v3030, %v2799
      %v3047 = vsel %vm945, %v3031, %v2801
      %v3048 = vsel %vm945, %v3032, %v2803
      %v3049 = vsel %vm945, %v3033, %v2805
      %v3050 = vsel %vm945, %v3034, %v2807
      %v3051 = vsel %vm945, %v3035, %v2809
      %v3052 = vsel %vm945, %v3036, %v2811
      %v3053 = vsel %vm945, %v3037, %v2813
      %v3054 = vsel %vm380, %v3038, %v2847
      %v3055 = vsel %vm380, %v3039, %v2849
      %v3056 = vsel %vm380, %v3040, %v2851
      %v3057 = vsel %vm380, %v3041, %v2853
      %v3058 = vsel %vm380, %v3042, %v2855
      %v3059 = vsel %vm380, %v3043, %v2857
      %v3060 = vsel %vm380, %v3044, %v2859
      %v3061 = vsel %vm380, %v3045, %v2861
      %v3062 = vsel %vm380, %v3046, %v2863
      %v3063 = vsel %vm380, %v3047, %v2865
      %v3064 = vsel %vm380, %v3048, %v2867
      %v3065 = vsel %vm380, %v3049, %v2869
      %v3066 = vsel %vm380, %v3050, %v2871
      %v3067 = vsel %vm380, %v3051, %v2873
      %v3068 = vsel %vm380, %v3052, %v2875
      %v3069 = vsel %vm380, %v3053, %v2877
      %v3070 = vsel %vm1524, %v3054, %v2911
      %v3071 = vsel %vm1524, %v3055, %v2913
      %v3072 = vsel %vm1524, %v3056, %v2915
      %v3073 = vsel %vm1524, %v3057, %v2917
      %v3074 = vsel %vm1524, %v3058, %v2919
      %v3075 = vsel %vm1524, %v3059, %v2921
      %v3076 = vsel %vm1524, %v3060, %v2923
      %v3077 = vsel %vm1524, %v3061, %v2925
      %v3078 = vsel %vm1524, %v3062, %v2927
      %v3079 = vsel %vm1524, %v3063, %v2929
      %v3080 = vsel %vm1524, %v3064, %v2931
      %v3081 = vsel %vm1524, %v3065, %v2933
      %v3082 = vsel %vm1524, %v3066, %v2935
      %v3083 = vsel %vm1524, %v3067, %v2937
      %v3084 = vsel %vm1524, %v3068, %v2939
      %v3085 = vsel %vm1524, %v3069, %v2941
      %vm3086 = vcmask 228352
      %v3087 = vsel %vm3086, %v3070, %v2975
      %v3088 = vsel %vm3086, %v3071, %v2977
      %v3089 = vsel %vm3086, %v3072, %v2979
      %v3090 = vsel %vm3086, %v3073, %v2981
      %v3091 = vsel %vm3086, %v3074, %v2983
      %v3092 = vsel %vm3086, %v3075, %v2985
      %v3093 = vsel %vm3086, %v3076, %v2987
      %v3094 = vsel %vm3086, %v3077, %v2989
      %v3095 = vsel %vm3086, %v3078, %v2991
      %v3096 = vsel %vm3086, %v3079, %v2993
      %v3097 = vsel %vm3086, %v3080, %v2995
      %v3098 = vsel %vm3086, %v3081, %v2997
      %v3099 = vsel %vm3086, %v3082, %v2999
      %v3100 = vsel %vm3086, %v3083, %v3001
      %v3101 = vsel %vm3086, %v3084, %v3003
      %v3102 = vsel %vm3086, %v3085, %v3005
      %3119 = vrot.lane.b32.xlu0 %v2525, 8
      %v3120 = vpop.permute.xlu0 %3119
      %3121 = vrot.lane.b32.xlu0 %v2526, 8
      %v3122 = vpop.permute.xlu0 %3121
      %3123 = vrot.lane.b32.xlu0 %v2527, 8
      %v3124 = vpop.permute.xlu0 %3123
      %3125 = vrot.lane.b32.xlu0 %v2528, 8
      %v3126 = vpop.permute.xlu0 %3125
      %3127 = vrot.lane.b32.xlu0 %v2529, 8
      %v3128 = vpop.permute.xlu0 %3127
      %3129 = vrot.lane.b32.xlu0 %v2530, 8
      %v3130 = vpop.permute.xlu0 %3129
      %3131 = vrot.lane.b32.xlu0 %v2531, 8
      %v3132 = vpop.permute.xlu0 %3131
      %3133 = vrot.lane.b32.xlu0 %v2532, 8
      %v3134 = vpop.permute.xlu0 %3133
      %3135 = vrot.lane.b32.xlu0 %v2533, 8
      %v3136 = vpop.permute.xlu0 %3135
      %3137 = vrot.lane.b32.xlu0 %v2534, 8
      %v3138 = vpop.permute.xlu0 %3137
      %3139 = vrot.lane.b32.xlu0 %v2535, 8
      %v3140 = vpop.permute.xlu0 %3139
      %3141 = vrot.lane.b32.xlu0 %v2536, 8
      %v3142 = vpop.permute.xlu0 %3141
      %3143 = vrot.lane.b32.xlu0 %v2537, 8
      %v3144 = vpop.permute.xlu0 %3143
      %3145 = vrot.lane.b32.xlu0 %v2538, 8
      %v3146 = vpop.permute.xlu0 %3145
      %3147 = vrot.lane.b32.xlu0 %v2539, 8
      %v3148 = vpop.permute.xlu0 %3147
      %3149 = vrot.lane.b32.xlu0 %v2540, 8
      %v3150 = vpop.permute.xlu0 %3149
      %3167 = vrot.lane.b32.xlu0 %v2557, 12
      %v3168 = vpop.permute.xlu0 %3167
      %3169 = vrot.lane.b32.xlu0 %v2558, 12
      %v3170 = vpop.permute.xlu0 %3169
      %3171 = vrot.lane.b32.xlu0 %v2559, 12
      %v3172 = vpop.permute.xlu0 %3171
      %3173 = vrot.lane.b32.xlu0 %v2560, 12
      %v3174 = vpop.permute.xlu0 %3173
      %3175 = vrot.lane.b32.xlu0 %v2561, 12
      %v3176 = vpop.permute.xlu0 %3175
      %3177 = vrot.lane.b32.xlu0 %v2562, 12
      %v3178 = vpop.permute.xlu0 %3177
      %3179 = vrot.lane.b32.xlu0 %v2563, 12
      %v3180 = vpop.permute.xlu0 %3179
      %3181 = vrot.lane.b32.xlu0 %v2564, 12
      %v3182 = vpop.permute.xlu0 %3181
      %3183 = vrot.lane.b32.xlu0 %v2565, 12
      %v3184 = vpop.permute.xlu0 %3183
      %3185 = vrot.lane.b32.xlu0 %v2566, 12
      %v3186 = vpop.permute.xlu0 %3185
      %3187 = vrot.lane.b32.xlu0 %v2567, 12
      %v3188 = vpop.permute.xlu0 %3187
      %3189 = vrot.lane.b32.xlu0 %v2568, 12
      %v3190 = vpop.permute.xlu0 %3189
      %3191 = vrot.lane.b32.xlu0 %v2569, 12
      %v3192 = vpop.permute.xlu0 %3191
      %3193 = vrot.lane.b32.xlu0 %v2570, 12
      %v3194 = vpop.permute.xlu0 %3193
      %3195 = vrot.lane.b32.xlu0 %v2571, 12
      %v3196 = vpop.permute.xlu0 %3195
      %3197 = vrot.lane.b32.xlu0 %v2572, 12
      %v3198 = vpop.permute.xlu0 %3197
      %3231 = vrot.lane.b32.xlu0 %v2573, 20
      %v3232 = vpop.permute.xlu0 %3231
      %3233 = vrot.lane.b32.xlu0 %v2574, 20
      %v3234 = vpop.permute.xlu0 %3233
      %3235 = vrot.lane.b32.xlu0 %v2575, 20
      %v3236 = vpop.permute.xlu0 %3235
      %3237 = vrot.lane.b32.xlu0 %v2576, 20
      %v3238 = vpop.permute.xlu0 %3237
      %3239 = vrot.lane.b32.xlu0 %v2577, 20
      %v3240 = vpop.permute.xlu0 %3239
      %3241 = vrot.lane.b32.xlu0 %v2578, 20
      %v3242 = vpop.permute.xlu0 %3241
      %3243 = vrot.lane.b32.xlu0 %v2579, 20
      %v3244 = vpop.permute.xlu0 %3243
      %3245 = vrot.lane.b32.xlu0 %v2580, 20
      %v3246 = vpop.permute.xlu0 %3245
      %3247 = vrot.lane.b32.xlu0 %v2581, 20
      %v3248 = vpop.permute.xlu0 %3247
      %3249 = vrot.lane.b32.xlu0 %v2582, 20
      %v3250 = vpop.permute.xlu0 %3249
      %3251 = vrot.lane.b32.xlu0 %v2583, 20
      %v3252 = vpop.permute.xlu0 %3251
      %3253 = vrot.lane.b32.xlu0 %v2584, 20
      %v3254 = vpop.permute.xlu0 %3253
      %3255 = vrot.lane.b32.xlu0 %v2585, 20
      %v3256 = vpop.permute.xlu0 %3255
      %3257 = vrot.lane.b32.xlu0 %v2586, 20
      %v3258 = vpop.permute.xlu0 %3257
      %3259 = vrot.lane.b32.xlu0 %v2587, 20
      %v3260 = vpop.permute.xlu0 %3259
      %3261 = vrot.lane.b32.xlu0 %v2588, 20
      %v3262 = vpop.permute.xlu0 %3261
      %3279 = vrot.lane.b32.xlu0 %v2606, 24
      %v3280 = vpop.permute.xlu0 %3279
      %3281 = vrot.lane.b32.xlu0 %v2607, 24
      %v3282 = vpop.permute.xlu0 %3281
      %3283 = vrot.lane.b32.xlu0 %v2608, 24
      %v3284 = vpop.permute.xlu0 %3283
      %3285 = vrot.lane.b32.xlu0 %v2609, 24
      %v3286 = vpop.permute.xlu0 %3285
      %3287 = vrot.lane.b32.xlu0 %v2610, 24
      %v3288 = vpop.permute.xlu0 %3287
      %3289 = vrot.lane.b32.xlu0 %v2611, 24
      %v3290 = vpop.permute.xlu0 %3289
      %3291 = vrot.lane.b32.xlu0 %v2612, 24
      %v3292 = vpop.permute.xlu0 %3291
      %3293 = vrot.lane.b32.xlu0 %v2613, 24
      %v3294 = vpop.permute.xlu0 %3293
      %3295 = vrot.lane.b32.xlu0 %v2614, 24
      %v3296 = vpop.permute.xlu0 %3295
      %3297 = vrot.lane.b32.xlu0 %v2615, 24
      %v3298 = vpop.permute.xlu0 %3297
      %3299 = vrot.lane.b32.xlu0 %v2616, 24
      %v3300 = vpop.permute.xlu0 %3299
      %3301 = vrot.lane.b32.xlu0 %v2617, 24
      %v3302 = vpop.permute.xlu0 %3301
      %3303 = vrot.lane.b32.xlu0 %v2618, 24
      %v3304 = vpop.permute.xlu0 %3303
      %3305 = vrot.lane.b32.xlu0 %v2619, 24
      %v3306 = vpop.permute.xlu0 %3305
      %3307 = vrot.lane.b32.xlu0 %v2620, 24
      %v3308 = vpop.permute.xlu0 %3307
      %3309 = vrot.lane.b32.xlu0 %v2621, 24
      %v3310 = vpop.permute.xlu0 %3309
      %3343 = vrot.lane.b32.xlu0 %v2622, 32
      %v3344 = vpop.permute.xlu0 %3343
      %3345 = vrot.lane.b32.xlu0 %v2623, 32
      %v3346 = vpop.permute.xlu0 %3345
      %3347 = vrot.lane.b32.xlu0 %v2624, 32
      %v3348 = vpop.permute.xlu0 %3347
      %3349 = vrot.lane.b32.xlu0 %v2625, 32
      %v3350 = vpop.permute.xlu0 %3349
      %3351 = vrot.lane.b32.xlu0 %v2626, 32
      %v3352 = vpop.permute.xlu0 %3351
      %3353 = vrot.lane.b32.xlu0 %v2627, 32
      %v3354 = vpop.permute.xlu0 %3353
      %3355 = vrot.lane.b32.xlu0 %v2628, 32
      %v3356 = vpop.permute.xlu0 %3355
      %3357 = vrot.lane.b32.xlu0 %v2629, 32
      %v3358 = vpop.permute.xlu0 %3357
      %3359 = vrot.lane.b32.xlu0 %v2630, 32
      %v3360 = vpop.permute.xlu0 %3359
      %3361 = vrot.lane.b32.xlu0 %v2631, 32
      %v3362 = vpop.permute.xlu0 %3361
      %3363 = vrot.lane.b32.xlu0 %v2632, 32
      %v3364 = vpop.permute.xlu0 %3363
      %3365 = vrot.lane.b32.xlu0 %v2633, 32
      %v3366 = vpop.permute.xlu0 %3365
      %3367 = vrot.lane.b32.xlu0 %v2634, 32
      %v3368 = vpop.permute.xlu0 %3367
      %3369 = vrot.lane.b32.xlu0 %v2635, 32
      %v3370 = vpop.permute.xlu0 %3369
      %3371 = vrot.lane.b32.xlu0 %v2636, 32
      %v3372 = vpop.permute.xlu0 %3371
      %3373 = vrot.lane.b32.xlu0 %v2637, 32
      %v3374 = vpop.permute.xlu0 %3373
      %v3391 = vsel %vm424, %v2509, %v3120
      %v3392 = vsel %vm424, %v2510, %v3122
      %v3393 = vsel %vm424, %v2511, %v3124
      %v3394 = vsel %vm424, %v2512, %v3126
      %v3395 = vsel %vm424, %v2513, %v3128
      %v3396 = vsel %vm424, %v2514, %v3130
      %v3397 = vsel %vm424, %v2515, %v3132
      %v3398 = vsel %vm424, %v2516, %v3134
      %v3399 = vsel %vm424, %v2517, %v3136
      %v3400 = vsel %vm424, %v2518, %v3138
      %v3401 = vsel %vm424, %v2519, %v3140
      %v3402 = vsel %vm424, %v2520, %v3142
      %v3403 = vsel %vm424, %v2521, %v3144
      %v3404 = vsel %vm424, %v2522, %v3146
      %v3405 = vsel %vm424, %v2523, %v3148
      %v3406 = vsel %vm424, %v2524, %v3150
      %v3407 = vsel %vm945, %v3391, %v3168
      %v3408 = vsel %vm945, %v3392, %v3170
      %v3409 = vsel %vm945, %v3393, %v3172
      %v3410 = vsel %vm945, %v3394, %v3174
      %v3411 = vsel %vm945, %v3395, %v3176
      %v3412 = vsel %vm945, %v3396, %v3178
      %v3413 = vsel %vm945, %v3397, %v3180
      %v3414 = vsel %vm945, %v3398, %v3182
      %v3415 = vsel %vm945, %v3399, %v3184
      %v3416 = vsel %vm945, %v3400, %v3186
      %v3417 = vsel %vm945, %v3401, %v3188
      %v3418 = vsel %vm945, %v3402, %v3190
      %v3419 = vsel %vm945, %v3403, %v3192
      %v3420 = vsel %vm945, %v3404, %v3194
      %v3421 = vsel %vm945, %v3405, %v3196
      %v3422 = vsel %vm945, %v3406, %v3198
      %vm3423 = vcmask 162816
      %v3424 = vsel %vm3423, %v3407, %v3232
      %v3425 = vsel %vm3423, %v3408, %v3234
      %v3426 = vsel %vm3423, %v3409, %v3236
      %v3427 = vsel %vm3423, %v3410, %v3238
      %v3428 = vsel %vm3423, %v3411, %v3240
      %v3429 = vsel %vm3423, %v3412, %v3242
      %v3430 = vsel %vm3423, %v3413, %v3244
      %v3431 = vsel %vm3423, %v3414, %v3246
      %v3432 = vsel %vm3423, %v3415, %v3248
      %v3433 = vsel %vm3423, %v3416, %v3250
      %v3434 = vsel %vm3423, %v3417, %v3252
      %v3435 = vsel %vm3423, %v3418, %v3254
      %v3436 = vsel %vm3423, %v3419, %v3256
      %v3437 = vsel %vm3423, %v3420, %v3258
      %v3438 = vsel %vm3423, %v3421, %v3260
      %v3439 = vsel %vm3423, %v3422, %v3262
      %v3440 = vsel %vm1524, %v3424, %v3280
      %v3441 = vsel %vm1524, %v3425, %v3282
      %v3442 = vsel %vm1524, %v3426, %v3284
      %v3443 = vsel %vm1524, %v3427, %v3286
      %v3444 = vsel %vm1524, %v3428, %v3288
      %v3445 = vsel %vm1524, %v3429, %v3290
      %v3446 = vsel %vm1524, %v3430, %v3292
      %v3447 = vsel %vm1524, %v3431, %v3294
      %v3448 = vsel %vm1524, %v3432, %v3296
      %v3449 = vsel %vm1524, %v3433, %v3298
      %v3450 = vsel %vm1524, %v3434, %v3300
      %v3451 = vsel %vm1524, %v3435, %v3302
      %v3452 = vsel %vm1524, %v3436, %v3304
      %v3453 = vsel %vm1524, %v3437, %v3306
      %v3454 = vsel %vm1524, %v3438, %v3308
      %v3455 = vsel %vm1524, %v3439, %v3310
      %v3456 = vsel %vm1541, %v3440, %v3344
      %v3457 = vsel %vm1541, %v3441, %v3346
      %v3458 = vsel %vm1541, %v3442, %v3348
      %v3459 = vsel %vm1541, %v3443, %v3350
      %v3460 = vsel %vm1541, %v3444, %v3352
      %v3461 = vsel %vm1541, %v3445, %v3354
      %v3462 = vsel %vm1541, %v3446, %v3356
      %v3463 = vsel %vm1541, %v3447, %v3358
      %v3464 = vsel %vm1541, %v3448, %v3360
      %v3465 = vsel %vm1541, %v3449, %v3362
      %v3466 = vsel %vm1541, %v3450, %v3364
      %v3467 = vsel %vm1541, %v3451, %v3366
      %v3468 = vsel %vm1541, %v3452, %v3368
      %v3469 = vsel %vm1541, %v3453, %v3370
      %v3470 = vsel %vm1541, %v3454, %v3372
      %v3471 = vsel %vm1541, %v3455, %v3374
      %v3472 = vld [vmem:[%s6] sm:$0xff]
      %v3473 = vld [vmem:[%s6 + $0x8] sm:$0xff]
      %v3474 = vld [vmem:[%s6 + $0x10] sm:$0xff]
      %v3475 = vld [vmem:[%s6 + $0x18] sm:$0xff]
      %v3476 = vld [vmem:[%s6 + $0x20] sm:$0xf]
      %v3477 = vld [vmem:[%s7] sm:$0x1]
      %v3479 = vlaneseq
      %v3480 = vshrl.u32 %v3479, 7
      %v3481 = vsub.s32 0, %v3480
      %v3482 = vrot.slane %v3477, %v3481
      %vm3484 = vcmask 293888
      %v3486 = vsel %vm3484, %v3087, 0
      %v3489 = vsel %vm3484, %v3088, 0
      %v3492 = vsel %vm3484, %v3089, 0
      %v3495 = vsel %vm3484, %v3090, 0
      %v3498 = vsel %vm3484, %v3091, 0
      %v3501 = vsel %vm3484, %v3092, 0
      %v3504 = vsel %vm3484, %v3093, 0
      %v3507 = vsel %vm3484, %v3094, 0
      %v3510 = vsel %vm3484, %v3095, 0
      %v3513 = vsel %vm3484, %v3096, 0
      %v3516 = vsel %vm3484, %v3097, 0
      %v3519 = vsel %vm3484, %v3098, 0
      %v3522 = vsel %vm3484, %v3099, 0
      %v3525 = vsel %vm3484, %v3100, 0
      %v3528 = vsel %vm3484, %v3101, 0
      %v3531 = vsel %vm3484, %v3102, 0
      %v3534 = vsel %vm3484, %v3456, 0
      %v3537 = vsel %vm3484, %v3457, 0
      %v3540 = vsel %vm3484, %v3458, 0
      %v3543 = vsel %vm3484, %v3459, 0
      %v3546 = vsel %vm3484, %v3460, 0
      %v3549 = vsel %vm3484, %v3461, 0
      %v3552 = vsel %vm3484, %v3462, 0
      %v3555 = vsel %vm3484, %v3463, 0
      %v3558 = vsel %vm3484, %v3464, 0
      %v3561 = vsel %vm3484, %v3465, 0
      %v3564 = vsel %vm3484, %v3466, 0
      %v3567 = vsel %vm3484, %v3467, 0
      %v3570 = vsel %vm3484, %v3468, 0
      %v3573 = vsel %vm3484, %v3469, 0
      %v3576 = vsel %vm3484, %v3470, 0
      %v3579 = vsel %vm3484, %v3471, 0
      %vm3581 = vcmask 1043456
      %v3583 = vsel %vm3581, %v3476, 0
      %3585 = vmatprep.subr.mxu0 0.0
      %3586 = vmatpush1.msra.mxu0 0.0
      %3587 = vmatprep.subr.mxu0 0.0
      %3588 = vmatpush1.msra.mxu0 0.0
      %3589 = vmatprep.subr.mxu0 0.0
      %3590 = vmatpush1.msra.mxu0 0.0
      %3591 = vmatprep.subr.mxu0 0.0
      %3592 = vmatpush1.msra.mxu0 0.0
      %3593 = vmatprep.subr.mxu0 0.0
      %3594 = vmatpush1.msra.mxu0 0.0
      %3595 = vmatprep.subr.mxu0 0.0
      %3596 = vmatpush1.msra.mxu0 0.0
      %3597 = vmatprep.subr.mxu0 0.0
      %3598 = vmatpush1.msra.mxu0 0.0
      %3599 = vmatprep.subr.mxu0 0.0
      %3600 = vmatpush1.msra.mxu0 0.0
      %3601 = vmatprep.subr.mxu0 0.0
      %3602 = vmatpush1.msra.mxu0 0.0
      %3603 = vmatprep.subr.mxu0 0.0
      %3604 = vmatpush1.msra.mxu0 0.0
      %3605 = vmatprep.subr.mxu0 0.0
      %3606 = vmatpush1.msra.mxu0 0.0
      %3607 = vmatprep.subr.mxu0 0.0
      %3608 = vmatpush1.msra.mxu0 %v3583
      %3609 = vmatprep.subr.mxu0 0.0
      %3610 = vmatpush1.msra.mxu0 %v3475
      %3611 = vmatprep.subr.mxu0 0.0
      %3612 = vmatpush1.msra.mxu0 %v3474
      %3613 = vmatprep.subr.mxu0 0.0
      %3614 = vmatpush1.msra.mxu0 %v3473
      %3615 = vmatprep.subr.mxu0 0.0
      %3616 = vmatpush1.msra.mxu0 %v3472
      %3617 = vmatprep.subr.mxu0 0.0
      %3618 = vmatpush2.msra.mxu0 0.0
      %3619 = vmatprep.subr.mxu0 0.0
      %3620 = vmatpush2.msra.mxu0 0.0
      %3621 = vmatprep.subr.mxu0 0.0
      %3622 = vmatpush2.msra.mxu0 0.0
      %3623 = vmatprep.subr.mxu0 0.0
      %3624 = vmatpush2.msra.mxu0 0.0
      %3625 = vmatprep.subr.mxu0 0.0
      %3626 = vmatpush2.msra.mxu0 0.0
      %3627 = vmatprep.subr.mxu0 0.0
      %3628 = vmatpush2.msra.mxu0 0.0
      %3629 = vmatprep.subr.mxu0 0.0
      %3630 = vmatpush2.msra.mxu0 0.0
      %3631 = vmatprep.subr.mxu0 0.0
      %3632 = vmatpush2.msra.mxu0 0.0
      %3633 = vmatprep.subr.mxu0 0.0
      %3634 = vmatpush2.msra.mxu0 0.0
      %3635 = vmatprep.subr.mxu0 0.0
      %3636 = vmatpush2.msra.mxu0 0.0
      %3637 = vmatprep.subr.mxu0 0.0
      %3638 = vmatpush2.msra.mxu0 0.0
      %3639 = vmatprep.subr.mxu0 0.0
      %3640 = vmatpush2.msra.mxu0 0.0
      %3641 = vmatprep.subr.mxu0 0.0
      %3642 = vmatpush2.msra.mxu0 0.0
      %3643 = vmatprep.subr.mxu0 0.0
      %3644 = vmatpush2.msra.mxu0 0.0
      %3645 = vmatprep.subr.mxu0 0.0
      %3646 = vmatpush2.msra.mxu0 0.0
      %3647 = vmatprep.subr.mxu0 0.0
      %3648 = vmatpush2.msra.mxu0 0.0
      %3649 = vmatprep.mubr.f32.mxu0 0.0
      %3650 = vmatmul.mubr.f32.gmra.mxu0 %v3486
      %v3651 = vpop.f32.mrf.mxu0
      %v3652 = vadd.f32 %v3482, %v3651
      %v3653 = vpop.f32.mrf.mxu0
      %3654 = vmatprep.mubr.f32.mxu0 0.0
      %3655 = vmatmul.mubr.f32.gmra.mxu0 %v3489
      %v3656 = vpop.f32.mrf.mxu0
      %v3657 = vadd.f32 %v3482, %v3656
      %v3658 = vpop.f32.mrf.mxu0
      %3659 = vmatprep.mubr.f32.mxu0 0.0
      %3660 = vmatmul.mubr.f32.gmra.mxu0 %v3492
      %v3661 = vpop.f32.mrf.mxu0
      %v3662 = vadd.f32 %v3482, %v3661
      %v3663 = vpop.f32.mrf.mxu0
      %3664 = vmatprep.mubr.f32.mxu0 0.0
      %3665 = vmatmul.mubr.f32.gmra.mxu0 %v3495
      %v3666 = vpop.f32.mrf.mxu0
      %v3667 = vadd.f32 %v3482, %v3666
      %v3668 = vpop.f32.mrf.mxu0
      %3669 = vmatprep.mubr.f32.mxu0 0.0
      %3670 = vmatmul.mubr.f32.gmra.mxu0 %v3498
      %v3671 = vpop.f32.mrf.mxu0
      %v3672 = vadd.f32 %v3482, %v3671
      %v3673 = vpop.f32.mrf.mxu0
      %3674 = vmatprep.mubr.f32.mxu0 0.0
      %3675 = vmatmul.mubr.f32.gmra.mxu0 %v3501
      %v3676 = vpop.f32.mrf.mxu0
      %v3677 = vadd.f32 %v3482, %v3676
      %v3678 = vpop.f32.mrf.mxu0
      %3679 = vmatprep.mubr.f32.mxu0 0.0
      %3680 = vmatmul.mubr.f32.gmra.mxu0 %v3504
      %v3681 = vpop.f32.mrf.mxu0
      %v3682 = vadd.f32 %v3482, %v3681
      %v3683 = vpop.f32.mrf.mxu0
      %3684 = vmatprep.mubr.f32.mxu0 0.0
      %3685 = vmatmul.mubr.f32.gmra.mxu0 %v3507
      %v3686 = vpop.f32.mrf.mxu0
      %v3687 = vadd.f32 %v3482, %v3686
      %v3688 = vpop.f32.mrf.mxu0
      %3689 = vmatprep.mubr.f32.mxu0 0.0
      %3690 = vmatmul.mubr.f32.gmra.mxu0 %v3510
      %v3691 = vpop.f32.mrf.mxu0
      %v3692 = vadd.f32 %v3482, %v3691
      %v3693 = vpop.f32.mrf.mxu0
      %3694 = vmatprep.mubr.f32.mxu0 0.0
      %3695 = vmatmul.mubr.f32.gmra.mxu0 %v3513
      %v3696 = vpop.f32.mrf.mxu0
      %v3697 = vadd.f32 %v3482, %v3696
      %v3698 = vpop.f32.mrf.mxu0
      %3699 = vmatprep.mubr.f32.mxu0 0.0
      %3700 = vmatmul.mubr.f32.gmra.mxu0 %v3516
      %v3701 = vpop.f32.mrf.mxu0
      %v3702 = vadd.f32 %v3482, %v3701
      %v3703 = vpop.f32.mrf.mxu0
      %3704 = vmatprep.mubr.f32.mxu0 0.0
      %3705 = vmatmul.mubr.f32.gmra.mxu0 %v3519
      %v3706 = vpop.f32.mrf.mxu0
      %v3707 = vadd.f32 %v3482, %v3706
      %v3708 = vpop.f32.mrf.mxu0
      %3709 = vmatprep.mubr.f32.mxu0 0.0
      %3710 = vmatmul.mubr.f32.gmra.mxu0 %v3522
      %v3711 = vpop.f32.mrf.mxu0
      %v3712 = vadd.f32 %v3482, %v3711
      %v3713 = vpop.f32.mrf.mxu0
      %3714 = vmatprep.mubr.f32.mxu0 0.0
      %3715 = vmatmul.mubr.f32.gmra.mxu0 %v3525
      %v3716 = vpop.f32.mrf.mxu0
      %v3717 = vadd.f32 %v3482, %v3716
      %v3718 = vpop.f32.mrf.mxu0
      %3719 = vmatprep.mubr.f32.mxu0 0.0
      %3720 = vmatmul.mubr.f32.gmra.mxu0 %v3528
      %v3721 = vpop.f32.mrf.mxu0
      %v3722 = vadd.f32 %v3482, %v3721
      %v3723 = vpop.f32.mrf.mxu0
      %3724 = vmatprep.mubr.f32.mxu0 0.0
      %3725 = vmatmul.mubr.f32.gmra.mxu0 %v3531
      %v3726 = vpop.f32.mrf.mxu0
      %v3727 = vadd.f32 %v3482, %v3726
      %v3728 = vpop.f32.mrf.mxu0
      %3729 = vmatprep.mubr.f32.mxu0 0.0
      %3730 = vmatmul.mubr.f32.gmra.mxu0 %v3534
      %v3731 = vpop.f32.mrf.mxu0
      %v3732 = vadd.f32 %v3482, %v3731
      %v3733 = vpop.f32.mrf.mxu0
      %3734 = vmatprep.mubr.f32.mxu0 0.0
      %3735 = vmatmul.mubr.f32.gmra.mxu0 %v3537
      %v3736 = vpop.f32.mrf.mxu0
      %v3737 = vadd.f32 %v3482, %v3736
      %v3738 = vpop.f32.mrf.mxu0
      %3739 = vmatprep.mubr.f32.mxu0 0.0
      %3740 = vmatmul.mubr.f32.gmra.mxu0 %v3540
      %v3741 = vpop.f32.mrf.mxu0
      %v3742 = vadd.f32 %v3482, %v3741
      %v3743 = vpop.f32.mrf.mxu0
      %3744 = vmatprep.mubr.f32.mxu0 0.0
      %3745 = vmatmul.mubr.f32.gmra.mxu0 %v3543
      %v3746 = vpop.f32.mrf.mxu0
      %v3747 = vadd.f32 %v3482, %v3746
      %v3748 = vpop.f32.mrf.mxu0
      %3749 = vmatprep.mubr.f32.mxu0 0.0
      %3750 = vmatmul.mubr.f32.gmra.mxu0 %v3546
      %v3751 = vpop.f32.mrf.mxu0
      %v3752 = vadd.f32 %v3482, %v3751
      %v3753 = vpop.f32.mrf.mxu0
      %3754 = vmatprep.mubr.f32.mxu0 0.0
      %3755 = vmatmul.mubr.f32.gmra.mxu0 %v3549
      %v3756 = vpop.f32.mrf.mxu0
      %v3757 = vadd.f32 %v3482, %v3756
      %v3758 = vpop.f32.mrf.mxu0
      %3759 = vmatprep.mubr.f32.mxu0 0.0
      %3760 = vmatmul.mubr.f32.gmra.mxu0 %v3552
      %v3761 = vpop.f32.mrf.mxu0
      %v3762 = vadd.f32 %v3482, %v3761
      %v3763 = vpop.f32.mrf.mxu0
      %3764 = vmatprep.mubr.f32.mxu0 0.0
      %3765 = vmatmul.mubr.f32.gmra.mxu0 %v3555
      %v3766 = vpop.f32.mrf.mxu0
      %v3767 = vadd.f32 %v3482, %v3766
      %v3768 = vpop.f32.mrf.mxu0
      %3769 = vmatprep.mubr.f32.mxu0 0.0
      %3770 = vmatmul.mubr.f32.gmra.mxu0 %v3558
      %v3771 = vpop.f32.mrf.mxu0
      %v3772 = vadd.f32 %v3482, %v3771
      %v3773 = vpop.f32.mrf.mxu0
      %3774 = vmatprep.mubr.f32.mxu0 0.0
      %3775 = vmatmul.mubr.f32.gmra.mxu0 %v3561
      %v3776 = vpop.f32.mrf.mxu0
      %v3777 = vadd.f32 %v3482, %v3776
      %v3778 = vpop.f32.mrf.mxu0
      %3779 = vmatprep.mubr.f32.mxu0 0.0
      %3780 = vmatmul.mubr.f32.gmra.mxu0 %v3564
      %v3781 = vpop.f32.mrf.mxu0
      %v3782 = vadd.f32 %v3482, %v3781
      %v3783 = vpop.f32.mrf.mxu0
      %3784 = vmatprep.mubr.f32.mxu0 0.0
      %3785 = vmatmul.mubr.f32.gmra.mxu0 %v3567
      %v3786 = vpop.f32.mrf.mxu0
      %v3787 = vadd.f32 %v3482, %v3786
      %v3788 = vpop.f32.mrf.mxu0
      %3789 = vmatprep.mubr.f32.mxu0 0.0
      %3790 = vmatmul.mubr.f32.gmra.mxu0 %v3570
      %v3791 = vpop.f32.mrf.mxu0
      %v3792 = vadd.f32 %v3482, %v3791
      %v3793 = vpop.f32.mrf.mxu0
      %3794 = vmatprep.mubr.f32.mxu0 0.0
      %3795 = vmatmul.mubr.f32.gmra.mxu0 %v3573
      %v3796 = vpop.f32.mrf.mxu0
      %v3797 = vadd.f32 %v3482, %v3796
      %v3798 = vpop.f32.mrf.mxu0
      %3799 = vmatprep.mubr.f32.mxu0 0.0
      %3800 = vmatmul.mubr.f32.gmra.mxu0 %v3576
      %v3801 = vpop.f32.mrf.mxu0
      %v3802 = vadd.f32 %v3482, %v3801
      %v3803 = vpop.f32.mrf.mxu0
      %3804 = vmatprep.mubr.f32.mxu0 0.0
      %3805 = vmatmul.mubr.f32.gmra.mxu0 %v3579
      %v3806 = vpop.f32.mrf.mxu0
      %v3807 = vadd.f32 %v3482, %v3806
      %v3808 = vpop.f32.mrf.mxu0
      %3809 = vdwg.mxu0
      %vm3810 = vcmp.ge.f32.partialorder %v3652, 0.0
      %vm3811 = vcmp.ge.f32.partialorder %v3657, 0.0
      %vm3812 = vcmp.ge.f32.partialorder %v3662, 0.0
      %vm3813 = vcmp.ge.f32.partialorder %v3667, 0.0
      %vm3814 = vcmp.ge.f32.partialorder %v3672, 0.0
      %vm3815 = vcmp.ge.f32.partialorder %v3677, 0.0
      %vm3816 = vcmp.ge.f32.partialorder %v3682, 0.0
      %vm3817 = vcmp.ge.f32.partialorder %v3687, 0.0
      %vm3818 = vcmp.ge.f32.partialorder %v3692, 0.0
      %vm3819 = vcmp.ge.f32.partialorder %v3697, 0.0
      %vm3820 = vcmp.ge.f32.partialorder %v3702, 0.0
      %vm3821 = vcmp.ge.f32.partialorder %v3707, 0.0
      %vm3822 = vcmp.ge.f32.partialorder %v3712, 0.0
      %vm3823 = vcmp.ge.f32.partialorder %v3717, 0.0
      %vm3824 = vcmp.ge.f32.partialorder %v3722, 0.0
      %vm3825 = vcmp.ge.f32.partialorder %v3727, 0.0
      %vm3826 = vcmp.ge.f32.partialorder %v3732, 0.0
      %vm3827 = vcmp.ge.f32.partialorder %v3737, 0.0
      %vm3828 = vcmp.ge.f32.partialorder %v3742, 0.0
      %vm3829 = vcmp.ge.f32.partialorder %v3747, 0.0
      %vm3830 = vcmp.ge.f32.partialorder %v3752, 0.0
      %vm3831 = vcmp.ge.f32.partialorder %v3757, 0.0
      %vm3832 = vcmp.ge.f32.partialorder %v3762, 0.0
      %vm3833 = vcmp.ge.f32.partialorder %v3767, 0.0
      %vm3834 = vcmp.ge.f32.partialorder %v3772, 0.0
      %vm3835 = vcmp.ge.f32.partialorder %v3777, 0.0
      %vm3836 = vcmp.ge.f32.partialorder %v3782, 0.0
      %vm3837 = vcmp.ge.f32.partialorder %v3787, 0.0
      %vm3838 = vcmp.ge.f32.partialorder %v3792, 0.0
      %vm3839 = vcmp.ge.f32.partialorder %v3797, 0.0
      %vm3840 = vcmp.ge.f32.partialorder %v3802, 0.0
      %vm3841 = vcmp.ge.f32.partialorder %v3807, 0.0
      %v3842 = vmul.f32 %v3652, 0.2
      %v3843 = vmul.f32 %v3657, 0.2
      %v3844 = vmul.f32 %v3662, 0.2
      %v3845 = vmul.f32 %v3667, 0.2
      %v3846 = vmul.f32 %v3672, 0.2
      %v3847 = vmul.f32 %v3677, 0.2
      %v3848 = vmul.f32 %v3682, 0.2
      %v3849 = vmul.f32 %v3687, 0.2
      %v3850 = vmul.f32 %v3692, 0.2
      %v3851 = vmul.f32 %v3697, 0.2
      %v3852 = vmul.f32 %v3702, 0.2
      %v3853 = vmul.f32 %v3707, 0.2
      %v3854 = vmul.f32 %v3712, 0.2
      %v3855 = vmul.f32 %v3717, 0.2
      %v3856 = vmul.f32 %v3722, 0.2
      %v3857 = vmul.f32 %v3727, 0.2
      %v3858 = vmul.f32 %v3732, 0.2
      %v3859 = vmul.f32 %v3737, 0.2
      %v3860 = vmul.f32 %v3742, 0.2
      %v3861 = vmul.f32 %v3747, 0.2
      %v3862 = vmul.f32 %v3752, 0.2
      %v3863 = vmul.f32 %v3757, 0.2
      %v3864 = vmul.f32 %v3762, 0.2
      %v3865 = vmul.f32 %v3767, 0.2
      %v3866 = vmul.f32 %v3772, 0.2
      %v3867 = vmul.f32 %v3777, 0.2
      %v3868 = vmul.f32 %v3782, 0.2
      %v3869 = vmul.f32 %v3787, 0.2
      %v3870 = vmul.f32 %v3792, 0.2
      %v3871 = vmul.f32 %v3797, 0.2
      %v3872 = vmul.f32 %v3802, 0.2
      %v3873 = vmul.f32 %v3807, 0.2
      %v3874 = vsel %vm3810, %v3652, %v3842
      %v3875 = vsel %vm3811, %v3657, %v3843
      %v3876 = vsel %vm3812, %v3662, %v3844
      %v3877 = vsel %vm3813, %v3667, %v3845
      %v3878 = vsel %vm3814, %v3672, %v3846
      %v3879 = vsel %vm3815, %v3677, %v3847
      %v3880 = vsel %vm3816, %v3682, %v3848
      %v3881 = vsel %vm3817, %v3687, %v3849
      %v3882 = vsel %vm3818, %v3692, %v3850
      %v3883 = vsel %vm3819, %v3697, %v3851
      %v3884 = vsel %vm3820, %v3702, %v3852
      %v3885 = vsel %vm3821, %v3707, %v3853
      %v3886 = vsel %vm3822, %v3712, %v3854
      %v3887 = vsel %vm3823, %v3717, %v3855
      %v3888 = vsel %vm3824, %v3722, %v3856
      %v3889 = vsel %vm3825, %v3727, %v3857
      %v3890 = vsel %vm3826, %v3732, %v3858
      %v3891 = vsel %vm3827, %v3737, %v3859
      %v3892 = vsel %vm3828, %v3742, %v3860
      %v3893 = vsel %vm3829, %v3747, %v3861
      %v3894 = vsel %vm3830, %v3752, %v3862
      %v3895 = vsel %vm3831, %v3757, %v3863
      %v3896 = vsel %vm3832, %v3762, %v3864
      %v3897 = vsel %vm3833, %v3767, %v3865
      %v3898 = vsel %vm3834, %v3772, %v3866
      %v3899 = vsel %vm3835, %v3777, %v3867
      %v3900 = vsel %vm3836, %v3782, %v3868
      %v3901 = vsel %vm3837, %v3787, %v3869
      %v3902 = vsel %vm3838, %v3792, %v3870
      %v3903 = vsel %vm3839, %v3797, %v3871
      %v3904 = vsel %vm3840, %v3802, %v3872
      %v3905 = vsel %vm3841, %v3807, %v3873
      %3922 = vrot.lane.b32.xlu0 %v946, 120
      %v3923 = vpop.permute.xlu0 %3922
      %3924 = vrot.lane.b32.xlu0 %v947, 120
      %v3925 = vpop.permute.xlu0 %3924
      %3926 = vrot.lane.b32.xlu0 %v948, 120
      %v3927 = vpop.permute.xlu0 %3926
      %3928 = vrot.lane.b32.xlu0 %v949, 120
      %v3929 = vpop.permute.xlu0 %3928
      %3930 = vrot.lane.b32.xlu0 %v950, 120
      %v3931 = vpop.permute.xlu0 %3930
      %3932 = vrot.lane.b32.xlu0 %v951, 120
      %v3933 = vpop.permute.xlu0 %3932
      %3934 = vrot.lane.b32.xlu0 %v952, 120
      %v3935 = vpop.permute.xlu0 %3934
      %3936 = vrot.lane.b32.xlu0 %v953, 120
      %v3937 = vpop.permute.xlu0 %3936
      %3938 = vrot.lane.b32.xlu0 %v954, 120
      %v3939 = vpop.permute.xlu0 %3938
      %3940 = vrot.lane.b32.xlu0 %v955, 120
      %v3941 = vpop.permute.xlu0 %3940
      %3942 = vrot.lane.b32.xlu0 %v956, 120
      %v3943 = vpop.permute.xlu0 %3942
      %3944 = vrot.lane.b32.xlu0 %v957, 120
      %v3945 = vpop.permute.xlu0 %3944
      %3946 = vrot.lane.b32.xlu0 %v958, 120
      %v3947 = vpop.permute.xlu0 %3946
      %3948 = vrot.lane.b32.xlu0 %v959, 120
      %v3949 = vpop.permute.xlu0 %3948
      %3950 = vrot.lane.b32.xlu0 %v960, 120
      %v3951 = vpop.permute.xlu0 %3950
      %3952 = vrot.lane.b32.xlu0 %v961, 120
      %v3953 = vpop.permute.xlu0 %3952
      %v3954 = vld [vmem:[%s8] sm:$0xff]
      %v3955 = vld [vmem:[%s9] sm:$0x1]
      %v3957 = vlaneseq
      %v3958 = vshrl.u32 %v3957, 7
      %v3959 = vsub.s32 0, %v3958
      %v3960 = vrot.slane %v3955, %v3959
      %v3962 = vsel %vm424, %v946, 0
      %v3964 = vsel %vm424, %v947, 0
      %v3966 = vsel %vm424, %v948, 0
      %v3968 = vsel %vm424, %v949, 0
      %v3970 = vsel %vm424, %v950, 0
      %v3972 = vsel %vm424, %v951, 0
      %v3974 = vsel %vm424, %v952, 0
      %v3976 = vsel %vm424, %v953, 0
      %v3978 = vsel %vm424, %v954, 0
      %v3980 = vsel %vm424, %v955, 0
      %v3982 = vsel %vm424, %v956, 0
      %v3984 = vsel %vm424, %v957, 0
      %v3986 = vsel %vm424, %v958, 0
      %v3988 = vsel %vm424, %v959, 0
      %v3990 = vsel %vm424, %v960, 0
      %v3992 = vsel %vm424, %v961, 0
      %v3994 = vsel %vm424, %v3923, 0
      %v3996 = vsel %vm424, %v3925, 0
      %v3998 = vsel %vm424, %v3927, 0
      %v4000 = vsel %vm424, %v3929, 0
      %v4002 = vsel %vm424, %v3931, 0
      %v4004 = vsel %vm424, %v3933, 0
      %v4006 = vsel %vm424, %v3935, 0
      %v4008 = vsel %vm424, %v3937, 0
      %v4010 = vsel %vm424, %v3939, 0
      %v4012 = vsel %vm424, %v3941, 0
      %v4014 = vsel %vm424, %v3943, 0
      %v4016 = vsel %vm424, %v3945, 0
      %v4018 = vsel %vm424, %v3947, 0
      %v4020 = vsel %vm424, %v3949, 0
      %v4022 = vsel %vm424, %v3951, 0
      %v4024 = vsel %vm424, %v3953, 0
      %4026 = vmatprep.subr.mxu0 0.0
      %4027 = vmatpush1.msra.mxu0 0.0
      %4028 = vmatprep.subr.mxu0 0.0
      %4029 = vmatpush1.msra.mxu0 0.0
      %4030 = vmatprep.subr.mxu0 0.0
      %4031 = vmatpush1.msra.mxu0 0.0
      %4032 = vmatprep.subr.mxu0 0.0
      %4033 = vmatpush1.msra.mxu0 0.0
      %4034 = vmatprep.subr.mxu0 0.0
      %4035 = vmatpush1.msra.mxu0 0.0
      %4036 = vmatprep.subr.mxu0 0.0
      %4037 = vmatpush1.msra.mxu0 0.0
      %4038 = vmatprep.subr.mxu0 0.0
      %4039 = vmatpush1.msra.mxu0 0.0
      %4040 = vmatprep.subr.mxu0 0.0
      %4041 = vmatpush1.msra.mxu0 0.0
      %4042 = vmatprep.subr.mxu0 0.0
      %4043 = vmatpush1.msra.mxu0 0.0
      %4044 = vmatprep.subr.mxu0 0.0
      %4045 = vmatpush1.msra.mxu0 0.0
      %4046 = vmatprep.subr.mxu0 0.0
      %4047 = vmatpush1.msra.mxu0 0.0
      %4048 = vmatprep.subr.mxu0 0.0
      %4049 = vmatpush1.msra.mxu0 0.0
      %4050 = vmatprep.subr.mxu0 0.0
      %4051 = vmatpush1.msra.mxu0 0.0
      %4052 = vmatprep.subr.mxu0 0.0
      %4053 = vmatpush1.msra.mxu0 0.0
      %4054 = vmatprep.subr.mxu0 0.0
      %4055 = vmatpush1.msra.mxu0 0.0
      %4056 = vmatprep.subr.mxu0 0.0
      %4057 = vmatpush1.msra.mxu0 %v3954
      %4058 = vmatprep.subr.mxu0 0.0
      %4059 = vmatpush2.msra.mxu0 0.0
      %4060 = vmatprep.subr.mxu0 0.0
      %4061 = vmatpush2.msra.mxu0 0.0
      %4062 = vmatprep.subr.mxu0 0.0
      %4063 = vmatpush2.msra.mxu0 0.0
      %4064 = vmatprep.subr.mxu0 0.0
      %4065 = vmatpush2.msra.mxu0 0.0
      %4066 = vmatprep.subr.mxu0 0.0
      %4067 = vmatpush2.msra.mxu0 0.0
      %4068 = vmatprep.subr.mxu0 0.0
      %4069 = vmatpush2.msra.mxu0 0.0
      %4070 = vmatprep.subr.mxu0 0.0
      %4071 = vmatpush2.msra.mxu0 0.0
      %4072 = vmatprep.subr.mxu0 0.0
      %4073 = vmatpush2.msra.mxu0 0.0
      %4074 = vmatprep.subr.mxu0 0.0
      %4075 = vmatpush2.msra.mxu0 0.0
      %4076 = vmatprep.subr.mxu0 0.0
      %4077 = vmatpush2.msra.mxu0 0.0
      %4078 = vmatprep.subr.mxu0 0.0
      %4079 = vmatpush2.msra.mxu0 0.0
      %4080 = vmatprep.subr.mxu0 0.0
      %4081 = vmatpush2.msra.mxu0 0.0
      %4082 = vmatprep.subr.mxu0 0.0
      %4083 = vmatpush2.msra.mxu0 0.0
      %4084 = vmatprep.subr.mxu0 0.0
      %4085 = vmatpush2.msra.mxu0 0.0
      %4086 = vmatprep.subr.mxu0 0.0
      %4087 = vmatpush2.msra.mxu0 0.0
      %4088 = vmatprep.subr.mxu0 0.0
      %4089 = vmatpush2.msra.mxu0 0.0
      %4090 = vmatprep.mubr.f32.mxu0 0.0
      %4091 = vmatmul.mubr.f32.gmra.mxu0 %v3962
      %v4092 = vpop.f32.mrf.mxu0
      %v4093 = vadd.f32 %v3960, %v4092
      %v4094 = vpop.f32.mrf.mxu0
      %4095 = vmatprep.mubr.f32.mxu0 0.0
      %4096 = vmatmul.mubr.f32.gmra.mxu0 %v3964
      %v4097 = vpop.f32.mrf.mxu0
      %v4098 = vadd.f32 %v3960, %v4097
      %v4099 = vpop.f32.mrf.mxu0
      %4100 = vmatprep.mubr.f32.mxu0 0.0
      %4101 = vmatmul.mubr.f32.gmra.mxu0 %v3966
      %v4102 = vpop.f32.mrf.mxu0
      %v4103 = vadd.f32 %v3960, %v4102
      %v4104 = vpop.f32.mrf.mxu0
      %4105 = vmatprep.mubr.f32.mxu0 0.0
      %4106 = vmatmul.mubr.f32.gmra.mxu0 %v3968
      %v4107 = vpop.f32.mrf.mxu0
      %v4108 = vadd.f32 %v3960, %v4107
      %v4109 = vpop.f32.mrf.mxu0
      %4110 = vmatprep.mubr.f32.mxu0 0.0
      %4111 = vmatmul.mubr.f32.gmra.mxu0 %v3970
      %v4112 = vpop.f32.mrf.mxu0
      %v4113 = vadd.f32 %v3960, %v4112
      %v4114 = vpop.f32.mrf.mxu0
      %4115 = vmatprep.mubr.f32.mxu0 0.0
      %4116 = vmatmul.mubr.f32.gmra.mxu0 %v3972
      %v4117 = vpop.f32.mrf.mxu0
      %v4118 = vadd.f32 %v3960, %v4117
      %v4119 = vpop.f32.mrf.mxu0
      %4120 = vmatprep.mubr.f32.mxu0 0.0
      %4121 = vmatmul.mubr.f32.gmra.mxu0 %v3974
      %v4122 = vpop.f32.mrf.mxu0
      %v4123 = vadd.f32 %v3960, %v4122
      %v4124 = vpop.f32.mrf.mxu0
      %4125 = vmatprep.mubr.f32.mxu0 0.0
      %4126 = vmatmul.mubr.f32.gmra.mxu0 %v3976
      %v4127 = vpop.f32.mrf.mxu0
      %v4128 = vadd.f32 %v3960, %v4127
      %v4129 = vpop.f32.mrf.mxu0
      %4130 = vmatprep.mubr.f32.mxu0 0.0
      %4131 = vmatmul.mubr.f32.gmra.mxu0 %v3978
      %v4132 = vpop.f32.mrf.mxu0
      %v4133 = vadd.f32 %v3960, %v4132
      %v4134 = vpop.f32.mrf.mxu0
      %4135 = vmatprep.mubr.f32.mxu0 0.0
      %4136 = vmatmul.mubr.f32.gmra.mxu0 %v3980
      %v4137 = vpop.f32.mrf.mxu0
      %v4138 = vadd.f32 %v3960, %v4137
      %v4139 = vpop.f32.mrf.mxu0
      %4140 = vmatprep.mubr.f32.mxu0 0.0
      %4141 = vmatmul.mubr.f32.gmra.mxu0 %v3982
      %v4142 = vpop.f32.mrf.mxu0
      %v4143 = vadd.f32 %v3960, %v4142
      %v4144 = vpop.f32.mrf.mxu0
      %4145 = vmatprep.mubr.f32.mxu0 0.0
      %4146 = vmatmul.mubr.f32.gmra.mxu0 %v3984
      %v4147 = vpop.f32.mrf.mxu0
      %v4148 = vadd.f32 %v3960, %v4147
      %v4149 = vpop.f32.mrf.mxu0
      %4150 = vmatprep.mubr.f32.mxu0 0.0
      %4151 = vmatmul.mubr.f32.gmra.mxu0 %v3986
      %v4152 = vpop.f32.mrf.mxu0
      %v4153 = vadd.f32 %v3960, %v4152
      %v4154 = vpop.f32.mrf.mxu0
      %4155 = vmatprep.mubr.f32.mxu0 0.0
      %4156 = vmatmul.mubr.f32.gmra.mxu0 %v3988
      %v4157 = vpop.f32.mrf.mxu0
      %v4158 = vadd.f32 %v3960, %v4157
      %v4159 = vpop.f32.mrf.mxu0
      %4160 = vmatprep.mubr.f32.mxu0 0.0
      %4161 = vmatmul.mubr.f32.gmra.mxu0 %v3990
      %v4162 = vpop.f32.mrf.mxu0
      %v4163 = vadd.f32 %v3960, %v4162
      %v4164 = vpop.f32.mrf.mxu0
      %4165 = vmatprep.mubr.f32.mxu0 0.0
      %4166 = vmatmul.mubr.f32.gmra.mxu0 %v3992
      %v4167 = vpop.f32.mrf.mxu0
      %v4168 = vadd.f32 %v3960, %v4167
      %v4169 = vpop.f32.mrf.mxu0
      %4170 = vmatprep.mubr.f32.mxu0 0.0
      %4171 = vmatmul.mubr.f32.gmra.mxu0 %v3994
      %v4172 = vpop.f32.mrf.mxu0
      %v4173 = vadd.f32 %v3960, %v4172
      %v4174 = vpop.f32.mrf.mxu0
      %4175 = vmatprep.mubr.f32.mxu0 0.0
      %4176 = vmatmul.mubr.f32.gmra.mxu0 %v3996
      %v4177 = vpop.f32.mrf.mxu0
      %v4178 = vadd.f32 %v3960, %v4177
      %v4179 = vpop.f32.mrf.mxu0
      %4180 = vmatprep.mubr.f32.mxu0 0.0
      %4181 = vmatmul.mubr.f32.gmra.mxu0 %v3998
      %v4182 = vpop.f32.mrf.mxu0
      %v4183 = vadd.f32 %v3960, %v4182
      %v4184 = vpop.f32.mrf.mxu0
      %4185 = vmatprep.mubr.f32.mxu0 0.0
      %4186 = vmatmul.mubr.f32.gmra.mxu0 %v4000
      %v4187 = vpop.f32.mrf.mxu0
      %v4188 = vadd.f32 %v3960, %v4187
      %v4189 = vpop.f32.mrf.mxu0
      %4190 = vmatprep.mubr.f32.mxu0 0.0
      %4191 = vmatmul.mubr.f32.gmra.mxu0 %v4002
      %v4192 = vpop.f32.mrf.mxu0
      %v4193 = vadd.f32 %v3960, %v4192
      %v4194 = vpop.f32.mrf.mxu0
      %4195 = vmatprep.mubr.f32.mxu0 0.0
      %4196 = vmatmul.mubr.f32.gmra.mxu0 %v4004
      %v4197 = vpop.f32.mrf.mxu0
      %v4198 = vadd.f32 %v3960, %v4197
      %v4199 = vpop.f32.mrf.mxu0
      %4200 = vmatprep.mubr.f32.mxu0 0.0
      %4201 = vmatmul.mubr.f32.gmra.mxu0 %v4006
      %v4202 = vpop.f32.mrf.mxu0
      %v4203 = vadd.f32 %v3960, %v4202
      %v4204 = vpop.f32.mrf.mxu0
      %4205 = vmatprep.mubr.f32.mxu0 0.0
      %4206 = vmatmul.mubr.f32.gmra.mxu0 %v4008
      %v4207 = vpop.f32.mrf.mxu0
      %v4208 = vadd.f32 %v3960, %v4207
      %v4209 = vpop.f32.mrf.mxu0
      %4210 = vmatprep.mubr.f32.mxu0 0.0
      %4211 = vmatmul.mubr.f32.gmra.mxu0 %v4010
      %v4212 = vpop.f32.mrf.mxu0
      %v4213 = vadd.f32 %v3960, %v4212
      %v4214 = vpop.f32.mrf.mxu0
      %4215 = vmatprep.mubr.f32.mxu0 0.0
      %4216 = vmatmul.mubr.f32.gmra.mxu0 %v4012
      %v4217 = vpop.f32.mrf.mxu0
      %v4218 = vadd.f32 %v3960, %v4217
      %v4219 = vpop.f32.mrf.mxu0
      %4220 = vmatprep.mubr.f32.mxu0 0.0
      %4221 = vmatmul.mubr.f32.gmra.mxu0 %v4014
      %v4222 = vpop.f32.mrf.mxu0
      %v4223 = vadd.f32 %v3960, %v4222
      %v4224 = vpop.f32.mrf.mxu0
      %4225 = vmatprep.mubr.f32.mxu0 0.0
      %4226 = vmatmul.mubr.f32.gmra.mxu0 %v4016
      %v4227 = vpop.f32.mrf.mxu0
      %v4228 = vadd.f32 %v3960, %v4227
      %v4229 = vpop.f32.mrf.mxu0
      %4230 = vmatprep.mubr.f32.mxu0 0.0
      %4231 = vmatmul.mubr.f32.gmra.mxu0 %v4018
      %v4232 = vpop.f32.mrf.mxu0
      %v4233 = vadd.f32 %v3960, %v4232
      %v4234 = vpop.f32.mrf.mxu0
      %4235 = vmatprep.mubr.f32.mxu0 0.0
      %4236 = vmatmul.mubr.f32.gmra.mxu0 %v4020
      %v4237 = vpop.f32.mrf.mxu0
      %v4238 = vadd.f32 %v3960, %v4237
      %v4239 = vpop.f32.mrf.mxu0
      %4240 = vmatprep.mubr.f32.mxu0 0.0
      %4241 = vmatmul.mubr.f32.gmra.mxu0 %v4022
      %v4242 = vpop.f32.mrf.mxu0
      %v4243 = vadd.f32 %v3960, %v4242
      %v4244 = vpop.f32.mrf.mxu0
      %4245 = vmatprep.mubr.f32.mxu0 0.0
      %4246 = vmatmul.mubr.f32.gmra.mxu0 %v4024
      %v4247 = vpop.f32.mrf.mxu0
      %v4248 = vadd.f32 %v3960, %v4247
      %v4249 = vpop.f32.mrf.mxu0
      %4250 = vdwg.mxu0
      %v4251 = vadd.f32 %v3874, %v4093
      %v4252 = vadd.f32 %v3875, %v4098
      %v4253 = vadd.f32 %v3876, %v4103
      %v4254 = vadd.f32 %v3877, %v4108
      %v4255 = vadd.f32 %v3878, %v4113
      %v4256 = vadd.f32 %v3879, %v4118
      %v4257 = vadd.f32 %v3880, %v4123
      %v4258 = vadd.f32 %v3881, %v4128
      %v4259 = vadd.f32 %v3882, %v4133
      %v4260 = vadd.f32 %v3883, %v4138
      %v4261 = vadd.f32 %v3884, %v4143
      %v4262 = vadd.f32 %v3885, %v4148
      %v4263 = vadd.f32 %v3886, %v4153
      %v4264 = vadd.f32 %v3887, %v4158
      %v4265 = vadd.f32 %v3888, %v4163
      %v4266 = vadd.f32 %v3889, %v4168
      %v4267 = vadd.f32 %v3890, %v4173
      %v4268 = vadd.f32 %v3891, %v4178
      %v4269 = vadd.f32 %v3892, %v4183
      %v4270 = vadd.f32 %v3893, %v4188
      %v4271 = vadd.f32 %v3894, %v4193
      %v4272 = vadd.f32 %v3895, %v4198
      %v4273 = vadd.f32 %v3896, %v4203
      %v4274 = vadd.f32 %v3897, %v4208
      %v4275 = vadd.f32 %v3898, %v4213
      %v4276 = vadd.f32 %v3899, %v4218
      %v4277 = vadd.f32 %v3900, %v4223
      %v4278 = vadd.f32 %v3901, %v4228
      %v4279 = vadd.f32 %v3902, %v4233
      %v4280 = vadd.f32 %v3903, %v4238
      %v4281 = vadd.f32 %v3904, %v4243
      %v4282 = vadd.f32 %v3905, %v4248
      %4299 = vrot.lane.b32.xlu0 %v4267, 4
      %v4300 = vpop.permute.xlu0 %4299
      %4301 = vrot.lane.b32.xlu0 %v4268, 4
      %v4302 = vpop.permute.xlu0 %4301
      %4303 = vrot.lane.b32.xlu0 %v4269, 4
      %v4304 = vpop.permute.xlu0 %4303
      %4305 = vrot.lane.b32.xlu0 %v4270, 4
      %v4306 = vpop.permute.xlu0 %4305
      %4307 = vrot.lane.b32.xlu0 %v4271, 4
      %v4308 = vpop.permute.xlu0 %4307
      %4309 = vrot.lane.b32.xlu0 %v4272, 4
      %v4310 = vpop.permute.xlu0 %4309
      %4311 = vrot.lane.b32.xlu0 %v4273, 4
      %v4312 = vpop.permute.xlu0 %4311
      %4313 = vrot.lane.b32.xlu0 %v4274, 4
      %v4314 = vpop.permute.xlu0 %4313
      %4315 = vrot.lane.b32.xlu0 %v4275, 4
      %v4316 = vpop.permute.xlu0 %4315
      %4317 = vrot.lane.b32.xlu0 %v4276, 4
      %v4318 = vpop.permute.xlu0 %4317
      %4319 = vrot.lane.b32.xlu0 %v4277, 4
      %v4320 = vpop.permute.xlu0 %4319
      %4321 = vrot.lane.b32.xlu0 %v4278, 4
      %v4322 = vpop.permute.xlu0 %4321
      %4323 = vrot.lane.b32.xlu0 %v4279, 4
      %v4324 = vpop.permute.xlu0 %4323
      %4325 = vrot.lane.b32.xlu0 %v4280, 4
      %v4326 = vpop.permute.xlu0 %4325
      %4327 = vrot.lane.b32.xlu0 %v4281, 4
      %v4328 = vpop.permute.xlu0 %4327
      %4329 = vrot.lane.b32.xlu0 %v4282, 4
      %v4330 = vpop.permute.xlu0 %4329
      %v4347 = vsel %vm912, %v4251, %v4300
      %v4348 = vsel %vm912, %v4252, %v4302
      %v4349 = vsel %vm912, %v4253, %v4304
      %v4350 = vsel %vm912, %v4254, %v4306
      %v4351 = vsel %vm912, %v4255, %v4308
      %v4352 = vsel %vm912, %v4256, %v4310
      %v4353 = vsel %vm912, %v4257, %v4312
      %v4354 = vsel %vm912, %v4258, %v4314
      %v4355 = vsel %vm912, %v4259, %v4316
      %v4356 = vsel %vm912, %v4260, %v4318
      %v4357 = vsel %vm912, %v4261, %v4320
      %v4358 = vsel %vm912, %v4262, %v4322
      %v4359 = vsel %vm912, %v4263, %v4324
      %v4360 = vsel %vm912, %v4264, %v4326
      %v4361 = vsel %vm912, %v4265, %v4328
      %v4362 = vsel %vm912, %v4266, %v4330
      %4363 = vst.msk [vmem:[%s379] sm:$0xff] %vm424, %v4347
      %4364 = vst.msk [vmem:[%s379 + $0x8] sm:$0xff] %vm424, %v4348
      %4365 = vst.msk [vmem:[%s379 + $0x10] sm:$0xff] %vm424, %v4349
      %4366 = vst.msk [vmem:[%s379 + $0x18] sm:$0xff] %vm424, %v4350
      %4367 = vst.msk [vmem:[%s379 + $0x20] sm:$0xff] %vm424, %v4351
      %4368 = vst.msk [vmem:[%s379 + $0x28] sm:$0xff] %vm424, %v4352
      %4369 = vst.msk [vmem:[%s379 + $0x30] sm:$0xff] %vm424, %v4353
      %4370 = vst.msk [vmem:[%s379 + $0x38] sm:$0xff] %vm424, %v4354
      %4371 = vst.msk [vmem:[%s379 + $0x40] sm:$0xff] %vm424, %v4355
      %4372 = vst.msk [vmem:[%s379 + $0x48] sm:$0xff] %vm424, %v4356
      %4373 = vst.msk [vmem:[%s379 + $0x50] sm:$0xff] %vm424, %v4357
      %4374 = vst.msk [vmem:[%s379 + $0x58] sm:$0xff] %vm424, %v4358
      %4375 = vst.msk [vmem:[%s379 + $0x60] sm:$0xff] %vm424, %v4359
      %4376 = vst.msk [vmem:[%s379 + $0x68] sm:$0xff] %vm424, %v4360
      %4377 = vst.msk [vmem:[%s379 + $0x70] sm:$0xff] %vm424, %v4361
      %4378 = vst.msk [vmem:[%s379 + $0x78] sm:$0xff] %vm424, %v4362
      %p4379 = scmp.lt.s32.totalorder %s21, 1
      %s4380 = scalar_select %p4379, %s21, 1
      %s4381 = smul.addr %s4380, 16
      %s4382 = smul.addr %s4381, 8
      %s4383 = scalar_lea.vmem %s10, %s4382
      // Predicated region
      $region61: #{tpu_custom_call.1} parent=59 // pred_check
        %p4384 = pneg %p259
      $region62: #{tpu_custom_call.1} parent=59 // pred_check_branch
        %4386 = sbr.rel (%p4384) target = $region64
      $region63: #{tpu_custom_call.1} parent=59 // pred_region
        _
      $region64: #{tpu_custom_call.1} parent=59 // pred_fallthru
        _
    $region60: #{tpu_custom_call.1} parent=5 // pred_fallthru
      _
    %p4387 = scmp.le.s32.totalorder 2, %s16
    // Predicated region
    $region65: #{tpu_custom_call.1} parent=5 // pred_check
      %p4388 = pneg %p4387
    $region66: #{tpu_custom_call.1} parent=5 // pred_check_branch
      %4390 = sbr.rel (%p4388) target = $region68
    $region67: #{tpu_custom_call.1} parent=5 // pred_region
      %s4391 = ssub.s32 %s16, 2
      // Predicated region
      $region69: #{tpu_custom_call.1} parent=67 // pred_check
        %p4392 = pneg %p265
      $region70: #{tpu_custom_call.1} parent=67 // pred_check_branch
        %4394 = sbr.rel (%p4392) target = $region72
      $region71: #{tpu_custom_call.1} parent=67 // pred_region
        %p4395 = scmp.lt.s32.totalorder %s22, 1
        %s4396 = scalar_select %p4395, %s22, 1
        %s4397 = smul.addr %s4396, 16
        %s4398 = smul.addr %s4397, 8
        %s4399 = scalar_lea.vmem %s10, %s4398
      $region72: #{tpu_custom_call.1} parent=67 // pred_fallthru
        _
    $region68: #{tpu_custom_call.1} parent=5 // pred_fallthru
      _
  $region6: #{tpu_custom_call.1} parent=0 // loop_footer
    %s20 = sadd.s32 1, %s16
  $region7: #{tpu_custom_call.1} parent=0 // loop_footer_branch
    %15 = sbr.rel target = $region3
  $region8: #{tpu_custom_call.1} parent=0 // loop_exit
    _

</llo_original>
